<compile_context>
chip_gen: v7x
topology: tpu7x:2x2x1
jax: 0.10.0
libtpu: 0.0.40
codegen_flags: <defaults>
</compile_context>

<pallas_src>
import functools

import jax
import jax.numpy as jnp
from jax.experimental import pallas as pl
from jax.experimental.pallas import tpu as pltpu


def _sigmoid_ref(v):
    return 1.0 / (1.0 + jnp.exp(-v))


def _sigmoid_kernel(v):
    # exp -> EUP; exact reciprocal keeps the divide off the VPU critical chain
    # while still matching the pure-JAX references bit-for-bit.
    return pl.reciprocal(1.0 + jnp.exp(-v), approx=False)


# --------------------- fused bidirectional LSTM + fc kernel ------------------
def _bilstm_fc_kernel(x_ref, *refs, num_layers, hidden_size, seq_len, batch):
    """Single-invocation fused kernel.

    x_ref : (T*B, D) bf16, row index = t*B + b.
    refs  : per layer:
              w_in_fw : (D_in, 8H) bf16   W_ih_fw^T scattered into fw gate cols
              w_in_bw : (D_in, 8H) bf16   W_ih_bw^T scattered into bw gate cols
              w_rec   : (2H, 8H)  bf16    gate-block-diagonal [W_hh_fw^T, W_hh_bw^T]
              b_cat   : (1, 8H)   f32     b_ih + b_hh, both directions
            then fc_w (T*2H, C) bf16, fc_b (1, C) f32, out (B, C) f32,
            then scratch: xz_fw (T*B,8H) f32, xz_bw (T*B,8H) f32,
                          buf_a (T*B,2H) f32, buf_b (T*B,2H) f32.
    Gate column layout: [i_fw i_bw | f_fw f_bw | g_fw g_bw | o_fw o_bw].
    State layout:       h = [h_fw | h_bw]  (B, 2H), same for c.
    """
    H = hidden_size
    T = seq_len
    B = batch
    H2 = 2 * H          # fused fw+bw state width
    G = 8 * H           # fused gate width: 4 gates x 2 directions (=256 for H=32)

    n_lw = 4 * num_layers
    layer_refs = refs[:n_lw]
    fc_w_ref = refs[n_lw]
    fc_b_ref = refs[n_lw + 1]
    out_ref = refs[n_lw + 2]
    xz_fw_ref = refs[n_lw + 3]
    xz_bw_ref = refs[n_lw + 4]
    bufs = (refs[n_lw + 5], refs[n_lw + 6])   # layer-output ping/pong scratch

    for layer in range(num_layers):
        w_in_fw_ref = layer_refs[4 * layer + 0]
        w_in_bw_ref = layer_refs[4 * layer + 1]
        w_rec_ref = layer_refs[4 * layer + 2]
        b_cat_ref = layer_refs[4 * layer + 3]

        # ---- hoisted input projection: one big matmul per direction over all
        # T*B rows, bias folded in once (outside the recurrent loop).
        if layer == 0:
            x_in = x_ref[...]                                      # (T*B, D) bf16
        else:
            x_in = bufs[(layer - 1) % 2][...].astype(jnp.bfloat16)  # (T*B, 2H)
        xz_fw_ref[...] = (
            jnp.dot(x_in, w_in_fw_ref[...], preferred_element_type=jnp.float32)
            + b_cat_ref[...])
        xz_bw_ref[...] = jnp.dot(x_in, w_in_bw_ref[...],
                                 preferred_element_type=jnp.float32)

        out_buf = bufs[layer % 2]
        w_rec = w_rec_ref[...]                                      # (2H, 8H) bf16

        # ---- interleaved fw/bw recurrence: one fused N=256 MXU op per step.
        h = jnp.zeros((B, H2), jnp.float32)
        c = jnp.zeros((B, H2), jnp.float32)
        for s in range(T):
            tf = s              # forward time index
            tb = T - 1 - s      # backward time index
            z = jnp.dot(h.astype(jnp.bfloat16), w_rec,
                        preferred_element_type=jnp.float32)         # (B, 8H)
            z = (z + xz_fw_ref[tf * B:(tf + 1) * B, :]
                   + xz_bw_ref[tb * B:(tb + 1) * B, :])
            i = _sigmoid_kernel(z[:, 0 * H2:1 * H2])                 # both dirs
            f = _sigmoid_kernel(z[:, 1 * H2:2 * H2])
            g = jnp.tanh(z[:, 2 * H2:3 * H2])
            o = _sigmoid_kernel(z[:, 3 * H2:4 * H2])
            c = f * c + i * g
            h = o * jnp.tanh(c)
            # Scratch-backed per-step outputs (lane-aligned masked stores).
            out_buf[tf * B:(tf + 1) * B, 0:H] = h[:, 0:H]            # fw @ time tf
            out_buf[tb * B:(tb + 1) * B, H:H2] = h[:, H:H2]          # bw @ time tb

    # ---- fc over the torch-flattened outputs, without any in-kernel
    # transpose/concat: accumulate T small dots against per-t weight blocks.
    last = bufs[(num_layers - 1) % 2]
    acc = jnp.zeros(out_ref.shape, jnp.float32)
    for t in range(T):
        acc = acc + jnp.dot(last[t * B:(t + 1) * B, :].astype(jnp.bfloat16),
                            fc_w_ref[t * H2:(t + 1) * H2, :],
                            preferred_element_type=jnp.float32)
    out_ref[...] = acc + fc_b_ref[...]


# ------------------------------ wrapper ---------------------------------------
def prepare_params(params):
    """One-time conversion (outside the hot path) to the fused kernel layout:
    scatter W_ih^T / W_hh^T into the gate-interleaved (., 8H) layouts, fold the
    two biases, and pre-cast all matmul weights to bf16."""
    H = params["lstm"][0]["fw"]["w_hh"].shape[1]
    H2, G = 2 * H, 8 * H
    layers = []
    for layer in params["lstm"]:
        fw, bw = layer["fw"], layer["bw"]
        d_in = fw["w_ih"].shape[1]
        w_in_fw = jnp.zeros((d_in, G), jnp.float32)
        w_in_bw = jnp.zeros((d_in, G), jnp.float32)
        w_rec = jnp.zeros((H2, G), jnp.float32)
        b_cat = jnp.zeros((G,), jnp.float32)
        for gi in range(4):                      # PyTorch gate order: i, f, g, o
            c0 = gi * H2                         # fw cols [c0,c0+H), bw [c0+H,c0+2H)
            rows = slice(gi * H, (gi + 1) * H)
            w_in_fw = w_in_fw.at[:, c0:c0 + H].set(fw["w_ih"][rows, :].T)
            w_in_bw = w_in_bw.at[:, c0 + H:c0 + H2].set(bw["w_ih"][rows, :].T)
            w_rec = w_rec.at[0:H, c0:c0 + H].set(fw["w_hh"][rows, :].T)
            w_rec = w_rec.at[H:H2, c0 + H:c0 + H2].set(bw["w_hh"][rows, :].T)
            b_cat = b_cat.at[c0:c0 + H].set(fw["b_ih"][rows] + fw["b_hh"][rows])
            b_cat = b_cat.at[c0 + H:c0 + H2].set(bw["b_ih"][rows] + bw["b_hh"][rows])
        layers.append({
            "w_in_fw": w_in_fw.astype(jnp.bfloat16),
            "w_in_bw": w_in_bw.astype(jnp.bfloat16),
            "w_rec": w_rec.astype(jnp.bfloat16),
            "b_cat": b_cat.reshape(1, G),                         # stays f32
        })
    return {
        "layers": layers,
        "fc_w_t": jnp.transpose(params["fc"]["w"]).astype(jnp.bfloat16),  # (T*2H, C)
        "fc_b": params["fc"]["b"].reshape(1, -1),                          # (1, C) f32
    }


@jax.jit
def bilstm_fc_forward(prepped, x):
    """x: (B, T, input_size) -> logits (B, num_classes)."""
    B, T, D = x.shape
    num_layers = len(prepped["layers"])
    H = prepped["layers"][0]["w_rec"].shape[0] // 2
    C = prepped["fc_b"].shape[-1]
    G = 8 * H

    # Single tiny relayout + MXU-operand cast outside the kernel:
    # row index of x_tm = t*B + b (time-major), bf16 for the MXU.
    x_tm = jnp.transpose(x, (1, 0, 2)).reshape(T * B, D).astype(jnp.bfloat16)

    args = [x_tm]
    for lp in prepped["layers"]:
        args += [lp["w_in_fw"], lp["w_in_bw"], lp["w_rec"], lp["b_cat"]]
    args += [prepped["fc_w_t"], prepped["fc_b"]]

    kernel = functools.partial(_bilstm_fc_kernel, num_layers=num_layers,
                               hidden_size=H, seq_len=T, batch=B)
    return pl.pallas_call(
        kernel,
        out_shape=jax.ShapeDtypeStruct((B, C), jnp.float32),
        in_specs=[pl.BlockSpec(memory_space=pltpu.MemorySpace.VMEM)] * len(args),
        out_specs=pl.BlockSpec(memory_space=pltpu.MemorySpace.VMEM),
        scratch_shapes=[
            pltpu.VMEM((T * B, G), jnp.float32),        # x-proj, fw gate cols (+bias)
            pltpu.VMEM((T * B, G), jnp.float32),        # x-proj, bw gate cols
            pltpu.VMEM((T * B, 2 * H), jnp.float32),    # layer outputs (ping)
            pltpu.VMEM((T * B, 2 * H), jnp.float32),    # layer outputs (pong)
        ],
    )(*args)


# ------------------------------ init & references -----------------------------
def init_params(key, input_size, hidden_size, num_layers, num_classes, seq_len):
    """PyTorch-style layout/init: U(-1/sqrt(H), 1/sqrt(H)) for LSTM weights."""
    params = {"lstm": [], "fc": {}}
    H = hidden_size
    k = 1.0 / (hidden_size ** 0.5)
    for layer in range(num_layers):
        d_in = input_size if layer == 0 else 2 * hidden_size
        layer_p = {}
        for d in ("fw", "bw"):
            key, k1, k2, k3, k4 = jax.random.split(key, 5)
            layer_p[d] = {
                "w_ih": jax.random.uniform(k1, (4 * H, d_in), jnp.float32, -k, k),
                "w_hh": jax.random.uniform(k2, (4 * H, H), jnp.float32, -k, k),
                "b_ih": jax.random.uniform(k3, (4 * H,), jnp.float32, -k, k),
                "b_hh": jax.random.uniform(k4, (4 * H,), jnp.float32, -k, k),
            }
        params["lstm"].append(layer_p)
    kf = 1.0 / ((2 * hidden_size * seq_len) ** 0.5)
    key, k1, k2 = jax.random.split(key, 3)
    params["fc"]["w"] = jax.random.uniform(
        k1, (num_classes, 2 * hidden_size * seq_len), jnp.float32, -kf, kf)
    params["fc"]["b"] = jax.random.uniform(
        k2, (num_classes,), jnp.float32, -kf, kf)
    return params


def _reference_forward(params, x, matmul_bf16):
    """Pure-JAX reference of the PyTorch forward (bidirectional LSTM + fc).
    matmul_bf16=False: full-f32 (HIGHEST) PyTorch-semantics reference.
    matmul_bf16=True : bf16 matmul operands / f32 accumulation, matching the
                       kernel's numerics (gate math stays f32 in both)."""
    hp = jax.lax.Precision.HIGHEST
    bf = jnp.bfloat16

    def mm(a, b):
        if matmul_bf16:
            return jnp.dot(a.astype(bf), b.astype(bf),
                           preferred_element_type=jnp.float32)
        return jnp.dot(a, b, precision=hp)

    B, T, _ = x.shape
    inp = x
    for layer in params["lstm"]:
        dir_outs = []
        for d, reverse in (("fw", False), ("bw", True)):
            p = layer[d]
            H = p["w_hh"].shape[1]
            b = p["b_ih"] + p["b_hh"]
            h = jnp.zeros((B, H), jnp.float32)
            c = jnp.zeros((B, H), jnp.float32)
            hs = [None] * T
            steps = range(T - 1, -1, -1) if reverse else range(T)
            for t in steps:
                z = mm(inp[:, t, :], p["w_ih"].T) + b + mm(h, p["w_hh"].T)
                i = _sigmoid_ref(z[:, 0:H])
                f = _sigmoid_ref(z[:, H:2 * H])
                g = jnp.tanh(z[:, 2 * H:3 * H])
                o = _sigmoid_ref(z[:, 3 * H:4 * H])
                c = f * c + i * g
                h = o * jnp.tanh(c)
                hs[t] = h
            dir_outs.append(jnp.stack(hs, axis=1))                 # (B, T, H)
        inp = jnp.concatenate(dir_outs, axis=-1)                   # (B, T, 2H)
    flat = inp.reshape(B, -1)
    return mm(flat, params["fc"]["w"].T) + params["fc"]["b"]


if __name__ == "__main__":
    batch = 2
    seq_len = 8
    input_size = 16
    hidden_size = 32        # 4H = 128 per direction; fused gate width 8H = 256
    num_layers = 2
    num_classes = 10

    key = jax.random.PRNGKey(0)
    key, xkey = jax.random.split(key)
    x = jax.random.normal(xkey, (batch, seq_len, input_size), jnp.float32)

    params = init_params(key, input_size, hidden_size, num_layers,
                         num_classes, seq_len)
    prepped = prepare_params(params)   # one-time weight re-layout / bf16 cast

    out = bilstm_fc_forward(prepped, x)
    out = jax.block_until_ready(out)
    assert out.shape == (batch, num_classes)

    # (a) tight check vs a reference with the same bf16-MXU numerics.
    ref_match = _reference_forward(params, x, matmul_bf16=True)
    err_match = float(jnp.max(jnp.abs(out - ref_match)))
    assert err_match < 5e-3, f"mismatch vs bf16-matched reference: {err_match}"

    # (b) loose check vs the full-f32 PyTorch-semantics reference
    #     (tolerance covers the intentional bf16 MXU-operand drift).
    ref_f32 = _reference_forward(params, x, matmul_bf16=False)
    err_f32 = float(jnp.max(jnp.abs(out - ref_f32)))
    assert err_f32 < 3e-2, f"mismatch vs f32 reference: {err_f32}"

    print("KERNEL_OK")
</pallas_src>

<mosaic_0001>
module attributes {stable_mosaic.version = 11 : i64} {
  func.func @_bilstm_fc_kernel(%arg0: memref<16x16xbf16, #tpu.memory_space<vmem>>, %arg1: memref<16x256xbf16, #tpu.memory_space<vmem>>, %arg2: memref<16x256xbf16, #tpu.memory_space<vmem>>, %arg3: memref<64x256xbf16, #tpu.memory_space<vmem>>, %arg4: memref<1x256xf32, #tpu.memory_space<vmem>>, %arg5: memref<64x256xbf16, #tpu.memory_space<vmem>>, %arg6: memref<64x256xbf16, #tpu.memory_space<vmem>>, %arg7: memref<64x256xbf16, #tpu.memory_space<vmem>>, %arg8: memref<1x256xf32, #tpu.memory_space<vmem>>, %arg9: memref<512x10xbf16, #tpu.memory_space<vmem>>, %arg10: memref<1x10xf32, #tpu.memory_space<vmem>>, %arg11: memref<2x10xf32, #tpu.memory_space<vmem>>, %arg12: memref<16x256xf32, #tpu.memory_space<vmem>>, %arg13: memref<16x256xf32, #tpu.memory_space<vmem>>, %arg14: memref<16x64xf32, #tpu.memory_space<vmem>>, %arg15: memref<16x64xf32, #tpu.memory_space<vmem>>) attributes {dimension_semantics = [], scalar_prefetch = 0 : i64, scratch_operands = 4 : i64, tpu.core_type = #tpu.core_type<tc>} {
    %c0 = arith.constant 0 : index
    %c0_0 = arith.constant 0 : index
    %0 = vector.load %arg0[%c0, %c0_0] : memref<16x16xbf16, #tpu.memory_space<vmem>>, vector<16x16xbf16>
    %c0_1 = arith.constant 0 : index
    %c0_2 = arith.constant 0 : index
    %1 = vector.load %arg1[%c0_1, %c0_2] : memref<16x256xbf16, #tpu.memory_space<vmem>>, vector<16x256xbf16>
    %cst = arith.constant dense<0.000000e+00> : vector<16x256xf32>
    %2 = tpu.matmul %0, %1, %cst {dimension_numbers = #tpu.dot_dimension_numbers<[1], [0], [0], [1], [0, 0, 1, 1], [], []>} : vector<16x16xbf16>, vector<16x256xbf16>, vector<16x256xf32> -> vector<16x256xf32>
    %c0_3 = arith.constant 0 : index
    %c0_4 = arith.constant 0 : index
    %3 = vector.load %arg4[%c0_3, %c0_4] : memref<1x256xf32, #tpu.memory_space<vmem>>, vector<1x256xf32>
    %4 = vector.broadcast %3 : vector<1x256xf32> to vector<16x256xf32>
    %5 = arith.addf %2, %4 : vector<16x256xf32>
    %c0_5 = arith.constant 0 : index
    %c0_6 = arith.constant 0 : index
    %6 = vector.load %arg12[%c0_5, %c0_6] : memref<16x256xf32, #tpu.memory_space<vmem>>, vector<16x256xf32>
    tpu.vector_store %arg12[%c0_5, %c0_6], %5 {strides = array<i32>} : memref<16x256xf32, #tpu.memory_space<vmem>>, vector<16x256xf32>,
    %c0_7 = arith.constant 0 : index
    %c0_8 = arith.constant 0 : index
    %7 = vector.load %arg2[%c0_7, %c0_8] : memref<16x256xbf16, #tpu.memory_space<vmem>>, vector<16x256xbf16>
    %cst_9 = arith.constant dense<0.000000e+00> : vector<16x256xf32>
    %8 = tpu.matmul %0, %7, %cst_9 {dimension_numbers = #tpu.dot_dimension_numbers<[1], [0], [0], [1], [0, 0, 1, 1], [], []>} : vector<16x16xbf16>, vector<16x256xbf16>, vector<16x256xf32> -> vector<16x256xf32>
    %c0_10 = arith.constant 0 : index
    %c0_11 = arith.constant 0 : index
    %9 = vector.load %arg13[%c0_10, %c0_11] : memref<16x256xf32, #tpu.memory_space<vmem>>, vector<16x256xf32>
    tpu.vector_store %arg13[%c0_10, %c0_11], %8 {strides = array<i32>} : memref<16x256xf32, #tpu.memory_space<vmem>>, vector<16x256xf32>,
    %c0_12 = arith.constant 0 : index
    %c0_13 = arith.constant 0 : index
    %10 = vector.load %arg3[%c0_12, %c0_13] : memref<64x256xbf16, #tpu.memory_space<vmem>>, vector<64x256xbf16>
    %cst_14 = arith.constant 0.000000e+00 : f32
    %11 = vector.broadcast %cst_14 : f32 to vector<2x64xf32>
    %cst_15 = arith.constant 0.000000e+00 : f32
    %12 = vector.broadcast %cst_15 : f32 to vector<2x64xf32>
    %13 = arith.truncf %11 : vector<2x64xf32> to vector<2x64xbf16>
    %cst_16 = arith.constant dense<0.000000e+00> : vector<2x256xf32>
    %14 = tpu.matmul %13, %10, %cst_16 {dimension_numbers = #tpu.dot_dimension_numbers<[1], [0], [0], [1], [0, 0, 1, 1], [], []>} : vector<2x64xbf16>, vector<64x256xbf16>, vector<2x256xf32> -> vector<2x256xf32>
    %c0_17 = arith.constant 0 : index
    %c0_18 = arith.constant 0 : index
    %15 = vector.load %arg12[%c0_17, %c0_18] : memref<16x256xf32, #tpu.memory_space<vmem>>, vector<2x256xf32>
    %16 = arith.addf %14, %15 : vector<2x256xf32>
    %c14 = arith.constant 14 : index
    %c0_19 = arith.constant 0 : index
    %17 = vector.load %arg13[%c14, %c0_19] : memref<16x256xf32, #tpu.memory_space<vmem>>, vector<2x256xf32>
    %18 = arith.addf %16, %17 : vector<2x256xf32>
    %19 = vector.extract_strided_slice %18 {offsets = [0, 0], sizes = [2, 64], strides = [1, 1]} : vector<2x256xf32> to vector<2x64xf32>
    %cst_20 = arith.constant 0.000000e+00 : f32
    %20 = vector.broadcast %cst_20 : f32 to vector<2x64xf32>
    %21 = arith.subf %20, %19 : vector<2x64xf32>
    %22 = math.exp %21 : vector<2x64xf32>
    %cst_21 = arith.constant 1.000000e+00 : f32
    %23 = vector.broadcast %cst_21 : f32 to vector<2x64xf32>
    %24 = arith.addf %23, %22 : vector<2x64xf32>
    %25 = tpu.reciprocal %24 : vector<2x64xf32> -> vector<2x64xf32>
    %26 = vector.extract_strided_slice %18 {offsets = [0, 64], sizes = [2, 64], strides = [1, 1]} : vector<2x256xf32> to vector<2x64xf32>
    %cst_22 = arith.constant 0.000000e+00 : f32
    %27 = vector.broadcast %cst_22 : f32 to vector<2x64xf32>
    %28 = arith.subf %27, %26 : vector<2x64xf32>
    %29 = math.exp %28 : vector<2x64xf32>
    %cst_23 = arith.constant 1.000000e+00 : f32
    %30 = vector.broadcast %cst_23 : f32 to vector<2x64xf32>
    %31 = arith.addf %30, %29 : vector<2x64xf32>
    %32 = tpu.reciprocal %31 : vector<2x64xf32> -> vector<2x64xf32>
    %33 = vector.extract_strided_slice %18 {offsets = [0, 128], sizes = [2, 64], strides = [1, 1]} : vector<2x256xf32> to vector<2x64xf32>
    %34 = math.tanh %33 : vector<2x64xf32>
    %35 = vector.extract_strided_slice %18 {offsets = [0, 192], sizes = [2, 64], strides = [1, 1]} : vector<2x256xf32> to vector<2x64xf32>
    %cst_24 = arith.constant 0.000000e+00 : f32
    %36 = vector.broadcast %cst_24 : f32 to vector<2x64xf32>
    %37 = arith.subf %36, %35 : vector<2x64xf32>
    %38 = math.exp %37 : vector<2x64xf32>
    %cst_25 = arith.constant 1.000000e+00 : f32
    %39 = vector.broadcast %cst_25 : f32 to vector<2x64xf32>
    %40 = arith.addf %39, %38 : vector<2x64xf32>
    %41 = tpu.reciprocal %40 : vector<2x64xf32> -> vector<2x64xf32>
    %42 = arith.mulf %32, %12 : vector<2x64xf32>
    %43 = arith.mulf %25, %34 : vector<2x64xf32>
    %44 = arith.addf %42, %43 : vector<2x64xf32>
    %45 = math.tanh %44 : vector<2x64xf32>
    %46 = arith.mulf %41, %45 : vector<2x64xf32>
    %47 = vector.extract_strided_slice %46 {offsets = [0, 0], sizes = [2, 32], strides = [1, 1]} : vector<2x64xf32> to vector<2x32xf32>
    %c0_26 = arith.constant 0 : index
    %c0_27 = arith.constant 0 : index
    %48 = vector.load %arg14[%c0_26, %c0_27] : memref<16x64xf32, #tpu.memory_space<vmem>>, vector<2x32xf32>
    tpu.vector_store %arg14[%c0_26, %c0_27], %47 {strides = array<i32>} : memref<16x64xf32, #tpu.memory_space<vmem>>, vector<2x32xf32>,
    %49 = vector.extract_strided_slice %46 {offsets = [0, 32], sizes = [2, 32], strides = [1, 1]} : vector<2x64xf32> to vector<2x32xf32>
    %c14_28 = arith.constant 14 : index
    %c32 = arith.constant 32 : index
    %50 = vector.load %arg14[%c14_28, %c32] : memref<16x64xf32, #tpu.memory_space<vmem>>, vector<2x32xf32>
    tpu.vector_store %arg14[%c14_28, %c32], %49 {strides = array<i32>} : memref<16x64xf32, #tpu.memory_space<vmem>>, vector<2x32xf32>,
    %51 = arith.truncf %46 : vector<2x64xf32> to vector<2x64xbf16>
    %cst_29 = arith.constant dense<0.000000e+00> : vector<2x256xf32>
    %52 = tpu.matmul %51, %10, %cst_29 {dimension_numbers = #tpu.dot_dimension_numbers<[1], [0], [0], [1], [0, 0, 1, 1], [], []>} : vector<2x64xbf16>, vector<64x256xbf16>, vector<2x256xf32> -> vector<2x256xf32>
    %c2 = arith.constant 2 : index
    %c0_30 = arith.constant 0 : index
    %53 = vector.load %arg12[%c2, %c0_30] : memref<16x256xf32, #tpu.memory_space<vmem>>, vector<2x256xf32>
    %54 = arith.addf %52, %53 : vector<2x256xf32>
    %c12 = arith.constant 12 : index
    %c0_31 = arith.constant 0 : index
    %55 = vector.load %arg13[%c12, %c0_31] : memref<16x256xf32, #tpu.memory_space<vmem>>, vector<2x256xf32>
    %56 = arith.addf %54, %55 : vector<2x256xf32>
    %57 = vector.extract_strided_slice %56 {offsets = [0, 0], sizes = [2, 64], strides = [1, 1]} : vector<2x256xf32> to vector<2x64xf32>
    %cst_32 = arith.constant 0.000000e+00 : f32
    %58 = vector.broadcast %cst_32 : f32 to vector<2x64xf32>
    %59 = arith.subf %58, %57 : vector<2x64xf32>
    %60 = math.exp %59 : vector<2x64xf32>
    %cst_33 = arith.constant 1.000000e+00 : f32
    %61 = vector.broadcast %cst_33 : f32 to vector<2x64xf32>
    %62 = arith.addf %61, %60 : vector<2x64xf32>
    %63 = tpu.reciprocal %62 : vector<2x64xf32> -> vector<2x64xf32>
    %64 = vector.extract_strided_slice %56 {offsets = [0, 64], sizes = [2, 64], strides = [1, 1]} : vector<2x256xf32> to vector<2x64xf32>
    %cst_34 = arith.constant 0.000000e+00 : f32
    %65 = vector.broadcast %cst_34 : f32 to vector<2x64xf32>
    %66 = arith.subf %65, %64 : vector<2x64xf32>
    %67 = math.exp %66 : vector<2x64xf32>
    %cst_35 = arith.constant 1.000000e+00 : f32
    %68 = vector.broadcast %cst_35 : f32 to vector<2x64xf32>
    %69 = arith.addf %68, %67 : vector<2x64xf32>
    %70 = tpu.reciprocal %69 : vector<2x64xf32> -> vector<2x64xf32>
    %71 = vector.extract_strided_slice %56 {offsets = [0, 128], sizes = [2, 64], strides = [1, 1]} : vector<2x256xf32> to vector<2x64xf32>
    %72 = math.tanh %71 : vector<2x64xf32>
    %73 = vector.extract_strided_slice %56 {offsets = [0, 192], sizes = [2, 64], strides = [1, 1]} : vector<2x256xf32> to vector<2x64xf32>
    %cst_36 = arith.constant 0.000000e+00 : f32
    %74 = vector.broadcast %cst_36 : f32 to vector<2x64xf32>
    %75 = arith.subf %74, %73 : vector<2x64xf32>
    %76 = math.exp %75 : vector<2x64xf32>
    %cst_37 = arith.constant 1.000000e+00 : f32
    %77 = vector.broadcast %cst_37 : f32 to vector<2x64xf32>
    %78 = arith.addf %77, %76 : vector<2x64xf32>
    %79 = tpu.reciprocal %78 : vector<2x64xf32> -> vector<2x64xf32>
    %80 = arith.mulf %70, %44 : vector<2x64xf32>
    %81 = arith.mulf %63, %72 : vector<2x64xf32>
    %82 = arith.addf %80, %81 : vector<2x64xf32>
    %83 = math.tanh %82 : vector<2x64xf32>
    %84 = arith.mulf %79, %83 : vector<2x64xf32>
    %85 = vector.extract_strided_slice %84 {offsets = [0, 0], sizes = [2, 32], strides = [1, 1]} : vector<2x64xf32> to vector<2x32xf32>
    %c2_38 = arith.constant 2 : index
    %c0_39 = arith.constant 0 : index
    %86 = vector.load %arg14[%c2_38, %c0_39] : memref<16x64xf32, #tpu.memory_space<vmem>>, vector<2x32xf32>
    tpu.vector_store %arg14[%c2_38, %c0_39], %85 {strides = array<i32>} : memref<16x64xf32, #tpu.memory_space<vmem>>, vector<2x32xf32>,
    %87 = vector.extract_strided_slice %84 {offsets = [0, 32], sizes = [2, 32], strides = [1, 1]} : vector<2x64xf32> to vector<2x32xf32>
    %c12_40 = arith.constant 12 : index
    %c32_41 = arith.constant 32 : index
    %88 = vector.load %arg14[%c12_40, %c32_41] : memref<16x64xf32, #tpu.memory_space<vmem>>, vector<2x32xf32>
    tpu.vector_store %arg14[%c12_40, %c32_41], %87 {strides = array<i32>} : memref<16x64xf32, #tpu.memory_space<vmem>>, vector<2x32xf32>,
    %89 = arith.truncf %84 : vector<2x64xf32> to vector<2x64xbf16>
    %cst_42 = arith.constant dense<0.000000e+00> : vector<2x256xf32>
    %90 = tpu.matmul %89, %10, %cst_42 {dimension_numbers = #tpu.dot_dimension_numbers<[1], [0], [0], [1], [0, 0, 1, 1], [], []>} : vector<2x64xbf16>, vector<64x256xbf16>, vector<2x256xf32> -> vector<2x256xf32>
    %c4 = arith.constant 4 : index
    %c0_43 = arith.constant 0 : index
    %91 = vector.load %arg12[%c4, %c0_43] : memref<16x256xf32, #tpu.memory_space<vmem>>, vector<2x256xf32>
    %92 = arith.addf %90, %91 : vector<2x256xf32>
    %c10 = arith.constant 10 : index
    %c0_44 = arith.constant 0 : index
    %93 = vector.load %arg13[%c10, %c0_44] : memref<16x256xf32, #tpu.memory_space<vmem>>, vector<2x256xf32>
    %94 = arith.addf %92, %93 : vector<2x256xf32>
    %95 = vector.extract_strided_slice %94 {offsets = [0, 0], sizes = [2, 64], strides = [1, 1]} : vector<2x256xf32> to vector<2x64xf32>
    %cst_45 = arith.constant 0.000000e+00 : f32
    %96 = vector.broadcast %cst_45 : f32 to vector<2x64xf32>
    %97 = arith.subf %96, %95 : vector<2x64xf32>
    %98 = math.exp %97 : vector<2x64xf32>
    %cst_46 = arith.constant 1.000000e+00 : f32
    %99 = vector.broadcast %cst_46 : f32 to vector<2x64xf32>
    %100 = arith.addf %99, %98 : vector<2x64xf32>
    %101 = tpu.reciprocal %100 : vector<2x64xf32> -> vector<2x64xf32>
    %102 = vector.extract_strided_slice %94 {offsets = [0, 64], sizes = [2, 64], strides = [1, 1]} : vector<2x256xf32> to vector<2x64xf32>
    %cst_47 = arith.constant 0.000000e+00 : f32
    %103 = vector.broadcast %cst_47 : f32 to vector<2x64xf32>
    %104 = arith.subf %103, %102 : vector<2x64xf32>
    %105 = math.exp %104 : vector<2x64xf32>
    %cst_48 = arith.constant 1.000000e+00 : f32
    %106 = vector.broadcast %cst_48 : f32 to vector<2x64xf32>
    %107 = arith.addf %106, %105 : vector<2x64xf32>
    %108 = tpu.reciprocal %107 : vector<2x64xf32> -> vector<2x64xf32>
    %109 = vector.extract_strided_slice %94 {offsets = [0, 128], sizes = [2, 64], strides = [1, 1]} : vector<2x256xf32> to vector<2x64xf32>
    %110 = math.tanh %109 : vector<2x64xf32>
    %111 = vector.extract_strided_slice %94 {offsets = [0, 192], sizes = [2, 64], strides = [1, 1]} : vector<2x256xf32> to vector<2x64xf32>
    %cst_49 = arith.constant 0.000000e+00 : f32
    %112 = vector.broadcast %cst_49 : f32 to vector<2x64xf32>
    %113 = arith.subf %112, %111 : vector<2x64xf32>
    %114 = math.exp %113 : vector<2x64xf32>
    %cst_50 = arith.constant 1.000000e+00 : f32
    %115 = vector.broadcast %cst_50 : f32 to vector<2x64xf32>
    %116 = arith.addf %115, %114 : vector<2x64xf32>
    %117 = tpu.reciprocal %116 : vector<2x64xf32> -> vector<2x64xf32>
    %118 = arith.mulf %108, %82 : vector<2x64xf32>
    %119 = arith.mulf %101, %110 : vector<2x64xf32>
    %120 = arith.addf %118, %119 : vector<2x64xf32>
    %121 = math.tanh %120 : vector<2x64xf32>
    %122 = arith.mulf %117, %121 : vector<2x64xf32>
    %123 = vector.extract_strided_slice %122 {offsets = [0, 0], sizes = [2, 32], strides = [1, 1]} : vector<2x64xf32> to vector<2x32xf32>
    %c4_51 = arith.constant 4 : index
    %c0_52 = arith.constant 0 : index
    %124 = vector.load %arg14[%c4_51, %c0_52] : memref<16x64xf32, #tpu.memory_space<vmem>>, vector<2x32xf32>
    tpu.vector_store %arg14[%c4_51, %c0_52], %123 {strides = array<i32>} : memref<16x64xf32, #tpu.memory_space<vmem>>, vector<2x32xf32>,
    %125 = vector.extract_strided_slice %122 {offsets = [0, 32], sizes = [2, 32], strides = [1, 1]} : vector<2x64xf32> to vector<2x32xf32>
    %c10_53 = arith.constant 10 : index
    %c32_54 = arith.constant 32 : index
    %126 = vector.load %arg14[%c10_53, %c32_54] : memref<16x64xf32, #tpu.memory_space<vmem>>, vector<2x32xf32>
    tpu.vector_store %arg14[%c10_53, %c32_54], %125 {strides = array<i32>} : memref<16x64xf32, #tpu.memory_space<vmem>>, vector<2x32xf32>,
    %127 = arith.truncf %122 : vector<2x64xf32> to vector<2x64xbf16>
    %cst_55 = arith.constant dense<0.000000e+00> : vector<2x256xf32>
    %128 = tpu.matmul %127, %10, %cst_55 {dimension_numbers = #tpu.dot_dimension_numbers<[1], [0], [0], [1], [0, 0, 1, 1], [], []>} : vector<2x64xbf16>, vector<64x256xbf16>, vector<2x256xf32> -> vector<2x256xf32>
    %c6 = arith.constant 6 : index
    %c0_56 = arith.constant 0 : index
    %129 = vector.load %arg12[%c6, %c0_56] : memref<16x256xf32, #tpu.memory_space<vmem>>, vector<2x256xf32>
    %130 = arith.addf %128, %129 : vector<2x256xf32>
    %c8 = arith.constant 8 : index
    %c0_57 = arith.constant 0 : index
    %131 = vector.load %arg13[%c8, %c0_57] : memref<16x256xf32, #tpu.memory_space<vmem>>, vector<2x256xf32>
    %132 = arith.addf %130, %131 : vector<2x256xf32>
    %133 = vector.extract_strided_slice %132 {offsets = [0, 0], sizes = [2, 64], strides = [1, 1]} : vector<2x256xf32> to vector<2x64xf32>
    %cst_58 = arith.constant 0.000000e+00 : f32
    %134 = vector.broadcast %cst_58 : f32 to vector<2x64xf32>
    %135 = arith.subf %134, %133 : vector<2x64xf32>
    %136 = math.exp %135 : vector<2x64xf32>
    %cst_59 = arith.constant 1.000000e+00 : f32
    %137 = vector.broadcast %cst_59 : f32 to vector<2x64xf32>
    %138 = arith.addf %137, %136 : vector<2x64xf32>
    %139 = tpu.reciprocal %138 : vector<2x64xf32> -> vector<2x64xf32>
    %140 = vector.extract_strided_slice %132 {offsets = [0, 64], sizes = [2, 64], strides = [1, 1]} : vector<2x256xf32> to vector<2x64xf32>
    %cst_60 = arith.constant 0.000000e+00 : f32
    %141 = vector.broadcast %cst_60 : f32 to vector<2x64xf32>
    %142 = arith.subf %141, %140 : vector<2x64xf32>
    %143 = math.exp %142 : vector<2x64xf32>
    %cst_61 = arith.constant 1.000000e+00 : f32
    %144 = vector.broadcast %cst_61 : f32 to vector<2x64xf32>
    %145 = arith.addf %144, %143 : vector<2x64xf32>
    %146 = tpu.reciprocal %145 : vector<2x64xf32> -> vector<2x64xf32>
    %147 = vector.extract_strided_slice %132 {offsets = [0, 128], sizes = [2, 64], strides = [1, 1]} : vector<2x256xf32> to vector<2x64xf32>
    %148 = math.tanh %147 : vector<2x64xf32>
    %149 = vector.extract_strided_slice %132 {offsets = [0, 192], sizes = [2, 64], strides = [1, 1]} : vector<2x256xf32> to vector<2x64xf32>
    %cst_62 = arith.constant 0.000000e+00 : f32
    %150 = vector.broadcast %cst_62 : f32 to vector<2x64xf32>
    %151 = arith.subf %150, %149 : vector<2x64xf32>
    %152 = math.exp %151 : vector<2x64xf32>
    %cst_63 = arith.constant 1.000000e+00 : f32
    %153 = vector.broadcast %cst_63 : f32 to vector<2x64xf32>
    %154 = arith.addf %153, %152 : vector<2x64xf32>
    %155 = tpu.reciprocal %154 : vector<2x64xf32> -> vector<2x64xf32>
    %156 = arith.mulf %146, %120 : vector<2x64xf32>
    %157 = arith.mulf %139, %148 : vector<2x64xf32>
    %158 = arith.addf %156, %157 : vector<2x64xf32>
    %159 = math.tanh %158 : vector<2x64xf32>
    %160 = arith.mulf %155, %159 : vector<2x64xf32>
    %161 = vector.extract_strided_slice %160 {offsets = [0, 0], sizes = [2, 32], strides = [1, 1]} : vector<2x64xf32> to vector<2x32xf32>
    %c6_64 = arith.constant 6 : index
    %c0_65 = arith.constant 0 : index
    %162 = vector.load %arg14[%c6_64, %c0_65] : memref<16x64xf32, #tpu.memory_space<vmem>>, vector<2x32xf32>
    tpu.vector_store %arg14[%c6_64, %c0_65], %161 {strides = array<i32>} : memref<16x64xf32, #tpu.memory_space<vmem>>, vector<2x32xf32>,
    %163 = vector.extract_strided_slice %160 {offsets = [0, 32], sizes = [2, 32], strides = [1, 1]} : vector<2x64xf32> to vector<2x32xf32>
    %c8_66 = arith.constant 8 : index
    %c32_67 = arith.constant 32 : index
    %164 = vector.load %arg14[%c8_66, %c32_67] : memref<16x64xf32, #tpu.memory_space<vmem>>, vector<2x32xf32>
    tpu.vector_store %arg14[%c8_66, %c32_67], %163 {strides = array<i32>} : memref<16x64xf32, #tpu.memory_space<vmem>>, vector<2x32xf32>,
    %165 = arith.truncf %160 : vector<2x64xf32> to vector<2x64xbf16>
    %cst_68 = arith.constant dense<0.000000e+00> : vector<2x256xf32>
    %166 = tpu.matmul %165, %10, %cst_68 {dimension_numbers = #tpu.dot_dimension_numbers<[1], [0], [0], [1], [0, 0, 1, 1], [], []>} : vector<2x64xbf16>, vector<64x256xbf16>, vector<2x256xf32> -> vector<2x256xf32>
    %c8_69 = arith.constant 8 : index
    %c0_70 = arith.constant 0 : index
    %167 = vector.load %arg12[%c8_69, %c0_70] : memref<16x256xf32, #tpu.memory_space<vmem>>, vector<2x256xf32>
    %168 = arith.addf %166, %167 : vector<2x256xf32>
    %c6_71 = arith.constant 6 : index
    %c0_72 = arith.constant 0 : index
    %169 = vector.load %arg13[%c6_71, %c0_72] : memref<16x256xf32, #tpu.memory_space<vmem>>, vector<2x256xf32>
    %170 = arith.addf %168, %169 : vector<2x256xf32>
    %171 = vector.extract_strided_slice %170 {offsets = [0, 0], sizes = [2, 64], strides = [1, 1]} : vector<2x256xf32> to vector<2x64xf32>
    %cst_73 = arith.constant 0.000000e+00 : f32
    %172 = vector.broadcast %cst_73 : f32 to vector<2x64xf32>
    %173 = arith.subf %172, %171 : vector<2x64xf32>
    %174 = math.exp %173 : vector<2x64xf32>
    %cst_74 = arith.constant 1.000000e+00 : f32
    %175 = vector.broadcast %cst_74 : f32 to vector<2x64xf32>
    %176 = arith.addf %175, %174 : vector<2x64xf32>
    %177 = tpu.reciprocal %176 : vector<2x64xf32> -> vector<2x64xf32>
    %178 = vector.extract_strided_slice %170 {offsets = [0, 64], sizes = [2, 64], strides = [1, 1]} : vector<2x256xf32> to vector<2x64xf32>
    %cst_75 = arith.constant 0.000000e+00 : f32
    %179 = vector.broadcast %cst_75 : f32 to vector<2x64xf32>
    %180 = arith.subf %179, %178 : vector<2x64xf32>
    %181 = math.exp %180 : vector<2x64xf32>
    %cst_76 = arith.constant 1.000000e+00 : f32
    %182 = vector.broadcast %cst_76 : f32 to vector<2x64xf32>
    %183 = arith.addf %182, %181 : vector<2x64xf32>
    %184 = tpu.reciprocal %183 : vector<2x64xf32> -> vector<2x64xf32>
    %185 = vector.extract_strided_slice %170 {offsets = [0, 128], sizes = [2, 64], strides = [1, 1]} : vector<2x256xf32> to vector<2x64xf32>
    %186 = math.tanh %185 : vector<2x64xf32>
    %187 = vector.extract_strided_slice %170 {offsets = [0, 192], sizes = [2, 64], strides = [1, 1]} : vector<2x256xf32> to vector<2x64xf32>
    %cst_77 = arith.constant 0.000000e+00 : f32
    %188 = vector.broadcast %cst_77 : f32 to vector<2x64xf32>
    %189 = arith.subf %188, %187 : vector<2x64xf32>
    %190 = math.exp %189 : vector<2x64xf32>
    %cst_78 = arith.constant 1.000000e+00 : f32
    %191 = vector.broadcast %cst_78 : f32 to vector<2x64xf32>
    %192 = arith.addf %191, %190 : vector<2x64xf32>
    %193 = tpu.reciprocal %192 : vector<2x64xf32> -> vector<2x64xf32>
    %194 = arith.mulf %184, %158 : vector<2x64xf32>
    %195 = arith.mulf %177, %186 : vector<2x64xf32>
    %196 = arith.addf %194, %195 : vector<2x64xf32>
    %197 = math.tanh %196 : vector<2x64xf32>
    %198 = arith.mulf %193, %197 : vector<2x64xf32>
    %199 = vector.extract_strided_slice %198 {offsets = [0, 0], sizes = [2, 32], strides = [1, 1]} : vector<2x64xf32> to vector<2x32xf32>
    %c8_79 = arith.constant 8 : index
    %c0_80 = arith.constant 0 : index
    %200 = vector.load %arg14[%c8_79, %c0_80] : memref<16x64xf32, #tpu.memory_space<vmem>>, vector<2x32xf32>
    tpu.vector_store %arg14[%c8_79, %c0_80], %199 {strides = array<i32>} : memref<16x64xf32, #tpu.memory_space<vmem>>, vector<2x32xf32>,
    %201 = vector.extract_strided_slice %198 {offsets = [0, 32], sizes = [2, 32], strides = [1, 1]} : vector<2x64xf32> to vector<2x32xf32>
    %c6_81 = arith.constant 6 : index
    %c32_82 = arith.constant 32 : index
    %202 = vector.load %arg14[%c6_81, %c32_82] : memref<16x64xf32, #tpu.memory_space<vmem>>, vector<2x32xf32>
    tpu.vector_store %arg14[%c6_81, %c32_82], %201 {strides = array<i32>} : memref<16x64xf32, #tpu.memory_space<vmem>>, vector<2x32xf32>,
    %203 = arith.truncf %198 : vector<2x64xf32> to vector<2x64xbf16>
    %cst_83 = arith.constant dense<0.000000e+00> : vector<2x256xf32>
    %204 = tpu.matmul %203, %10, %cst_83 {dimension_numbers = #tpu.dot_dimension_numbers<[1], [0], [0], [1], [0, 0, 1, 1], [], []>} : vector<2x64xbf16>, vector<64x256xbf16>, vector<2x256xf32> -> vector<2x256xf32>
    %c10_84 = arith.constant 10 : index
    %c0_85 = arith.constant 0 : index
    %205 = vector.load %arg12[%c10_84, %c0_85] : memref<16x256xf32, #tpu.memory_space<vmem>>, vector<2x256xf32>
    %206 = arith.addf %204, %205 : vector<2x256xf32>
    %c4_86 = arith.constant 4 : index
    %c0_87 = arith.constant 0 : index
    %207 = vector.load %arg13[%c4_86, %c0_87] : memref<16x256xf32, #tpu.memory_space<vmem>>, vector<2x256xf32>
    %208 = arith.addf %206, %207 : vector<2x256xf32>
    %209 = vector.extract_strided_slice %208 {offsets = [0, 0], sizes = [2, 64], strides = [1, 1]} : vector<2x256xf32> to vector<2x64xf32>
    %cst_88 = arith.constant 0.000000e+00 : f32
    %210 = vector.broadcast %cst_88 : f32 to vector<2x64xf32>
    %211 = arith.subf %210, %209 : vector<2x64xf32>
    %212 = math.exp %211 : vector<2x64xf32>
    %cst_89 = arith.constant 1.000000e+00 : f32
    %213 = vector.broadcast %cst_89 : f32 to vector<2x64xf32>
    %214 = arith.addf %213, %212 : vector<2x64xf32>
    %215 = tpu.reciprocal %214 : vector<2x64xf32> -> vector<2x64xf32>
    %216 = vector.extract_strided_slice %208 {offsets = [0, 64], sizes = [2, 64], strides = [1, 1]} : vector<2x256xf32> to vector<2x64xf32>
    %cst_90 = arith.constant 0.000000e+00 : f32
    %217 = vector.broadcast %cst_90 : f32 to vector<2x64xf32>
    %218 = arith.subf %217, %216 : vector<2x64xf32>
    %219 = math.exp %218 : vector<2x64xf32>
    %cst_91 = arith.constant 1.000000e+00 : f32
    %220 = vector.broadcast %cst_91 : f32 to vector<2x64xf32>
    %221 = arith.addf %220, %219 : vector<2x64xf32>
    %222 = tpu.reciprocal %221 : vector<2x64xf32> -> vector<2x64xf32>
    %223 = vector.extract_strided_slice %208 {offsets = [0, 128], sizes = [2, 64], strides = [1, 1]} : vector<2x256xf32> to vector<2x64xf32>
    %224 = math.tanh %223 : vector<2x64xf32>
    %225 = vector.extract_strided_slice %208 {offsets = [0, 192], sizes = [2, 64], strides = [1, 1]} : vector<2x256xf32> to vector<2x64xf32>
    %cst_92 = arith.constant 0.000000e+00 : f32
    %226 = vector.broadcast %cst_92 : f32 to vector<2x64xf32>
    %227 = arith.subf %226, %225 : vector<2x64xf32>
    %228 = math.exp %227 : vector<2x64xf32>
    %cst_93 = arith.constant 1.000000e+00 : f32
    %229 = vector.broadcast %cst_93 : f32 to vector<2x64xf32>
    %230 = arith.addf %229, %228 : vector<2x64xf32>
    %231 = tpu.reciprocal %230 : vector<2x64xf32> -> vector<2x64xf32>
    %232 = arith.mulf %222, %196 : vector<2x64xf32>
    %233 = arith.mulf %215, %224 : vector<2x64xf32>
    %234 = arith.addf %232, %233 : vector<2x64xf32>
    %235 = math.tanh %234 : vector<2x64xf32>
    %236 = arith.mulf %231, %235 : vector<2x64xf32>
    %237 = vector.extract_strided_slice %236 {offsets = [0, 0], sizes = [2, 32], strides = [1, 1]} : vector<2x64xf32> to vector<2x32xf32>
    %c10_94 = arith.constant 10 : index
    %c0_95 = arith.constant 0 : index
    %238 = vector.load %arg14[%c10_94, %c0_95] : memref<16x64xf32, #tpu.memory_space<vmem>>, vector<2x32xf32>
    tpu.vector_store %arg14[%c10_94, %c0_95], %237 {strides = array<i32>} : memref<16x64xf32, #tpu.memory_space<vmem>>, vector<2x32xf32>,
    %239 = vector.extract_strided_slice %236 {offsets = [0, 32], sizes = [2, 32], strides = [1, 1]} : vector<2x64xf32> to vector<2x32xf32>
    %c4_96 = arith.constant 4 : index
    %c32_97 = arith.constant 32 : index
    %240 = vector.load %arg14[%c4_96, %c32_97] : memref<16x64xf32, #tpu.memory_space<vmem>>, vector<2x32xf32>
    tpu.vector_store %arg14[%c4_96, %c32_97], %239 {strides = array<i32>} : memref<16x64xf32, #tpu.memory_space<vmem>>, vector<2x32xf32>,
    %241 = arith.truncf %236 : vector<2x64xf32> to vector<2x64xbf16>
    %cst_98 = arith.constant dense<0.000000e+00> : vector<2x256xf32>
    %242 = tpu.matmul %241, %10, %cst_98 {dimension_numbers = #tpu.dot_dimension_numbers<[1], [0], [0], [1], [0, 0, 1, 1], [], []>} : vector<2x64xbf16>, vector<64x256xbf16>, vector<2x256xf32> -> vector<2x256xf32>
    %c12_99 = arith.constant 12 : index
    %c0_100 = arith.constant 0 : index
    %243 = vector.load %arg12[%c12_99, %c0_100] : memref<16x256xf32, #tpu.memory_space<vmem>>, vector<2x256xf32>
    %244 = arith.addf %242, %243 : vector<2x256xf32>
    %c2_101 = arith.constant 2 : index
    %c0_102 = arith.constant 0 : index
    %245 = vector.load %arg13[%c2_101, %c0_102] : memref<16x256xf32, #tpu.memory_space<vmem>>, vector<2x256xf32>
    %246 = arith.addf %244, %245 : vector<2x256xf32>
    %247 = vector.extract_strided_slice %246 {offsets = [0, 0], sizes = [2, 64], strides = [1, 1]} : vector<2x256xf32> to vector<2x64xf32>
    %cst_103 = arith.constant 0.000000e+00 : f32
    %248 = vector.broadcast %cst_103 : f32 to vector<2x64xf32>
    %249 = arith.subf %248, %247 : vector<2x64xf32>
    %250 = math.exp %249 : vector<2x64xf32>
    %cst_104 = arith.constant 1.000000e+00 : f32
    %251 = vector.broadcast %cst_104 : f32 to vector<2x64xf32>
    %252 = arith.addf %251, %250 : vector<2x64xf32>
    %253 = tpu.reciprocal %252 : vector<2x64xf32> -> vector<2x64xf32>
    %254 = vector.extract_strided_slice %246 {offsets = [0, 64], sizes = [2, 64], strides = [1, 1]} : vector<2x256xf32> to vector<2x64xf32>
    %cst_105 = arith.constant 0.000000e+00 : f32
    %255 = vector.broadcast %cst_105 : f32 to vector<2x64xf32>
    %256 = arith.subf %255, %254 : vector<2x64xf32>
    %257 = math.exp %256 : vector<2x64xf32>
    %cst_106 = arith.constant 1.000000e+00 : f32
    %258 = vector.broadcast %cst_106 : f32 to vector<2x64xf32>
    %259 = arith.addf %258, %257 : vector<2x64xf32>
    %260 = tpu.reciprocal %259 : vector<2x64xf32> -> vector<2x64xf32>
    %261 = vector.extract_strided_slice %246 {offsets = [0, 128], sizes = [2, 64], strides = [1, 1]} : vector<2x256xf32> to vector<2x64xf32>
    %262 = math.tanh %261 : vector<2x64xf32>
    %263 = vector.extract_strided_slice %246 {offsets = [0, 192], sizes = [2, 64], strides = [1, 1]} : vector<2x256xf32> to vector<2x64xf32>
    %cst_107 = arith.constant 0.000000e+00 : f32
    %264 = vector.broadcast %cst_107 : f32 to vector<2x64xf32>
    %265 = arith.subf %264, %263 : vector<2x64xf32>
    %266 = math.exp %265 : vector<2x64xf32>
    %cst_108 = arith.constant 1.000000e+00 : f32
    %267 = vector.broadcast %cst_108 : f32 to vector<2x64xf32>
    %268 = arith.addf %267, %266 : vector<2x64xf32>
    %269 = tpu.reciprocal %268 : vector<2x64xf32> -> vector<2x64xf32>
    %270 = arith.mulf %260, %234 : vector<2x64xf32>
    %271 = arith.mulf %253, %262 : vector<2x64xf32>
    %272 = arith.addf %270, %271 : vector<2x64xf32>
    %273 = math.tanh %272 : vector<2x64xf32>
    %274 = arith.mulf %269, %273 : vector<2x64xf32>
    %275 = vector.extract_strided_slice %274 {offsets = [0, 0], sizes = [2, 32], strides = [1, 1]} : vector<2x64xf32> to vector<2x32xf32>
    %c12_109 = arith.constant 12 : index
    %c0_110 = arith.constant 0 : index
    %276 = vector.load %arg14[%c12_109, %c0_110] : memref<16x64xf32, #tpu.memory_space<vmem>>, vector<2x32xf32>
    tpu.vector_store %arg14[%c12_109, %c0_110], %275 {strides = array<i32>} : memref<16x64xf32, #tpu.memory_space<vmem>>, vector<2x32xf32>,
    %277 = vector.extract_strided_slice %274 {offsets = [0, 32], sizes = [2, 32], strides = [1, 1]} : vector<2x64xf32> to vector<2x32xf32>
    %c2_111 = arith.constant 2 : index
    %c32_112 = arith.constant 32 : index
    %278 = vector.load %arg14[%c2_111, %c32_112] : memref<16x64xf32, #tpu.memory_space<vmem>>, vector<2x32xf32>
    tpu.vector_store %arg14[%c2_111, %c32_112], %277 {strides = array<i32>} : memref<16x64xf32, #tpu.memory_space<vmem>>, vector<2x32xf32>,
    %279 = arith.truncf %274 : vector<2x64xf32> to vector<2x64xbf16>
    %cst_113 = arith.constant dense<0.000000e+00> : vector<2x256xf32>
    %280 = tpu.matmul %279, %10, %cst_113 {dimension_numbers = #tpu.dot_dimension_numbers<[1], [0], [0], [1], [0, 0, 1, 1], [], []>} : vector<2x64xbf16>, vector<64x256xbf16>, vector<2x256xf32> -> vector<2x256xf32>
    %c14_114 = arith.constant 14 : index
    %c0_115 = arith.constant 0 : index
    %281 = vector.load %arg12[%c14_114, %c0_115] : memref<16x256xf32, #tpu.memory_space<vmem>>, vector<2x256xf32>
    %282 = arith.addf %280, %281 : vector<2x256xf32>
    %c0_116 = arith.constant 0 : index
    %c0_117 = arith.constant 0 : index
    %283 = vector.load %arg13[%c0_116, %c0_117] : memref<16x256xf32, #tpu.memory_space<vmem>>, vector<2x256xf32>
    %284 = arith.addf %282, %283 : vector<2x256xf32>
    %285 = vector.extract_strided_slice %284 {offsets = [0, 0], sizes = [2, 64], strides = [1, 1]} : vector<2x256xf32> to vector<2x64xf32>
    %cst_118 = arith.constant 0.000000e+00 : f32
    %286 = vector.broadcast %cst_118 : f32 to vector<2x64xf32>
    %287 = arith.subf %286, %285 : vector<2x64xf32>
    %288 = math.exp %287 : vector<2x64xf32>
    %cst_119 = arith.constant 1.000000e+00 : f32
    %289 = vector.broadcast %cst_119 : f32 to vector<2x64xf32>
    %290 = arith.addf %289, %288 : vector<2x64xf32>
    %291 = tpu.reciprocal %290 : vector<2x64xf32> -> vector<2x64xf32>
    %292 = vector.extract_strided_slice %284 {offsets = [0, 64], sizes = [2, 64], strides = [1, 1]} : vector<2x256xf32> to vector<2x64xf32>
    %cst_120 = arith.constant 0.000000e+00 : f32
    %293 = vector.broadcast %cst_120 : f32 to vector<2x64xf32>
    %294 = arith.subf %293, %292 : vector<2x64xf32>
    %295 = math.exp %294 : vector<2x64xf32>
    %cst_121 = arith.constant 1.000000e+00 : f32
    %296 = vector.broadcast %cst_121 : f32 to vector<2x64xf32>
    %297 = arith.addf %296, %295 : vector<2x64xf32>
    %298 = tpu.reciprocal %297 : vector<2x64xf32> -> vector<2x64xf32>
    %299 = vector.extract_strided_slice %284 {offsets = [0, 128], sizes = [2, 64], strides = [1, 1]} : vector<2x256xf32> to vector<2x64xf32>
    %300 = math.tanh %299 : vector<2x64xf32>
    %301 = vector.extract_strided_slice %284 {offsets = [0, 192], sizes = [2, 64], strides = [1, 1]} : vector<2x256xf32> to vector<2x64xf32>
    %cst_122 = arith.constant 0.000000e+00 : f32
    %302 = vector.broadcast %cst_122 : f32 to vector<2x64xf32>
    %303 = arith.subf %302, %301 : vector<2x64xf32>
    %304 = math.exp %303 : vector<2x64xf32>
    %cst_123 = arith.constant 1.000000e+00 : f32
    %305 = vector.broadcast %cst_123 : f32 to vector<2x64xf32>
    %306 = arith.addf %305, %304 : vector<2x64xf32>
    %307 = tpu.reciprocal %306 : vector<2x64xf32> -> vector<2x64xf32>
    %308 = arith.mulf %298, %272 : vector<2x64xf32>
    %309 = arith.mulf %291, %300 : vector<2x64xf32>
    %310 = arith.addf %308, %309 : vector<2x64xf32>
    %311 = math.tanh %310 : vector<2x64xf32>
    %312 = arith.mulf %307, %311 : vector<2x64xf32>
    %313 = vector.extract_strided_slice %312 {offsets = [0, 0], sizes = [2, 32], strides = [1, 1]} : vector<2x64xf32> to vector<2x32xf32>
    %c14_124 = arith.constant 14 : index
    %c0_125 = arith.constant 0 : index
    %314 = vector.load %arg14[%c14_124, %c0_125] : memref<16x64xf32, #tpu.memory_space<vmem>>, vector<2x32xf32>
    tpu.vector_store %arg14[%c14_124, %c0_125], %313 {strides = array<i32>} : memref<16x64xf32, #tpu.memory_space<vmem>>, vector<2x32xf32>,
    %315 = vector.extract_strided_slice %312 {offsets = [0, 32], sizes = [2, 32], strides = [1, 1]} : vector<2x64xf32> to vector<2x32xf32>
    %c0_126 = arith.constant 0 : index
    %c32_127 = arith.constant 32 : index
    %316 = vector.load %arg14[%c0_126, %c32_127] : memref<16x64xf32, #tpu.memory_space<vmem>>, vector<2x32xf32>
    tpu.vector_store %arg14[%c0_126, %c32_127], %315 {strides = array<i32>} : memref<16x64xf32, #tpu.memory_space<vmem>>, vector<2x32xf32>,
    %c0_128 = arith.constant 0 : index
    %c0_129 = arith.constant 0 : index
    %317 = vector.load %arg14[%c0_128, %c0_129] : memref<16x64xf32, #tpu.memory_space<vmem>>, vector<16x64xf32>
    %318 = arith.truncf %317 : vector<16x64xf32> to vector<16x64xbf16>
    %c0_130 = arith.constant 0 : index
    %c0_131 = arith.constant 0 : index
    %319 = vector.load %arg5[%c0_130, %c0_131] : memref<64x256xbf16, #tpu.memory_space<vmem>>, vector<64x256xbf16>
    %cst_132 = arith.constant dense<0.000000e+00> : vector<16x256xf32>
    %320 = tpu.matmul %318, %319, %cst_132 {dimension_numbers = #tpu.dot_dimension_numbers<[1], [0], [0], [1], [0, 0, 1, 1], [], []>} : vector<16x64xbf16>, vector<64x256xbf16>, vector<16x256xf32> -> vector<16x256xf32>
    %c0_133 = arith.constant 0 : index
    %c0_134 = arith.constant 0 : index
    %321 = vector.load %arg8[%c0_133, %c0_134] : memref<1x256xf32, #tpu.memory_space<vmem>>, vector<1x256xf32>
    %322 = vector.broadcast %321 : vector<1x256xf32> to vector<16x256xf32>
    %323 = arith.addf %320, %322 : vector<16x256xf32>
    %c0_135 = arith.constant 0 : index
    %c0_136 = arith.constant 0 : index
    %324 = vector.load %arg12[%c0_135, %c0_136] : memref<16x256xf32, #tpu.memory_space<vmem>>, vector<16x256xf32>
    tpu.vector_store %arg12[%c0_135, %c0_136], %323 {strides = array<i32>} : memref<16x256xf32, #tpu.memory_space<vmem>>, vector<16x256xf32>,
    %c0_137 = arith.constant 0 : index
    %c0_138 = arith.constant 0 : index
    %325 = vector.load %arg6[%c0_137, %c0_138] : memref<64x256xbf16, #tpu.memory_space<vmem>>, vector<64x256xbf16>
    %cst_139 = arith.constant dense<0.000000e+00> : vector<16x256xf32>
    %326 = tpu.matmul %318, %325, %cst_139 {dimension_numbers = #tpu.dot_dimension_numbers<[1], [0], [0], [1], [0, 0, 1, 1], [], []>} : vector<16x64xbf16>, vector<64x256xbf16>, vector<16x256xf32> -> vector<16x256xf32>
    %c0_140 = arith.constant 0 : index
    %c0_141 = arith.constant 0 : index
    %327 = vector.load %arg13[%c0_140, %c0_141] : memref<16x256xf32, #tpu.memory_space<vmem>>, vector<16x256xf32>
    tpu.vector_store %arg13[%c0_140, %c0_141], %326 {strides = array<i32>} : memref<16x256xf32, #tpu.memory_space<vmem>>, vector<16x256xf32>,
    %c0_142 = arith.constant 0 : index
    %c0_143 = arith.constant 0 : index
    %328 = vector.load %arg7[%c0_142, %c0_143] : memref<64x256xbf16, #tpu.memory_space<vmem>>, vector<64x256xbf16>
    %cst_144 = arith.constant 0.000000e+00 : f32
    %329 = vector.broadcast %cst_144 : f32 to vector<2x64xf32>
    %cst_145 = arith.constant 0.000000e+00 : f32
    %330 = vector.broadcast %cst_145 : f32 to vector<2x64xf32>
    %331 = arith.truncf %329 : vector<2x64xf32> to vector<2x64xbf16>
    %cst_146 = arith.constant dense<0.000000e+00> : vector<2x256xf32>
    %332 = tpu.matmul %331, %328, %cst_146 {dimension_numbers = #tpu.dot_dimension_numbers<[1], [0], [0], [1], [0, 0, 1, 1], [], []>} : vector<2x64xbf16>, vector<64x256xbf16>, vector<2x256xf32> -> vector<2x256xf32>
    %c0_147 = arith.constant 0 : index
    %c0_148 = arith.constant 0 : index
    %333 = vector.load %arg12[%c0_147, %c0_148] : memref<16x256xf32, #tpu.memory_space<vmem>>, vector<2x256xf32>
    %334 = arith.addf %332, %333 : vector<2x256xf32>
    %c14_149 = arith.constant 14 : index
    %c0_150 = arith.constant 0 : index
    %335 = vector.load %arg13[%c14_149, %c0_150] : memref<16x256xf32, #tpu.memory_space<vmem>>, vector<2x256xf32>
    %336 = arith.addf %334, %335 : vector<2x256xf32>
    %337 = vector.extract_strided_slice %336 {offsets = [0, 0], sizes = [2, 64], strides = [1, 1]} : vector<2x256xf32> to vector<2x64xf32>
    %cst_151 = arith.constant 0.000000e+00 : f32
    %338 = vector.broadcast %cst_151 : f32 to vector<2x64xf32>
    %339 = arith.subf %338, %337 : vector<2x64xf32>
    %340 = math.exp %339 : vector<2x64xf32>
    %cst_152 = arith.constant 1.000000e+00 : f32
    %341 = vector.broadcast %cst_152 : f32 to vector<2x64xf32>
    %342 = arith.addf %341, %340 : vector<2x64xf32>
    %343 = tpu.reciprocal %342 : vector<2x64xf32> -> vector<2x64xf32>
    %344 = vector.extract_strided_slice %336 {offsets = [0, 64], sizes = [2, 64], strides = [1, 1]} : vector<2x256xf32> to vector<2x64xf32>
    %cst_153 = arith.constant 0.000000e+00 : f32
    %345 = vector.broadcast %cst_153 : f32 to vector<2x64xf32>
    %346 = arith.subf %345, %344 : vector<2x64xf32>
    %347 = math.exp %346 : vector<2x64xf32>
    %cst_154 = arith.constant 1.000000e+00 : f32
    %348 = vector.broadcast %cst_154 : f32 to vector<2x64xf32>
    %349 = arith.addf %348, %347 : vector<2x64xf32>
    %350 = tpu.reciprocal %349 : vector<2x64xf32> -> vector<2x64xf32>
    %351 = vector.extract_strided_slice %336 {offsets = [0, 128], sizes = [2, 64], strides = [1, 1]} : vector<2x256xf32> to vector<2x64xf32>
    %352 = math.tanh %351 : vector<2x64xf32>
    %353 = vector.extract_strided_slice %336 {offsets = [0, 192], sizes = [2, 64], strides = [1, 1]} : vector<2x256xf32> to vector<2x64xf32>
    %cst_155 = arith.constant 0.000000e+00 : f32
    %354 = vector.broadcast %cst_155 : f32 to vector<2x64xf32>
    %355 = arith.subf %354, %353 : vector<2x64xf32>
    %356 = math.exp %355 : vector<2x64xf32>
    %cst_156 = arith.constant 1.000000e+00 : f32
    %357 = vector.broadcast %cst_156 : f32 to vector<2x64xf32>
    %358 = arith.addf %357, %356 : vector<2x64xf32>
    %359 = tpu.reciprocal %358 : vector<2x64xf32> -> vector<2x64xf32>
    %360 = arith.mulf %350, %330 : vector<2x64xf32>
    %361 = arith.mulf %343, %352 : vector<2x64xf32>
    %362 = arith.addf %360, %361 : vector<2x64xf32>
    %363 = math.tanh %362 : vector<2x64xf32>
    %364 = arith.mulf %359, %363 : vector<2x64xf32>
    %365 = vector.extract_strided_slice %364 {offsets = [0, 0], sizes = [2, 32], strides = [1, 1]} : vector<2x64xf32> to vector<2x32xf32>
    %c0_157 = arith.constant 0 : index
    %c0_158 = arith.constant 0 : index
    %366 = vector.load %arg15[%c0_157, %c0_158] : memref<16x64xf32, #tpu.memory_space<vmem>>, vector<2x32xf32>
    tpu.vector_store %arg15[%c0_157, %c0_158], %365 {strides = array<i32>} : memref<16x64xf32, #tpu.memory_space<vmem>>, vector<2x32xf32>,
    %367 = vector.extract_strided_slice %364 {offsets = [0, 32], sizes = [2, 32], strides = [1, 1]} : vector<2x64xf32> to vector<2x32xf32>
    %c14_159 = arith.constant 14 : index
    %c32_160 = arith.constant 32 : index
    %368 = vector.load %arg15[%c14_159, %c32_160] : memref<16x64xf32, #tpu.memory_space<vmem>>, vector<2x32xf32>
    tpu.vector_store %arg15[%c14_159, %c32_160], %367 {strides = array<i32>} : memref<16x64xf32, #tpu.memory_space<vmem>>, vector<2x32xf32>,
    %369 = arith.truncf %364 : vector<2x64xf32> to vector<2x64xbf16>
    %cst_161 = arith.constant dense<0.000000e+00> : vector<2x256xf32>
    %370 = tpu.matmul %369, %328, %cst_161 {dimension_numbers = #tpu.dot_dimension_numbers<[1], [0], [0], [1], [0, 0, 1, 1], [], []>} : vector<2x64xbf16>, vector<64x256xbf16>, vector<2x256xf32> -> vector<2x256xf32>
    %c2_162 = arith.constant 2 : index
    %c0_163 = arith.constant 0 : index
    %371 = vector.load %arg12[%c2_162, %c0_163] : memref<16x256xf32, #tpu.memory_space<vmem>>, vector<2x256xf32>
    %372 = arith.addf %370, %371 : vector<2x256xf32>
    %c12_164 = arith.constant 12 : index
    %c0_165 = arith.constant 0 : index
    %373 = vector.load %arg13[%c12_164, %c0_165] : memref<16x256xf32, #tpu.memory_space<vmem>>, vector<2x256xf32>
    %374 = arith.addf %372, %373 : vector<2x256xf32>
    %375 = vector.extract_strided_slice %374 {offsets = [0, 0], sizes = [2, 64], strides = [1, 1]} : vector<2x256xf32> to vector<2x64xf32>
    %cst_166 = arith.constant 0.000000e+00 : f32
    %376 = vector.broadcast %cst_166 : f32 to vector<2x64xf32>
    %377 = arith.subf %376, %375 : vector<2x64xf32>
    %378 = math.exp %377 : vector<2x64xf32>
    %cst_167 = arith.constant 1.000000e+00 : f32
    %379 = vector.broadcast %cst_167 : f32 to vector<2x64xf32>
    %380 = arith.addf %379, %378 : vector<2x64xf32>
    %381 = tpu.reciprocal %380 : vector<2x64xf32> -> vector<2x64xf32>
    %382 = vector.extract_strided_slice %374 {offsets = [0, 64], sizes = [2, 64], strides = [1, 1]} : vector<2x256xf32> to vector<2x64xf32>
    %cst_168 = arith.constant 0.000000e+00 : f32
    %383 = vector.broadcast %cst_168 : f32 to vector<2x64xf32>
    %384 = arith.subf %383, %382 : vector<2x64xf32>
    %385 = math.exp %384 : vector<2x64xf32>
    %cst_169 = arith.constant 1.000000e+00 : f32
    %386 = vector.broadcast %cst_169 : f32 to vector<2x64xf32>
    %387 = arith.addf %386, %385 : vector<2x64xf32>
    %388 = tpu.reciprocal %387 : vector<2x64xf32> -> vector<2x64xf32>
    %389 = vector.extract_strided_slice %374 {offsets = [0, 128], sizes = [2, 64], strides = [1, 1]} : vector<2x256xf32> to vector<2x64xf32>
    %390 = math.tanh %389 : vector<2x64xf32>
    %391 = vector.extract_strided_slice %374 {offsets = [0, 192], sizes = [2, 64], strides = [1, 1]} : vector<2x256xf32> to vector<2x64xf32>
    %cst_170 = arith.constant 0.000000e+00 : f32
    %392 = vector.broadcast %cst_170 : f32 to vector<2x64xf32>
    %393 = arith.subf %392, %391 : vector<2x64xf32>
    %394 = math.exp %393 : vector<2x64xf32>
    %cst_171 = arith.constant 1.000000e+00 : f32
    %395 = vector.broadcast %cst_171 : f32 to vector<2x64xf32>
    %396 = arith.addf %395, %394 : vector<2x64xf32>
    %397 = tpu.reciprocal %396 : vector<2x64xf32> -> vector<2x64xf32>
    %398 = arith.mulf %388, %362 : vector<2x64xf32>
    %399 = arith.mulf %381, %390 : vector<2x64xf32>
    %400 = arith.addf %398, %399 : vector<2x64xf32>
    %401 = math.tanh %400 : vector<2x64xf32>
    %402 = arith.mulf %397, %401 : vector<2x64xf32>
    %403 = vector.extract_strided_slice %402 {offsets = [0, 0], sizes = [2, 32], strides = [1, 1]} : vector<2x64xf32> to vector<2x32xf32>
    %c2_172 = arith.constant 2 : index
    %c0_173 = arith.constant 0 : index
    %404 = vector.load %arg15[%c2_172, %c0_173] : memref<16x64xf32, #tpu.memory_space<vmem>>, vector<2x32xf32>
    tpu.vector_store %arg15[%c2_172, %c0_173], %403 {strides = array<i32>} : memref<16x64xf32, #tpu.memory_space<vmem>>, vector<2x32xf32>,
    %405 = vector.extract_strided_slice %402 {offsets = [0, 32], sizes = [2, 32], strides = [1, 1]} : vector<2x64xf32> to vector<2x32xf32>
    %c12_174 = arith.constant 12 : index
    %c32_175 = arith.constant 32 : index
    %406 = vector.load %arg15[%c12_174, %c32_175] : memref<16x64xf32, #tpu.memory_space<vmem>>, vector<2x32xf32>
    tpu.vector_store %arg15[%c12_174, %c32_175], %405 {strides = array<i32>} : memref<16x64xf32, #tpu.memory_space<vmem>>, vector<2x32xf32>,
    %407 = arith.truncf %402 : vector<2x64xf32> to vector<2x64xbf16>
    %cst_176 = arith.constant dense<0.000000e+00> : vector<2x256xf32>
    %408 = tpu.matmul %407, %328, %cst_176 {dimension_numbers = #tpu.dot_dimension_numbers<[1], [0], [0], [1], [0, 0, 1, 1], [], []>} : vector<2x64xbf16>, vector<64x256xbf16>, vector<2x256xf32> -> vector<2x256xf32>
    %c4_177 = arith.constant 4 : index
    %c0_178 = arith.constant 0 : index
    %409 = vector.load %arg12[%c4_177, %c0_178] : memref<16x256xf32, #tpu.memory_space<vmem>>, vector<2x256xf32>
    %410 = arith.addf %408, %409 : vector<2x256xf32>
    %c10_179 = arith.constant 10 : index
    %c0_180 = arith.constant 0 : index
    %411 = vector.load %arg13[%c10_179, %c0_180] : memref<16x256xf32, #tpu.memory_space<vmem>>, vector<2x256xf32>
    %412 = arith.addf %410, %411 : vector<2x256xf32>
    %413 = vector.extract_strided_slice %412 {offsets = [0, 0], sizes = [2, 64], strides = [1, 1]} : vector<2x256xf32> to vector<2x64xf32>
    %cst_181 = arith.constant 0.000000e+00 : f32
    %414 = vector.broadcast %cst_181 : f32 to vector<2x64xf32>
    %415 = arith.subf %414, %413 : vector<2x64xf32>
    %416 = math.exp %415 : vector<2x64xf32>
    %cst_182 = arith.constant 1.000000e+00 : f32
    %417 = vector.broadcast %cst_182 : f32 to vector<2x64xf32>
    %418 = arith.addf %417, %416 : vector<2x64xf32>
    %419 = tpu.reciprocal %418 : vector<2x64xf32> -> vector<2x64xf32>
    %420 = vector.extract_strided_slice %412 {offsets = [0, 64], sizes = [2, 64], strides = [1, 1]} : vector<2x256xf32> to vector<2x64xf32>
    %cst_183 = arith.constant 0.000000e+00 : f32
    %421 = vector.broadcast %cst_183 : f32 to vector<2x64xf32>
    %422 = arith.subf %421, %420 : vector<2x64xf32>
    %423 = math.exp %422 : vector<2x64xf32>
    %cst_184 = arith.constant 1.000000e+00 : f32
    %424 = vector.broadcast %cst_184 : f32 to vector<2x64xf32>
    %425 = arith.addf %424, %423 : vector<2x64xf32>
    %426 = tpu.reciprocal %425 : vector<2x64xf32> -> vector<2x64xf32>
    %427 = vector.extract_strided_slice %412 {offsets = [0, 128], sizes = [2, 64], strides = [1, 1]} : vector<2x256xf32> to vector<2x64xf32>
    %428 = math.tanh %427 : vector<2x64xf32>
    %429 = vector.extract_strided_slice %412 {offsets = [0, 192], sizes = [2, 64], strides = [1, 1]} : vector<2x256xf32> to vector<2x64xf32>
    %cst_185 = arith.constant 0.000000e+00 : f32
    %430 = vector.broadcast %cst_185 : f32 to vector<2x64xf32>
    %431 = arith.subf %430, %429 : vector<2x64xf32>
    %432 = math.exp %431 : vector<2x64xf32>
    %cst_186 = arith.constant 1.000000e+00 : f32
    %433 = vector.broadcast %cst_186 : f32 to vector<2x64xf32>
    %434 = arith.addf %433, %432 : vector<2x64xf32>
    %435 = tpu.reciprocal %434 : vector<2x64xf32> -> vector<2x64xf32>
    %436 = arith.mulf %426, %400 : vector<2x64xf32>
    %437 = arith.mulf %419, %428 : vector<2x64xf32>
    %438 = arith.addf %436, %437 : vector<2x64xf32>
    %439 = math.tanh %438 : vector<2x64xf32>
    %440 = arith.mulf %435, %439 : vector<2x64xf32>
    %441 = vector.extract_strided_slice %440 {offsets = [0, 0], sizes = [2, 32], strides = [1, 1]} : vector<2x64xf32> to vector<2x32xf32>
    %c4_187 = arith.constant 4 : index
    %c0_188 = arith.constant 0 : index
    %442 = vector.load %arg15[%c4_187, %c0_188] : memref<16x64xf32, #tpu.memory_space<vmem>>, vector<2x32xf32>
    tpu.vector_store %arg15[%c4_187, %c0_188], %441 {strides = array<i32>} : memref<16x64xf32, #tpu.memory_space<vmem>>, vector<2x32xf32>,
    %443 = vector.extract_strided_slice %440 {offsets = [0, 32], sizes = [2, 32], strides = [1, 1]} : vector<2x64xf32> to vector<2x32xf32>
    %c10_189 = arith.constant 10 : index
    %c32_190 = arith.constant 32 : index
    %444 = vector.load %arg15[%c10_189, %c32_190] : memref<16x64xf32, #tpu.memory_space<vmem>>, vector<2x32xf32>
    tpu.vector_store %arg15[%c10_189, %c32_190], %443 {strides = array<i32>} : memref<16x64xf32, #tpu.memory_space<vmem>>, vector<2x32xf32>,
    %445 = arith.truncf %440 : vector<2x64xf32> to vector<2x64xbf16>
    %cst_191 = arith.constant dense<0.000000e+00> : vector<2x256xf32>
    %446 = tpu.matmul %445, %328, %cst_191 {dimension_numbers = #tpu.dot_dimension_numbers<[1], [0], [0], [1], [0, 0, 1, 1], [], []>} : vector<2x64xbf16>, vector<64x256xbf16>, vector<2x256xf32> -> vector<2x256xf32>
    %c6_192 = arith.constant 6 : index
    %c0_193 = arith.constant 0 : index
    %447 = vector.load %arg12[%c6_192, %c0_193] : memref<16x256xf32, #tpu.memory_space<vmem>>, vector<2x256xf32>
    %448 = arith.addf %446, %447 : vector<2x256xf32>
    %c8_194 = arith.constant 8 : index
    %c0_195 = arith.constant 0 : index
    %449 = vector.load %arg13[%c8_194, %c0_195] : memref<16x256xf32, #tpu.memory_space<vmem>>, vector<2x256xf32>
    %450 = arith.addf %448, %449 : vector<2x256xf32>
    %451 = vector.extract_strided_slice %450 {offsets = [0, 0], sizes = [2, 64], strides = [1, 1]} : vector<2x256xf32> to vector<2x64xf32>
    %cst_196 = arith.constant 0.000000e+00 : f32
    %452 = vector.broadcast %cst_196 : f32 to vector<2x64xf32>
    %453 = arith.subf %452, %451 : vector<2x64xf32>
    %454 = math.exp %453 : vector<2x64xf32>
    %cst_197 = arith.constant 1.000000e+00 : f32
    %455 = vector.broadcast %cst_197 : f32 to vector<2x64xf32>
    %456 = arith.addf %455, %454 : vector<2x64xf32>
    %457 = tpu.reciprocal %456 : vector<2x64xf32> -> vector<2x64xf32>
    %458 = vector.extract_strided_slice %450 {offsets = [0, 64], sizes = [2, 64], strides = [1, 1]} : vector<2x256xf32> to vector<2x64xf32>
    %cst_198 = arith.constant 0.000000e+00 : f32
    %459 = vector.broadcast %cst_198 : f32 to vector<2x64xf32>
    %460 = arith.subf %459, %458 : vector<2x64xf32>
    %461 = math.exp %460 : vector<2x64xf32>
    %cst_199 = arith.constant 1.000000e+00 : f32
    %462 = vector.broadcast %cst_199 : f32 to vector<2x64xf32>
    %463 = arith.addf %462, %461 : vector<2x64xf32>
    %464 = tpu.reciprocal %463 : vector<2x64xf32> -> vector<2x64xf32>
    %465 = vector.extract_strided_slice %450 {offsets = [0, 128], sizes = [2, 64], strides = [1, 1]} : vector<2x256xf32> to vector<2x64xf32>
    %466 = math.tanh %465 : vector<2x64xf32>
    %467 = vector.extract_strided_slice %450 {offsets = [0, 192], sizes = [2, 64], strides = [1, 1]} : vector<2x256xf32> to vector<2x64xf32>
    %cst_200 = arith.constant 0.000000e+00 : f32
    %468 = vector.broadcast %cst_200 : f32 to vector<2x64xf32>
    %469 = arith.subf %468, %467 : vector<2x64xf32>
    %470 = math.exp %469 : vector<2x64xf32>
    %cst_201 = arith.constant 1.000000e+00 : f32
    %471 = vector.broadcast %cst_201 : f32 to vector<2x64xf32>
    %472 = arith.addf %471, %470 : vector<2x64xf32>
    %473 = tpu.reciprocal %472 : vector<2x64xf32> -> vector<2x64xf32>
    %474 = arith.mulf %464, %438 : vector<2x64xf32>
    %475 = arith.mulf %457, %466 : vector<2x64xf32>
    %476 = arith.addf %474, %475 : vector<2x64xf32>
    %477 = math.tanh %476 : vector<2x64xf32>
    %478 = arith.mulf %473, %477 : vector<2x64xf32>
    %479 = vector.extract_strided_slice %478 {offsets = [0, 0], sizes = [2, 32], strides = [1, 1]} : vector<2x64xf32> to vector<2x32xf32>
    %c6_202 = arith.constant 6 : index
    %c0_203 = arith.constant 0 : index
    %480 = vector.load %arg15[%c6_202, %c0_203] : memref<16x64xf32, #tpu.memory_space<vmem>>, vector<2x32xf32>
    tpu.vector_store %arg15[%c6_202, %c0_203], %479 {strides = array<i32>} : memref<16x64xf32, #tpu.memory_space<vmem>>, vector<2x32xf32>,
    %481 = vector.extract_strided_slice %478 {offsets = [0, 32], sizes = [2, 32], strides = [1, 1]} : vector<2x64xf32> to vector<2x32xf32>
    %c8_204 = arith.constant 8 : index
    %c32_205 = arith.constant 32 : index
    %482 = vector.load %arg15[%c8_204, %c32_205] : memref<16x64xf32, #tpu.memory_space<vmem>>, vector<2x32xf32>
    tpu.vector_store %arg15[%c8_204, %c32_205], %481 {strides = array<i32>} : memref<16x64xf32, #tpu.memory_space<vmem>>, vector<2x32xf32>,
    %483 = arith.truncf %478 : vector<2x64xf32> to vector<2x64xbf16>
    %cst_206 = arith.constant dense<0.000000e+00> : vector<2x256xf32>
    %484 = tpu.matmul %483, %328, %cst_206 {dimension_numbers = #tpu.dot_dimension_numbers<[1], [0], [0], [1], [0, 0, 1, 1], [], []>} : vector<2x64xbf16>, vector<64x256xbf16>, vector<2x256xf32> -> vector<2x256xf32>
    %c8_207 = arith.constant 8 : index
    %c0_208 = arith.constant 0 : index
    %485 = vector.load %arg12[%c8_207, %c0_208] : memref<16x256xf32, #tpu.memory_space<vmem>>, vector<2x256xf32>
    %486 = arith.addf %484, %485 : vector<2x256xf32>
    %c6_209 = arith.constant 6 : index
    %c0_210 = arith.constant 0 : index
    %487 = vector.load %arg13[%c6_209, %c0_210] : memref<16x256xf32, #tpu.memory_space<vmem>>, vector<2x256xf32>
    %488 = arith.addf %486, %487 : vector<2x256xf32>
    %489 = vector.extract_strided_slice %488 {offsets = [0, 0], sizes = [2, 64], strides = [1, 1]} : vector<2x256xf32> to vector<2x64xf32>
    %cst_211 = arith.constant 0.000000e+00 : f32
    %490 = vector.broadcast %cst_211 : f32 to vector<2x64xf32>
    %491 = arith.subf %490, %489 : vector<2x64xf32>
    %492 = math.exp %491 : vector<2x64xf32>
    %cst_212 = arith.constant 1.000000e+00 : f32
    %493 = vector.broadcast %cst_212 : f32 to vector<2x64xf32>
    %494 = arith.addf %493, %492 : vector<2x64xf32>
    %495 = tpu.reciprocal %494 : vector<2x64xf32> -> vector<2x64xf32>
    %496 = vector.extract_strided_slice %488 {offsets = [0, 64], sizes = [2, 64], strides = [1, 1]} : vector<2x256xf32> to vector<2x64xf32>
    %cst_213 = arith.constant 0.000000e+00 : f32
    %497 = vector.broadcast %cst_213 : f32 to vector<2x64xf32>
    %498 = arith.subf %497, %496 : vector<2x64xf32>
    %499 = math.exp %498 : vector<2x64xf32>
    %cst_214 = arith.constant 1.000000e+00 : f32
    %500 = vector.broadcast %cst_214 : f32 to vector<2x64xf32>
    %501 = arith.addf %500, %499 : vector<2x64xf32>
    %502 = tpu.reciprocal %501 : vector<2x64xf32> -> vector<2x64xf32>
    %503 = vector.extract_strided_slice %488 {offsets = [0, 128], sizes = [2, 64], strides = [1, 1]} : vector<2x256xf32> to vector<2x64xf32>
    %504 = math.tanh %503 : vector<2x64xf32>
    %505 = vector.extract_strided_slice %488 {offsets = [0, 192], sizes = [2, 64], strides = [1, 1]} : vector<2x256xf32> to vector<2x64xf32>
    %cst_215 = arith.constant 0.000000e+00 : f32
    %506 = vector.broadcast %cst_215 : f32 to vector<2x64xf32>
    %507 = arith.subf %506, %505 : vector<2x64xf32>
    %508 = math.exp %507 : vector<2x64xf32>
    %cst_216 = arith.constant 1.000000e+00 : f32
    %509 = vector.broadcast %cst_216 : f32 to vector<2x64xf32>
    %510 = arith.addf %509, %508 : vector<2x64xf32>
    %511 = tpu.reciprocal %510 : vector<2x64xf32> -> vector<2x64xf32>
    %512 = arith.mulf %502, %476 : vector<2x64xf32>
    %513 = arith.mulf %495, %504 : vector<2x64xf32>
    %514 = arith.addf %512, %513 : vector<2x64xf32>
    %515 = math.tanh %514 : vector<2x64xf32>
    %516 = arith.mulf %511, %515 : vector<2x64xf32>
    %517 = vector.extract_strided_slice %516 {offsets = [0, 0], sizes = [2, 32], strides = [1, 1]} : vector<2x64xf32> to vector<2x32xf32>
    %c8_217 = arith.constant 8 : index
    %c0_218 = arith.constant 0 : index
    %518 = vector.load %arg15[%c8_217, %c0_218] : memref<16x64xf32, #tpu.memory_space<vmem>>, vector<2x32xf32>
    tpu.vector_store %arg15[%c8_217, %c0_218], %517 {strides = array<i32>} : memref<16x64xf32, #tpu.memory_space<vmem>>, vector<2x32xf32>,
    %519 = vector.extract_strided_slice %516 {offsets = [0, 32], sizes = [2, 32], strides = [1, 1]} : vector<2x64xf32> to vector<2x32xf32>
    %c6_219 = arith.constant 6 : index
    %c32_220 = arith.constant 32 : index
    %520 = vector.load %arg15[%c6_219, %c32_220] : memref<16x64xf32, #tpu.memory_space<vmem>>, vector<2x32xf32>
    tpu.vector_store %arg15[%c6_219, %c32_220], %519 {strides = array<i32>} : memref<16x64xf32, #tpu.memory_space<vmem>>, vector<2x32xf32>,
    %521 = arith.truncf %516 : vector<2x64xf32> to vector<2x64xbf16>
    %cst_221 = arith.constant dense<0.000000e+00> : vector<2x256xf32>
    %522 = tpu.matmul %521, %328, %cst_221 {dimension_numbers = #tpu.dot_dimension_numbers<[1], [0], [0], [1], [0, 0, 1, 1], [], []>} : vector<2x64xbf16>, vector<64x256xbf16>, vector<2x256xf32> -> vector<2x256xf32>
    %c10_222 = arith.constant 10 : index
    %c0_223 = arith.constant 0 : index
    %523 = vector.load %arg12[%c10_222, %c0_223] : memref<16x256xf32, #tpu.memory_space<vmem>>, vector<2x256xf32>
    %524 = arith.addf %522, %523 : vector<2x256xf32>
    %c4_224 = arith.constant 4 : index
    %c0_225 = arith.constant 0 : index
    %525 = vector.load %arg13[%c4_224, %c0_225] : memref<16x256xf32, #tpu.memory_space<vmem>>, vector<2x256xf32>
    %526 = arith.addf %524, %525 : vector<2x256xf32>
    %527 = vector.extract_strided_slice %526 {offsets = [0, 0], sizes = [2, 64], strides = [1, 1]} : vector<2x256xf32> to vector<2x64xf32>
    %cst_226 = arith.constant 0.000000e+00 : f32
    %528 = vector.broadcast %cst_226 : f32 to vector<2x64xf32>
    %529 = arith.subf %528, %527 : vector<2x64xf32>
    %530 = math.exp %529 : vector<2x64xf32>
    %cst_227 = arith.constant 1.000000e+00 : f32
    %531 = vector.broadcast %cst_227 : f32 to vector<2x64xf32>
    %532 = arith.addf %531, %530 : vector<2x64xf32>
    %533 = tpu.reciprocal %532 : vector<2x64xf32> -> vector<2x64xf32>
    %534 = vector.extract_strided_slice %526 {offsets = [0, 64], sizes = [2, 64], strides = [1, 1]} : vector<2x256xf32> to vector<2x64xf32>
    %cst_228 = arith.constant 0.000000e+00 : f32
    %535 = vector.broadcast %cst_228 : f32 to vector<2x64xf32>
    %536 = arith.subf %535, %534 : vector<2x64xf32>
    %537 = math.exp %536 : vector<2x64xf32>
    %cst_229 = arith.constant 1.000000e+00 : f32
    %538 = vector.broadcast %cst_229 : f32 to vector<2x64xf32>
    %539 = arith.addf %538, %537 : vector<2x64xf32>
    %540 = tpu.reciprocal %539 : vector<2x64xf32> -> vector<2x64xf32>
    %541 = vector.extract_strided_slice %526 {offsets = [0, 128], sizes = [2, 64], strides = [1, 1]} : vector<2x256xf32> to vector<2x64xf32>
    %542 = math.tanh %541 : vector<2x64xf32>
    %543 = vector.extract_strided_slice %526 {offsets = [0, 192], sizes = [2, 64], strides = [1, 1]} : vector<2x256xf32> to vector<2x64xf32>
    %cst_230 = arith.constant 0.000000e+00 : f32
    %544 = vector.broadcast %cst_230 : f32 to vector<2x64xf32>
    %545 = arith.subf %544, %543 : vector<2x64xf32>
    %546 = math.exp %545 : vector<2x64xf32>
    %cst_231 = arith.constant 1.000000e+00 : f32
    %547 = vector.broadcast %cst_231 : f32 to vector<2x64xf32>
    %548 = arith.addf %547, %546 : vector<2x64xf32>
    %549 = tpu.reciprocal %548 : vector<2x64xf32> -> vector<2x64xf32>
    %550 = arith.mulf %540, %514 : vector<2x64xf32>
    %551 = arith.mulf %533, %542 : vector<2x64xf32>
    %552 = arith.addf %550, %551 : vector<2x64xf32>
    %553 = math.tanh %552 : vector<2x64xf32>
    %554 = arith.mulf %549, %553 : vector<2x64xf32>
    %555 = vector.extract_strided_slice %554 {offsets = [0, 0], sizes = [2, 32], strides = [1, 1]} : vector<2x64xf32> to vector<2x32xf32>
    %c10_232 = arith.constant 10 : index
    %c0_233 = arith.constant 0 : index
    %556 = vector.load %arg15[%c10_232, %c0_233] : memref<16x64xf32, #tpu.memory_space<vmem>>, vector<2x32xf32>
    tpu.vector_store %arg15[%c10_232, %c0_233], %555 {strides = array<i32>} : memref<16x64xf32, #tpu.memory_space<vmem>>, vector<2x32xf32>,
    %557 = vector.extract_strided_slice %554 {offsets = [0, 32], sizes = [2, 32], strides = [1, 1]} : vector<2x64xf32> to vector<2x32xf32>
    %c4_234 = arith.constant 4 : index
    %c32_235 = arith.constant 32 : index
    %558 = vector.load %arg15[%c4_234, %c32_235] : memref<16x64xf32, #tpu.memory_space<vmem>>, vector<2x32xf32>
    tpu.vector_store %arg15[%c4_234, %c32_235], %557 {strides = array<i32>} : memref<16x64xf32, #tpu.memory_space<vmem>>, vector<2x32xf32>,
    %559 = arith.truncf %554 : vector<2x64xf32> to vector<2x64xbf16>
    %cst_236 = arith.constant dense<0.000000e+00> : vector<2x256xf32>
    %560 = tpu.matmul %559, %328, %cst_236 {dimension_numbers = #tpu.dot_dimension_numbers<[1], [0], [0], [1], [0, 0, 1, 1], [], []>} : vector<2x64xbf16>, vector<64x256xbf16>, vector<2x256xf32> -> vector<2x256xf32>
    %c12_237 = arith.constant 12 : index
    %c0_238 = arith.constant 0 : index
    %561 = vector.load %arg12[%c12_237, %c0_238] : memref<16x256xf32, #tpu.memory_space<vmem>>, vector<2x256xf32>
    %562 = arith.addf %560, %561 : vector<2x256xf32>
    %c2_239 = arith.constant 2 : index
    %c0_240 = arith.constant 0 : index
    %563 = vector.load %arg13[%c2_239, %c0_240] : memref<16x256xf32, #tpu.memory_space<vmem>>, vector<2x256xf32>
    %564 = arith.addf %562, %563 : vector<2x256xf32>
    %565 = vector.extract_strided_slice %564 {offsets = [0, 0], sizes = [2, 64], strides = [1, 1]} : vector<2x256xf32> to vector<2x64xf32>
    %cst_241 = arith.constant 0.000000e+00 : f32
    %566 = vector.broadcast %cst_241 : f32 to vector<2x64xf32>
    %567 = arith.subf %566, %565 : vector<2x64xf32>
    %568 = math.exp %567 : vector<2x64xf32>
    %cst_242 = arith.constant 1.000000e+00 : f32
    %569 = vector.broadcast %cst_242 : f32 to vector<2x64xf32>
    %570 = arith.addf %569, %568 : vector<2x64xf32>
    %571 = tpu.reciprocal %570 : vector<2x64xf32> -> vector<2x64xf32>
    %572 = vector.extract_strided_slice %564 {offsets = [0, 64], sizes = [2, 64], strides = [1, 1]} : vector<2x256xf32> to vector<2x64xf32>
    %cst_243 = arith.constant 0.000000e+00 : f32
    %573 = vector.broadcast %cst_243 : f32 to vector<2x64xf32>
    %574 = arith.subf %573, %572 : vector<2x64xf32>
    %575 = math.exp %574 : vector<2x64xf32>
    %cst_244 = arith.constant 1.000000e+00 : f32
    %576 = vector.broadcast %cst_244 : f32 to vector<2x64xf32>
    %577 = arith.addf %576, %575 : vector<2x64xf32>
    %578 = tpu.reciprocal %577 : vector<2x64xf32> -> vector<2x64xf32>
    %579 = vector.extract_strided_slice %564 {offsets = [0, 128], sizes = [2, 64], strides = [1, 1]} : vector<2x256xf32> to vector<2x64xf32>
    %580 = math.tanh %579 : vector<2x64xf32>
    %581 = vector.extract_strided_slice %564 {offsets = [0, 192], sizes = [2, 64], strides = [1, 1]} : vector<2x256xf32> to vector<2x64xf32>
    %cst_245 = arith.constant 0.000000e+00 : f32
    %582 = vector.broadcast %cst_245 : f32 to vector<2x64xf32>
    %583 = arith.subf %582, %581 : vector<2x64xf32>
    %584 = math.exp %583 : vector<2x64xf32>
    %cst_246 = arith.constant 1.000000e+00 : f32
    %585 = vector.broadcast %cst_246 : f32 to vector<2x64xf32>
    %586 = arith.addf %585, %584 : vector<2x64xf32>
    %587 = tpu.reciprocal %586 : vector<2x64xf32> -> vector<2x64xf32>
    %588 = arith.mulf %578, %552 : vector<2x64xf32>
    %589 = arith.mulf %571, %580 : vector<2x64xf32>
    %590 = arith.addf %588, %589 : vector<2x64xf32>
    %591 = math.tanh %590 : vector<2x64xf32>
    %592 = arith.mulf %587, %591 : vector<2x64xf32>
    %593 = vector.extract_strided_slice %592 {offsets = [0, 0], sizes = [2, 32], strides = [1, 1]} : vector<2x64xf32> to vector<2x32xf32>
    %c12_247 = arith.constant 12 : index
    %c0_248 = arith.constant 0 : index
    %594 = vector.load %arg15[%c12_247, %c0_248] : memref<16x64xf32, #tpu.memory_space<vmem>>, vector<2x32xf32>
    tpu.vector_store %arg15[%c12_247, %c0_248], %593 {strides = array<i32>} : memref<16x64xf32, #tpu.memory_space<vmem>>, vector<2x32xf32>,
    %595 = vector.extract_strided_slice %592 {offsets = [0, 32], sizes = [2, 32], strides = [1, 1]} : vector<2x64xf32> to vector<2x32xf32>
    %c2_249 = arith.constant 2 : index
    %c32_250 = arith.constant 32 : index
    %596 = vector.load %arg15[%c2_249, %c32_250] : memref<16x64xf32, #tpu.memory_space<vmem>>, vector<2x32xf32>
    tpu.vector_store %arg15[%c2_249, %c32_250], %595 {strides = array<i32>} : memref<16x64xf32, #tpu.memory_space<vmem>>, vector<2x32xf32>,
    %597 = arith.truncf %592 : vector<2x64xf32> to vector<2x64xbf16>
    %cst_251 = arith.constant dense<0.000000e+00> : vector<2x256xf32>
    %598 = tpu.matmul %597, %328, %cst_251 {dimension_numbers = #tpu.dot_dimension_numbers<[1], [0], [0], [1], [0, 0, 1, 1], [], []>} : vector<2x64xbf16>, vector<64x256xbf16>, vector<2x256xf32> -> vector<2x256xf32>
    %c14_252 = arith.constant 14 : index
    %c0_253 = arith.constant 0 : index
    %599 = vector.load %arg12[%c14_252, %c0_253] : memref<16x256xf32, #tpu.memory_space<vmem>>, vector<2x256xf32>
    %600 = arith.addf %598, %599 : vector<2x256xf32>
    %c0_254 = arith.constant 0 : index
    %c0_255 = arith.constant 0 : index
    %601 = vector.load %arg13[%c0_254, %c0_255] : memref<16x256xf32, #tpu.memory_space<vmem>>, vector<2x256xf32>
    %602 = arith.addf %600, %601 : vector<2x256xf32>
    %603 = vector.extract_strided_slice %602 {offsets = [0, 0], sizes = [2, 64], strides = [1, 1]} : vector<2x256xf32> to vector<2x64xf32>
    %cst_256 = arith.constant 0.000000e+00 : f32
    %604 = vector.broadcast %cst_256 : f32 to vector<2x64xf32>
    %605 = arith.subf %604, %603 : vector<2x64xf32>
    %606 = math.exp %605 : vector<2x64xf32>
    %cst_257 = arith.constant 1.000000e+00 : f32
    %607 = vector.broadcast %cst_257 : f32 to vector<2x64xf32>
    %608 = arith.addf %607, %606 : vector<2x64xf32>
    %609 = tpu.reciprocal %608 : vector<2x64xf32> -> vector<2x64xf32>
    %610 = vector.extract_strided_slice %602 {offsets = [0, 64], sizes = [2, 64], strides = [1, 1]} : vector<2x256xf32> to vector<2x64xf32>
    %cst_258 = arith.constant 0.000000e+00 : f32
    %611 = vector.broadcast %cst_258 : f32 to vector<2x64xf32>
    %612 = arith.subf %611, %610 : vector<2x64xf32>
    %613 = math.exp %612 : vector<2x64xf32>
    %cst_259 = arith.constant 1.000000e+00 : f32
    %614 = vector.broadcast %cst_259 : f32 to vector<2x64xf32>
    %615 = arith.addf %614, %613 : vector<2x64xf32>
    %616 = tpu.reciprocal %615 : vector<2x64xf32> -> vector<2x64xf32>
    %617 = vector.extract_strided_slice %602 {offsets = [0, 128], sizes = [2, 64], strides = [1, 1]} : vector<2x256xf32> to vector<2x64xf32>
    %618 = math.tanh %617 : vector<2x64xf32>
    %619 = vector.extract_strided_slice %602 {offsets = [0, 192], sizes = [2, 64], strides = [1, 1]} : vector<2x256xf32> to vector<2x64xf32>
    %cst_260 = arith.constant 0.000000e+00 : f32
    %620 = vector.broadcast %cst_260 : f32 to vector<2x64xf32>
    %621 = arith.subf %620, %619 : vector<2x64xf32>
    %622 = math.exp %621 : vector<2x64xf32>
    %cst_261 = arith.constant 1.000000e+00 : f32
    %623 = vector.broadcast %cst_261 : f32 to vector<2x64xf32>
    %624 = arith.addf %623, %622 : vector<2x64xf32>
    %625 = tpu.reciprocal %624 : vector<2x64xf32> -> vector<2x64xf32>
    %626 = arith.mulf %616, %590 : vector<2x64xf32>
    %627 = arith.mulf %609, %618 : vector<2x64xf32>
    %628 = arith.addf %626, %627 : vector<2x64xf32>
    %629 = math.tanh %628 : vector<2x64xf32>
    %630 = arith.mulf %625, %629 : vector<2x64xf32>
    %631 = vector.extract_strided_slice %630 {offsets = [0, 0], sizes = [2, 32], strides = [1, 1]} : vector<2x64xf32> to vector<2x32xf32>
    %c14_262 = arith.constant 14 : index
    %c0_263 = arith.constant 0 : index
    %632 = vector.load %arg15[%c14_262, %c0_263] : memref<16x64xf32, #tpu.memory_space<vmem>>, vector<2x32xf32>
    tpu.vector_store %arg15[%c14_262, %c0_263], %631 {strides = array<i32>} : memref<16x64xf32, #tpu.memory_space<vmem>>, vector<2x32xf32>,
    %633 = vector.extract_strided_slice %630 {offsets = [0, 32], sizes = [2, 32], strides = [1, 1]} : vector<2x64xf32> to vector<2x32xf32>
    %c0_264 = arith.constant 0 : index
    %c32_265 = arith.constant 32 : index
    %634 = vector.load %arg15[%c0_264, %c32_265] : memref<16x64xf32, #tpu.memory_space<vmem>>, vector<2x32xf32>
    tpu.vector_store %arg15[%c0_264, %c32_265], %633 {strides = array<i32>} : memref<16x64xf32, #tpu.memory_space<vmem>>, vector<2x32xf32>,
    %cst_266 = arith.constant 0.000000e+00 : f32
    %635 = vector.broadcast %cst_266 : f32 to vector<2x10xf32>
    %c0_267 = arith.constant 0 : index
    %c0_268 = arith.constant 0 : index
    %636 = vector.load %arg15[%c0_267, %c0_268] : memref<16x64xf32, #tpu.memory_space<vmem>>, vector<2x64xf32>
    %637 = arith.truncf %636 : vector<2x64xf32> to vector<2x64xbf16>
    %c0_269 = arith.constant 0 : index
    %c0_270 = arith.constant 0 : index
    %638 = vector.load %arg9[%c0_269, %c0_270] : memref<512x10xbf16, #tpu.memory_space<vmem>>, vector<64x10xbf16>
    %cst_271 = arith.constant dense<0.000000e+00> : vector<2x10xf32>
    %639 = tpu.matmul %637, %638, %cst_271 {dimension_numbers = #tpu.dot_dimension_numbers<[1], [0], [0], [1], [0, 0, 1, 1], [], []>} : vector<2x64xbf16>, vector<64x10xbf16>, vector<2x10xf32> -> vector<2x10xf32>
    %640 = arith.addf %635, %639 : vector<2x10xf32>
    %c2_272 = arith.constant 2 : index
    %c0_273 = arith.constant 0 : index
    %641 = vector.load %arg15[%c2_272, %c0_273] : memref<16x64xf32, #tpu.memory_space<vmem>>, vector<2x64xf32>
    %642 = arith.truncf %641 : vector<2x64xf32> to vector<2x64xbf16>
    %c64 = arith.constant 64 : index
    %c0_274 = arith.constant 0 : index
    %643 = vector.load %arg9[%c64, %c0_274] : memref<512x10xbf16, #tpu.memory_space<vmem>>, vector<64x10xbf16>
    %cst_275 = arith.constant dense<0.000000e+00> : vector<2x10xf32>
    %644 = tpu.matmul %642, %643, %cst_275 {dimension_numbers = #tpu.dot_dimension_numbers<[1], [0], [0], [1], [0, 0, 1, 1], [], []>} : vector<2x64xbf16>, vector<64x10xbf16>, vector<2x10xf32> -> vector<2x10xf32>
    %645 = arith.addf %640, %644 : vector<2x10xf32>
    %c4_276 = arith.constant 4 : index
    %c0_277 = arith.constant 0 : index
    %646 = vector.load %arg15[%c4_276, %c0_277] : memref<16x64xf32, #tpu.memory_space<vmem>>, vector<2x64xf32>
    %647 = arith.truncf %646 : vector<2x64xf32> to vector<2x64xbf16>
    %c128 = arith.constant 128 : index
    %c0_278 = arith.constant 0 : index
    %648 = vector.load %arg9[%c128, %c0_278] : memref<512x10xbf16, #tpu.memory_space<vmem>>, vector<64x10xbf16>
    %cst_279 = arith.constant dense<0.000000e+00> : vector<2x10xf32>
    %649 = tpu.matmul %647, %648, %cst_279 {dimension_numbers = #tpu.dot_dimension_numbers<[1], [0], [0], [1], [0, 0, 1, 1], [], []>} : vector<2x64xbf16>, vector<64x10xbf16>, vector<2x10xf32> -> vector<2x10xf32>
    %650 = arith.addf %645, %649 : vector<2x10xf32>
    %c6_280 = arith.constant 6 : index
    %c0_281 = arith.constant 0 : index
    %651 = vector.load %arg15[%c6_280, %c0_281] : memref<16x64xf32, #tpu.memory_space<vmem>>, vector<2x64xf32>
    %652 = arith.truncf %651 : vector<2x64xf32> to vector<2x64xbf16>
    %c192 = arith.constant 192 : index
    %c0_282 = arith.constant 0 : index
    %653 = vector.load %arg9[%c192, %c0_282] : memref<512x10xbf16, #tpu.memory_space<vmem>>, vector<64x10xbf16>
    %cst_283 = arith.constant dense<0.000000e+00> : vector<2x10xf32>
    %654 = tpu.matmul %652, %653, %cst_283 {dimension_numbers = #tpu.dot_dimension_numbers<[1], [0], [0], [1], [0, 0, 1, 1], [], []>} : vector<2x64xbf16>, vector<64x10xbf16>, vector<2x10xf32> -> vector<2x10xf32>
    %655 = arith.addf %650, %654 : vector<2x10xf32>
    %c8_284 = arith.constant 8 : index
    %c0_285 = arith.constant 0 : index
    %656 = vector.load %arg15[%c8_284, %c0_285] : memref<16x64xf32, #tpu.memory_space<vmem>>, vector<2x64xf32>
    %657 = arith.truncf %656 : vector<2x64xf32> to vector<2x64xbf16>
    %c256 = arith.constant 256 : index
    %c0_286 = arith.constant 0 : index
    %658 = vector.load %arg9[%c256, %c0_286] : memref<512x10xbf16, #tpu.memory_space<vmem>>, vector<64x10xbf16>
    %cst_287 = arith.constant dense<0.000000e+00> : vector<2x10xf32>
    %659 = tpu.matmul %657, %658, %cst_287 {dimension_numbers = #tpu.dot_dimension_numbers<[1], [0], [0], [1], [0, 0, 1, 1], [], []>} : vector<2x64xbf16>, vector<64x10xbf16>, vector<2x10xf32> -> vector<2x10xf32>
    %660 = arith.addf %655, %659 : vector<2x10xf32>
    %c10_288 = arith.constant 10 : index
    %c0_289 = arith.constant 0 : index
    %661 = vector.load %arg15[%c10_288, %c0_289] : memref<16x64xf32, #tpu.memory_space<vmem>>, vector<2x64xf32>
    %662 = arith.truncf %661 : vector<2x64xf32> to vector<2x64xbf16>
    %c320 = arith.constant 320 : index
    %c0_290 = arith.constant 0 : index
    %663 = vector.load %arg9[%c320, %c0_290] : memref<512x10xbf16, #tpu.memory_space<vmem>>, vector<64x10xbf16>
    %cst_291 = arith.constant dense<0.000000e+00> : vector<2x10xf32>
    %664 = tpu.matmul %662, %663, %cst_291 {dimension_numbers = #tpu.dot_dimension_numbers<[1], [0], [0], [1], [0, 0, 1, 1], [], []>} : vector<2x64xbf16>, vector<64x10xbf16>, vector<2x10xf32> -> vector<2x10xf32>
    %665 = arith.addf %660, %664 : vector<2x10xf32>
    %c12_292 = arith.constant 12 : index
    %c0_293 = arith.constant 0 : index
    %666 = vector.load %arg15[%c12_292, %c0_293] : memref<16x64xf32, #tpu.memory_space<vmem>>, vector<2x64xf32>
    %667 = arith.truncf %666 : vector<2x64xf32> to vector<2x64xbf16>
    %c384 = arith.constant 384 : index
    %c0_294 = arith.constant 0 : index
    %668 = vector.load %arg9[%c384, %c0_294] : memref<512x10xbf16, #tpu.memory_space<vmem>>, vector<64x10xbf16>
    %cst_295 = arith.constant dense<0.000000e+00> : vector<2x10xf32>
    %669 = tpu.matmul %667, %668, %cst_295 {dimension_numbers = #tpu.dot_dimension_numbers<[1], [0], [0], [1], [0, 0, 1, 1], [], []>} : vector<2x64xbf16>, vector<64x10xbf16>, vector<2x10xf32> -> vector<2x10xf32>
    %670 = arith.addf %665, %669 : vector<2x10xf32>
    %c14_296 = arith.constant 14 : index
    %c0_297 = arith.constant 0 : index
    %671 = vector.load %arg15[%c14_296, %c0_297] : memref<16x64xf32, #tpu.memory_space<vmem>>, vector<2x64xf32>
    %672 = arith.truncf %671 : vector<2x64xf32> to vector<2x64xbf16>
    %c448 = arith.constant 448 : index
    %c0_298 = arith.constant 0 : index
    %673 = vector.load %arg9[%c448, %c0_298] : memref<512x10xbf16, #tpu.memory_space<vmem>>, vector<64x10xbf16>
    %cst_299 = arith.constant dense<0.000000e+00> : vector<2x10xf32>
    %674 = tpu.matmul %672, %673, %cst_299 {dimension_numbers = #tpu.dot_dimension_numbers<[1], [0], [0], [1], [0, 0, 1, 1], [], []>} : vector<2x64xbf16>, vector<64x10xbf16>, vector<2x10xf32> -> vector<2x10xf32>
    %675 = arith.addf %670, %674 : vector<2x10xf32>
    %c0_300 = arith.constant 0 : index
    %c0_301 = arith.constant 0 : index
    %676 = vector.load %arg10[%c0_300, %c0_301] : memref<1x10xf32, #tpu.memory_space<vmem>>, vector<1x10xf32>
    %677 = vector.broadcast %676 : vector<1x10xf32> to vector<2x10xf32>
    %678 = arith.addf %675, %677 : vector<2x10xf32>
    %c0_302 = arith.constant 0 : index
    %c0_303 = arith.constant 0 : index
    %679 = vector.load %arg11[%c0_302, %c0_303] : memref<2x10xf32, #tpu.memory_space<vmem>>, vector<2x10xf32>
    tpu.vector_store %arg11[%c0_302, %c0_303], %678 {strides = array<i32>} : memref<2x10xf32, #tpu.memory_space<vmem>>, vector<2x10xf32>,
    return
  }
}

</mosaic_0001>

<llo_original>
// kernel: bilstm_fc_forward.1
$region0: #{bilstm_fc_forward.1}
  #allocation0 [shape = 'u32[]', space=smem, size = 0x4, offset = 0x4, fixed_abs, tag = 'smem constant byte address 0x4 - core index']
  #allocation1 [shape = 'u32[144,128]{1,0:T(1,128)}', space=vmem, size = 0x12000, scoped, tag = 'internal scratch']
  #allocation2 [shape = 'f32[16,256]{1,0:T(8,128)}', space=vmem, size = 0x4000, scoped, tag = 'scratch operand']
  #allocation3 [shape = 'f32[16,256]{1,0:T(8,128)}', space=vmem, size = 0x4000, scoped, tag = 'scratch operand']
  #allocation4 [shape = 'f32[16,64]{1,0:T(8,128)}', space=vmem, size = 0x2000, scoped, tag = 'scratch operand']
  #allocation5 [shape = 'f32[16,64]{1,0:T(8,128)}', space=vmem, size = 0x2000, scoped, tag = 'scratch operand']
  %s0 = inlined_call_operand.vmem [shape: bf16[16,16], index: 0, kind: input, shape index: {}]
  %s1 = inlined_call_operand.vmem [shape: bf16[16,256], index: 1, kind: input, shape index: {}]
  %s2 = inlined_call_operand.vmem [shape: bf16[16,256], index: 2, kind: input, shape index: {}]
  %s3 = inlined_call_operand.vmem [shape: bf16[64,256], index: 3, kind: input, shape index: {}]
  %s4 = inlined_call_operand.vmem [shape: f32[1,256], index: 4, kind: input, shape index: {}]
  %s5 = inlined_call_operand.vmem [shape: bf16[64,256], index: 5, kind: input, shape index: {}]
  %s6 = inlined_call_operand.vmem [shape: bf16[64,256], index: 6, kind: input, shape index: {}]
  %s7 = inlined_call_operand.vmem [shape: bf16[64,256], index: 7, kind: input, shape index: {}]
  %s8 = inlined_call_operand.vmem [shape: f32[1,256], index: 8, kind: input, shape index: {}]
  %s9 = inlined_call_operand.vmem [shape: bf16[512,10], index: 9, kind: input, shape index: {}]
  %s10 = inlined_call_operand.vmem [shape: f32[1,10], index: 10, kind: input, shape index: {}]
  %s11 = inlined_call_operand.hbm [shape: f32[2,10], index: 11, kind: output, shape index: {}]
  %s12 = sld [smem:[#allocation0]]
  $region54: #{bilstm_fc_forward.1} parent=0
    _
  %s14 = ssub.s32 1, %s12
  %s15 = scalar_select 0, %s14, %s12
  $region1: #{bilstm_fc_forward.1} parent=0
    #allocation6 [shape = 'u8[1024]{0}', space=vmem, size = 0x400, scoped, tag = 'output window, operand 0, single buffered']
    #allocation7 [shape = 's32[1]{0}', space=sflag, size = 0x4, scoped, tag = 'scoped memory for bilstm_fc_forward.1']
    %16 = vsyncpa [#allocation7], 0
    // Predicated region
    $region2: #{bilstm_fc_forward.1} parent=1 // pred_check
      _
    $region3: #{bilstm_fc_forward.1} parent=1 // pred_check_branch
      %18 = sbr.rel (0) target = $region5
    $region4: #{bilstm_fc_forward.1} parent=1 // pred_region
      _
    $region5: #{bilstm_fc_forward.1} parent=1 // pred_fallthru
      _
    // Predicated region
    $region6: #{bilstm_fc_forward.1} parent=1 // pred_check
      _
    $region7: #{bilstm_fc_forward.1} parent=1 // pred_check_branch
      %20 = sbr.rel (0) target = $region9
    $region8: #{bilstm_fc_forward.1} parent=1 // pred_region
      _
    $region9: #{bilstm_fc_forward.1} parent=1 // pred_fallthru
      _
    // Predicated region
    $region10: #{bilstm_fc_forward.1} parent=1 // pred_check
      _
    $region11: #{bilstm_fc_forward.1} parent=1 // pred_check_branch
      %22 = sbr.rel (0) target = $region13
    $region12: #{bilstm_fc_forward.1} parent=1 // pred_region
      _
    $region13: #{bilstm_fc_forward.1} parent=1 // pred_fallthru
      _
    // Predicated region
    $region14: #{bilstm_fc_forward.1} parent=1 // pred_check
      _
    $region15: #{bilstm_fc_forward.1} parent=1 // pred_check_branch
      %24 = sbr.rel (0) target = $region17
    $region16: #{bilstm_fc_forward.1} parent=1 // pred_region
      _
    $region17: #{bilstm_fc_forward.1} parent=1 // pred_fallthru
      _
    // Predicated region
    $region18: #{bilstm_fc_forward.1} parent=1 // pred_check
      _
    $region19: #{bilstm_fc_forward.1} parent=1 // pred_check_branch
      %26 = sbr.rel (0) target = $region21
    $region20: #{bilstm_fc_forward.1} parent=1 // pred_region
      _
    $region21: #{bilstm_fc_forward.1} parent=1 // pred_fallthru
      _
    // Predicated region
    $region22: #{bilstm_fc_forward.1} parent=1 // pred_check
      _
    $region23: #{bilstm_fc_forward.1} parent=1 // pred_check_branch
      %28 = sbr.rel (0) target = $region25
    $region24: #{bilstm_fc_forward.1} parent=1 // pred_region
      _
    $region25: #{bilstm_fc_forward.1} parent=1 // pred_fallthru
      _
    // Predicated region
    $region26: #{bilstm_fc_forward.1} parent=1 // pred_check
      _
    $region27: #{bilstm_fc_forward.1} parent=1 // pred_check_branch
      %30 = sbr.rel (0) target = $region29
    $region28: #{bilstm_fc_forward.1} parent=1 // pred_region
      _
    $region29: #{bilstm_fc_forward.1} parent=1 // pred_fallthru
      _
    // Predicated region
    $region30: #{bilstm_fc_forward.1} parent=1 // pred_check
      _
    $region31: #{bilstm_fc_forward.1} parent=1 // pred_check_branch
      %32 = sbr.rel (0) target = $region33
    $region32: #{bilstm_fc_forward.1} parent=1 // pred_region
      _
    $region33: #{bilstm_fc_forward.1} parent=1 // pred_fallthru
      _
    // Predicated region
    $region34: #{bilstm_fc_forward.1} parent=1 // pred_check
      _
    $region35: #{bilstm_fc_forward.1} parent=1 // pred_check_branch
      %34 = sbr.rel (0) target = $region37
    $region36: #{bilstm_fc_forward.1} parent=1 // pred_region
      _
    $region37: #{bilstm_fc_forward.1} parent=1 // pred_fallthru
      _
    // Predicated region
    $region38: #{bilstm_fc_forward.1} parent=1 // pred_check
      _
    $region39: #{bilstm_fc_forward.1} parent=1 // pred_check_branch
      %36 = sbr.rel (0) target = $region41
    $region40: #{bilstm_fc_forward.1} parent=1 // pred_region
      _
    $region41: #{bilstm_fc_forward.1} parent=1 // pred_fallthru
      _
    // Predicated region
    $region42: #{bilstm_fc_forward.1} parent=1 // pred_check
      _
    $region43: #{bilstm_fc_forward.1} parent=1 // pred_check_branch
      %38 = sbr.rel (0) target = $region45
    $region44: #{bilstm_fc_forward.1} parent=1 // pred_region
      _
    $region45: #{bilstm_fc_forward.1} parent=1 // pred_fallthru
      _
    %v40 = vld [vmem:[%s0] sm:$0xf]
    %v41 = vld [vmem:[%s0 + $0x4] sm:$0xf]
    %v42 = vld [vmem:[%s1] sm:$0xff]
    %v43 = vld [vmem:[%s1 + $0x8] sm:$0xff]
    %v44 = vld [vmem:[%s4] sm:$0x3]
    %v46 = vlaneseq
    %v47 = vshrl.u32 %v46, 7
    %v48 = vsub.s32 0, %v47
    %v49 = vrot.slane %v44, %v48
    %v50 = vlaneseq
    %v51 = vshrl.u32 %v50, 7
    %v52 = vsub.s32 1, %v51
    %v53 = vrot.slane %v44, %v52
    %v58 = vunpack.c.l.b16 %v40
    %v59 = vunpack.c.l.b16 %v41
    %v60 = vpack.c.b16 %v59, %v58
    %v63 = vunpack.c.l.b16 %v42
    %v64 = vunpack.c.h.b16 %v42
    %v65 = vunpack.c.l.b16 %v43
    %v66 = vunpack.c.h.b16 %v43
    %v67 = vpack.c.b16 %v65, %v63
    %v68 = vpack.c.b16 %v66, %v64
    %vm71 = vcmask 130048
    %v73 = vsel %vm71, %v60, 0
    %75 = vmatprep.subr.bf16.mxu0 %v68
    %76 = vmatpush1.bf16.msra.mxu0 %v67
    %77 = vmatprep.subr.bf16.mxu0 0
    %78 = vmatpush1.bf16.msra.mxu0 0
    %79 = vmatprep.subr.bf16.mxu0 0
    %80 = vmatpush1.bf16.msra.mxu0 0
    %81 = vmatprep.subr.bf16.mxu0 0
    %82 = vmatpush1.bf16.msra.mxu0 0
    %83 = vmatprep.subr.bf16.mxu0 0
    %84 = vmatpush1.bf16.msra.mxu0 0
    %85 = vmatprep.subr.bf16.mxu0 0
    %86 = vmatpush1.bf16.msra.mxu0 0
    %87 = vmatprep.subr.bf16.mxu0 0
    %88 = vmatpush1.bf16.msra.mxu0 0
    %89 = vmatprep.subr.bf16.mxu0 0
    %90 = vmatpush1.bf16.msra.mxu0 0
    %91 = vmatprep.subr.bf16.mxu0 0
    %92 = vmatpush1.bf16.msra.mxu0 0
    %93 = vmatprep.subr.bf16.mxu0 0
    %94 = vmatpush1.bf16.msra.mxu0 0
    %95 = vmatprep.subr.bf16.mxu0 0
    %96 = vmatpush1.bf16.msra.mxu0 0
    %97 = vmatprep.subr.bf16.mxu0 0
    %98 = vmatpush1.bf16.msra.mxu0 0
    %99 = vmatprep.subr.bf16.mxu0 0
    %100 = vmatpush1.bf16.msra.mxu0 0
    %101 = vmatprep.subr.bf16.mxu0 0
    %102 = vmatpush1.bf16.msra.mxu0 0
    %103 = vmatprep.subr.bf16.mxu0 0
    %104 = vmatpush1.bf16.msra.mxu0 0
    %105 = vmatprep.subr.bf16.mxu0 0
    %106 = vmatpush1.bf16.msra.mxu0 0
    %107 = vmatprep.mubr.bf16.mxu0 0
    %108 = vmatmul.mubr.bf16.gmra.mrb[0].mxu0 %v73
    %v109 = vpop.f32.mrb[0].mxu0
    %v110 = vadd.f32 %v49, %v109
    %v111 = vpop.f32.mrb[0].mxu0
    %v112 = vadd.f32 %v53, %v111
    %v113 = vpop.f32.mrb[0].mxu0
    %v114 = vadd.f32 %v49, %v113
    %v115 = vpop.f32.mrb[0].mxu0
    %v116 = vadd.f32 %v53, %v115
    %117 = vdwg.mxu0
    %118 = vst [vmem:[#allocation2] sm:$0xff] %v110
    %119 = vst [vmem:[#allocation2 + $0x8] sm:$0xff] %v112
    %120 = vst [vmem:[#allocation2 + $0x10] sm:$0xff] %v114
    %121 = vst [vmem:[#allocation2 + $0x18] sm:$0xff] %v116
    %v122 = vld [vmem:[%s2] sm:$0xff]
    %v123 = vld [vmem:[%s2 + $0x8] sm:$0xff]
    %v126 = vunpack.c.l.b16 %v122
    %v127 = vunpack.c.h.b16 %v122
    %v128 = vunpack.c.l.b16 %v123
    %v129 = vunpack.c.h.b16 %v123
    %v130 = vpack.c.b16 %v128, %v126
    %v131 = vpack.c.b16 %v129, %v127
    %134 = vmatprep.subr.bf16.mxu0 %v131
    %135 = vmatpush1.bf16.msra.mxu0 %v130
    %136 = vmatprep.subr.bf16.mxu0 0
    %137 = vmatpush1.bf16.msra.mxu0 0
    %138 = vmatprep.subr.bf16.mxu0 0
    %139 = vmatpush1.bf16.msra.mxu0 0
    %140 = vmatprep.subr.bf16.mxu0 0
    %141 = vmatpush1.bf16.msra.mxu0 0
    %142 = vmatprep.subr.bf16.mxu0 0
    %143 = vmatpush1.bf16.msra.mxu0 0
    %144 = vmatprep.subr.bf16.mxu0 0
    %145 = vmatpush1.bf16.msra.mxu0 0
    %146 = vmatprep.subr.bf16.mxu0 0
    %147 = vmatpush1.bf16.msra.mxu0 0
    %148 = vmatprep.subr.bf16.mxu0 0
    %149 = vmatpush1.bf16.msra.mxu0 0
    %150 = vmatprep.subr.bf16.mxu0 0
    %151 = vmatpush1.bf16.msra.mxu0 0
    %152 = vmatprep.subr.bf16.mxu0 0
    %153 = vmatpush1.bf16.msra.mxu0 0
    %154 = vmatprep.subr.bf16.mxu0 0
    %155 = vmatpush1.bf16.msra.mxu0 0
    %156 = vmatprep.subr.bf16.mxu0 0
    %157 = vmatpush1.bf16.msra.mxu0 0
    %158 = vmatprep.subr.bf16.mxu0 0
    %159 = vmatpush1.bf16.msra.mxu0 0
    %160 = vmatprep.subr.bf16.mxu0 0
    %161 = vmatpush1.bf16.msra.mxu0 0
    %162 = vmatprep.subr.bf16.mxu0 0
    %163 = vmatpush1.bf16.msra.mxu0 0
    %164 = vmatprep.subr.bf16.mxu0 0
    %165 = vmatpush1.bf16.msra.mxu0 0
    %166 = vmatprep.mubr.bf16.mxu0 0
    %167 = vmatmul.mubr.bf16.gmra.mrb[0].mxu0 %v73
    %v168 = vpop.f32.mrb[0].mxu0
    %v169 = vadd.f32 0.0, %v168
    %v170 = vpop.f32.mrb[0].mxu0
    %v171 = vadd.f32 0.0, %v170
    %v172 = vpop.f32.mrb[0].mxu0
    %v173 = vadd.f32 0.0, %v172
    %v174 = vpop.f32.mrb[0].mxu0
    %v175 = vadd.f32 0.0, %v174
    %176 = vdwg.mxu0
    %177 = vst [vmem:[#allocation3] sm:$0xff] %v169
    %178 = vst [vmem:[#allocation3 + $0x8] sm:$0xff] %v171
    %179 = vst [vmem:[#allocation3 + $0x10] sm:$0xff] %v173
    %180 = vst [vmem:[#allocation3 + $0x18] sm:$0xff] %v175
    %v181 = vld [vmem:[%s3] sm:$0xff]
    %v182 = vld [vmem:[%s3 + $0x8] sm:$0xff]
    %v183 = vld [vmem:[%s3 + $0x10] sm:$0xff]
    %v184 = vld [vmem:[%s3 + $0x18] sm:$0xff]
    %v185 = vld [vmem:[%s3 + $0x20] sm:$0xff]
    %v186 = vld [vmem:[%s3 + $0x28] sm:$0xff]
    %v187 = vld [vmem:[%s3 + $0x30] sm:$0xff]
    %v188 = vld [vmem:[%s3 + $0x38] sm:$0xff]
    %v189 = vld [vmem:[#allocation2] sm:$0x3]
    %v190 = vld [vmem:[#allocation2 + $0x8] sm:$0x3]
    %v199 = vunpack.c.l.b16 %v181
    %v200 = vunpack.c.h.b16 %v181
    %v201 = vunpack.c.l.b16 %v182
    %v202 = vunpack.c.h.b16 %v182
    %v203 = vunpack.c.l.b16 %v183
    %v204 = vunpack.c.h.b16 %v183
    %v205 = vunpack.c.l.b16 %v184
    %v206 = vunpack.c.h.b16 %v184
    %v207 = vunpack.c.l.b16 %v185
    %v208 = vunpack.c.h.b16 %v185
    %v209 = vunpack.c.l.b16 %v186
    %v210 = vunpack.c.h.b16 %v186
    %v211 = vunpack.c.l.b16 %v187
    %v212 = vunpack.c.h.b16 %v187
    %v213 = vunpack.c.l.b16 %v188
    %v214 = vunpack.c.h.b16 %v188
    %v215 = vpack.c.b16 %v201, %v199
    %v216 = vpack.c.b16 %v202, %v200
    %v217 = vpack.c.b16 %v205, %v203
    %v218 = vpack.c.b16 %v206, %v204
    %v219 = vpack.c.b16 %v209, %v207
    %v220 = vpack.c.b16 %v210, %v208
    %v221 = vpack.c.b16 %v213, %v211
    %v222 = vpack.c.b16 %v214, %v212
    %vm231 = vcmask 523264
    %v233 = vsel %vm231, 0, 0
    %235 = vmatprep.subr.bf16.mxu0 %v216
    %236 = vmatpush1.bf16.msra.mxu0 %v215
    %237 = vmatprep.subr.bf16.mxu0 %v218
    %238 = vmatpush1.bf16.msra.mxu0 %v217
    %239 = vmatprep.subr.bf16.mxu0 %v220
    %240 = vmatpush1.bf16.msra.mxu0 %v219
    %241 = vmatprep.subr.bf16.mxu0 %v222
    %242 = vmatpush1.bf16.msra.mxu0 %v221
    %243 = vmatprep.subr.bf16.mxu0 0
    %244 = vmatpush1.bf16.msra.mxu0 0
    %245 = vmatprep.subr.bf16.mxu0 0
    %246 = vmatpush1.bf16.msra.mxu0 0
    %247 = vmatprep.subr.bf16.mxu0 0
    %248 = vmatpush1.bf16.msra.mxu0 0
    %249 = vmatprep.subr.bf16.mxu0 0
    %250 = vmatpush1.bf16.msra.mxu0 0
    %251 = vmatprep.subr.bf16.mxu0 0
    %252 = vmatpush1.bf16.msra.mxu0 0
    %253 = vmatprep.subr.bf16.mxu0 0
    %254 = vmatpush1.bf16.msra.mxu0 0
    %255 = vmatprep.subr.bf16.mxu0 0
    %256 = vmatpush1.bf16.msra.mxu0 0
    %257 = vmatprep.subr.bf16.mxu0 0
    %258 = vmatpush1.bf16.msra.mxu0 0
    %259 = vmatprep.subr.bf16.mxu0 0
    %260 = vmatpush1.bf16.msra.mxu0 0
    %261 = vmatprep.subr.bf16.mxu0 0
    %262 = vmatpush1.bf16.msra.mxu0 0
    %263 = vmatprep.subr.bf16.mxu0 0
    %264 = vmatpush1.bf16.msra.mxu0 0
    %265 = vmatprep.subr.bf16.mxu0 0
    %266 = vmatpush1.bf16.msra.mxu0 0
    %267 = vmatprep.mubr.bf16.mxu0 0
    %268 = vmatmul.mubr.bf16.gmra.mrb[0].mxu0 %v233
    %v269 = vpop.f32.mrb[0].mxu0
    %v270 = vadd.f32 %v189, %v269
    %v271 = vpop.f32.mrb[0].mxu0
    %v272 = vadd.f32 %v190, %v271
    %v273 = vpop.f32.mrb[0].mxu0
    %v274 = vpop.f32.mrb[0].mxu0
    %275 = vdwg.mxu0
    %v276 = vld [vmem:[#allocation3 + $0x10] sm:$0xc0]
    %v277 = vld [vmem:[#allocation3 + $0x18] sm:$0xc0]
    %v280 = vrot.slane %v276, 6
    %v281 = vrot.slane %v277, 6
    %v284 = vadd.f32 %v270, %v280
    %v285 = vadd.f32 %v272, %v281
    %v286 = vsub.f32 0.0, %v284
    %v287 = vmul.f32 %v286, 1.442695
    %v288 = vpow.pop %v287
    %v289 = vadd.f32 %v288, 1.0
    %v290 = vrcp.pop %v289
    %v291 = vtanh.pop %v285
    %v292 = vsub.f32 0.0, %v285
    %v293 = vmul.f32 %v292, 1.442695
    %v294 = vpow.pop %v293
    %v295 = vadd.f32 %v294, 1.0
    %v296 = vrcp.pop %v295
    %v297 = vmul.f32 %v290, 0.0
    %v298 = vmul.f32 %v290, %v291
    %300 = vrot.lane.b32.xlu0 %v298, 64
    %v301 = vpop.permute.xlu0 %300
    %v303 = vadd.f32 %v297, %v301
    %v304 = vtanh.pop %v303
    %v305 = vmul.f32 %v296, %v304
    %307 = vrot.lane.b32.xlu0 %v305, 64
    %v308 = vpop.permute.xlu0 %307
    %vm310 = vcmask 254976
    %311 = vst.msk [vmem:[#allocation4] sm:$0x3] %vm310, %v308
    %vm312 = vcmask 517376
    %313 = vst.msk [vmem:[#allocation4 + $0xe] sm:$0x3] %vm312, %v308
    %v314 = vpack.c.bf16 %v305, %v305
    %v315 = vld [vmem:[#allocation2] sm:$0xc]
    %v316 = vld [vmem:[#allocation2 + $0x8] sm:$0xc]
    %318 = vrot.lane.b32.xlu0 %v314, 64
    %v319 = vpop.permute.xlu0 %318
    %v322 = vrot.slane %v315, 2
    %v323 = vrot.slane %v316, 2
    %v327 = vsel %vm231, %v319, 0
    %329 = vmatprep.subr.bf16.mxu0 %v216
    %330 = vmatpush1.bf16.msra.mxu0 %v215
    %331 = vmatprep.subr.bf16.mxu0 %v218
    %332 = vmatpush1.bf16.msra.mxu0 %v217
    %333 = vmatprep.subr.bf16.mxu0 %v220
    %334 = vmatpush1.bf16.msra.mxu0 %v219
    %335 = vmatprep.subr.bf16.mxu0 %v222
    %336 = vmatpush1.bf16.msra.mxu0 %v221
    %337 = vmatprep.subr.bf16.mxu0 0
    %338 = vmatpush1.bf16.msra.mxu0 0
    %339 = vmatprep.subr.bf16.mxu0 0
    %340 = vmatpush1.bf16.msra.mxu0 0
    %341 = vmatprep.subr.bf16.mxu0 0
    %342 = vmatpush1.bf16.msra.mxu0 0
    %343 = vmatprep.subr.bf16.mxu0 0
    %344 = vmatpush1.bf16.msra.mxu0 0
    %345 = vmatprep.subr.bf16.mxu0 0
    %346 = vmatpush1.bf16.msra.mxu0 0
    %347 = vmatprep.subr.bf16.mxu0 0
    %348 = vmatpush1.bf16.msra.mxu0 0
    %349 = vmatprep.subr.bf16.mxu0 0
    %350 = vmatpush1.bf16.msra.mxu0 0
    %351 = vmatprep.subr.bf16.mxu0 0
    %352 = vmatpush1.bf16.msra.mxu0 0
    %353 = vmatprep.subr.bf16.mxu0 0
    %354 = vmatpush1.bf16.msra.mxu0 0
    %355 = vmatprep.subr.bf16.mxu0 0
    %356 = vmatpush1.bf16.msra.mxu0 0
    %357 = vmatprep.subr.bf16.mxu0 0
    %358 = vmatpush1.bf16.msra.mxu0 0
    %359 = vmatprep.subr.bf16.mxu0 0
    %360 = vmatpush1.bf16.msra.mxu0 0
    %361 = vmatprep.mubr.bf16.mxu0 0
    %362 = vmatmul.mubr.bf16.gmra.mrb[0].mxu0 %v327
    %v363 = vpop.f32.mrb[0].mxu0
    %v364 = vadd.f32 %v322, %v363
    %v365 = vpop.f32.mrb[0].mxu0
    %v366 = vadd.f32 %v323, %v365
    %v367 = vpop.f32.mrb[0].mxu0
    %v368 = vpop.f32.mrb[0].mxu0
    %369 = vdwg.mxu0
    %v370 = vld [vmem:[#allocation3 + $0x10] sm:$0x30]
    %v371 = vld [vmem:[#allocation3 + $0x18] sm:$0x30]
    %v374 = vrot.slane %v370, 4
    %v375 = vrot.slane %v371, 4
    %v378 = vadd.f32 %v364, %v374
    %v379 = vadd.f32 %v366, %v375
    %v380 = vsub.f32 0.0, %v378
    %v381 = vmul.f32 %v380, 1.442695
    %v382 = vpow.pop %v381
    %v383 = vadd.f32 %v382, 1.0
    %v384 = vrcp.pop %v383
    %v385 = vtanh.pop %v379
    %v386 = vsub.f32 0.0, %v379
    %v387 = vmul.f32 %v386, 1.442695
    %v388 = vpow.pop %v387
    %v389 = vadd.f32 %v388, 1.0
    %v390 = vrcp.pop %v389
    %v391 = vmul.f32 %v384, %v303
    %v392 = vmul.f32 %v384, %v385
    %394 = vrot.lane.b32.xlu0 %v392, 64
    %v395 = vpop.permute.xlu0 %394
    %v397 = vadd.f32 %v391, %v395
    %v398 = vtanh.pop %v397
    %v399 = vmul.f32 %v390, %v398
    %401 = vrot.lane.b32.xlu0 %v399, 64
    %v402 = vpop.permute.xlu0 %401
    %404 = vst.msk [vmem:[#allocation4 + $0x2] sm:$0x3] %vm310, %v402
    %405 = vst.msk [vmem:[#allocation4 + $0xc] sm:$0x3] %vm312, %v402
    %v406 = vpack.c.bf16 %v399, %v399
    %v407 = vld [vmem:[#allocation2] sm:$0x30]
    %v408 = vld [vmem:[#allocation2 + $0x8] sm:$0x30]
    %410 = vrot.lane.b32.xlu0 %v406, 64
    %v411 = vpop.permute.xlu0 %410
    %v414 = vrot.slane %v407, 4
    %v415 = vrot.slane %v408, 4
    %v419 = vsel %vm231, %v411, 0
    %421 = vmatprep.subr.bf16.mxu0 %v216
    %422 = vmatpush1.bf16.msra.mxu0 %v215
    %423 = vmatprep.subr.bf16.mxu0 %v218
    %424 = vmatpush1.bf16.msra.mxu0 %v217
    %425 = vmatprep.subr.bf16.mxu0 %v220
    %426 = vmatpush1.bf16.msra.mxu0 %v219
    %427 = vmatprep.subr.bf16.mxu0 %v222
    %428 = vmatpush1.bf16.msra.mxu0 %v221
    %429 = vmatprep.subr.bf16.mxu0 0
    %430 = vmatpush1.bf16.msra.mxu0 0
    %431 = vmatprep.subr.bf16.mxu0 0
    %432 = vmatpush1.bf16.msra.mxu0 0
    %433 = vmatprep.subr.bf16.mxu0 0
    %434 = vmatpush1.bf16.msra.mxu0 0
    %435 = vmatprep.subr.bf16.mxu0 0
    %436 = vmatpush1.bf16.msra.mxu0 0
    %437 = vmatprep.subr.bf16.mxu0 0
    %438 = vmatpush1.bf16.msra.mxu0 0
    %439 = vmatprep.subr.bf16.mxu0 0
    %440 = vmatpush1.bf16.msra.mxu0 0
    %441 = vmatprep.subr.bf16.mxu0 0
    %442 = vmatpush1.bf16.msra.mxu0 0
    %443 = vmatprep.subr.bf16.mxu0 0
    %444 = vmatpush1.bf16.msra.mxu0 0
    %445 = vmatprep.subr.bf16.mxu0 0
    %446 = vmatpush1.bf16.msra.mxu0 0
    %447 = vmatprep.subr.bf16.mxu0 0
    %448 = vmatpush1.bf16.msra.mxu0 0
    %449 = vmatprep.subr.bf16.mxu0 0
    %450 = vmatpush1.bf16.msra.mxu0 0
    %451 = vmatprep.subr.bf16.mxu0 0
    %452 = vmatpush1.bf16.msra.mxu0 0
    %453 = vmatprep.mubr.bf16.mxu0 0
    %454 = vmatmul.mubr.bf16.gmra.mrb[0].mxu0 %v419
    %v455 = vpop.f32.mrb[0].mxu0
    %v456 = vadd.f32 %v414, %v455
    %v457 = vpop.f32.mrb[0].mxu0
    %v458 = vadd.f32 %v415, %v457
    %v459 = vpop.f32.mrb[0].mxu0
    %v460 = vpop.f32.mrb[0].mxu0
    %461 = vdwg.mxu0
    %v462 = vld [vmem:[#allocation3 + $0x10] sm:$0xc]
    %v463 = vld [vmem:[#allocation3 + $0x18] sm:$0xc]
    %v466 = vrot.slane %v462, 2
    %v467 = vrot.slane %v463, 2
    %v470 = vadd.f32 %v456, %v466
    %v471 = vadd.f32 %v458, %v467
    %v472 = vsub.f32 0.0, %v470
    %v473 = vmul.f32 %v472, 1.442695
    %v474 = vpow.pop %v473
    %v475 = vadd.f32 %v474, 1.0
    %v476 = vrcp.pop %v475
    %v477 = vtanh.pop %v471
    %v478 = vsub.f32 0.0, %v471
    %v479 = vmul.f32 %v478, 1.442695
    %v480 = vpow.pop %v479
    %v481 = vadd.f32 %v480, 1.0
    %v482 = vrcp.pop %v481
    %v483 = vmul.f32 %v476, %v397
    %v484 = vmul.f32 %v476, %v477
    %486 = vrot.lane.b32.xlu0 %v484, 64
    %v487 = vpop.permute.xlu0 %486
    %v489 = vadd.f32 %v483, %v487
    %v490 = vtanh.pop %v489
    %v491 = vmul.f32 %v482, %v490
    %493 = vrot.lane.b32.xlu0 %v491, 64
    %v494 = vpop.permute.xlu0 %493
    %496 = vst.msk [vmem:[#allocation4 + $0x4] sm:$0x3] %vm310, %v494
    %497 = vst.msk [vmem:[#allocation4 + $0xa] sm:$0x3] %vm312, %v494
    %v498 = vpack.c.bf16 %v491, %v491
    %v499 = vld [vmem:[#allocation2] sm:$0xc0]
    %v500 = vld [vmem:[#allocation2 + $0x8] sm:$0xc0]
    %502 = vrot.lane.b32.xlu0 %v498, 64
    %v503 = vpop.permute.xlu0 %502
    %v506 = vrot.slane %v499, 6
    %v507 = vrot.slane %v500, 6
    %v511 = vsel %vm231, %v503, 0
    %513 = vmatprep.subr.bf16.mxu0 %v216
    %514 = vmatpush1.bf16.msra.mxu0 %v215
    %515 = vmatprep.subr.bf16.mxu0 %v218
    %516 = vmatpush1.bf16.msra.mxu0 %v217
    %517 = vmatprep.subr.bf16.mxu0 %v220
    %518 = vmatpush1.bf16.msra.mxu0 %v219
    %519 = vmatprep.subr.bf16.mxu0 %v222
    %520 = vmatpush1.bf16.msra.mxu0 %v221
    %521 = vmatprep.subr.bf16.mxu0 0
    %522 = vmatpush1.bf16.msra.mxu0 0
    %523 = vmatprep.subr.bf16.mxu0 0
    %524 = vmatpush1.bf16.msra.mxu0 0
    %525 = vmatprep.subr.bf16.mxu0 0
    %526 = vmatpush1.bf16.msra.mxu0 0
    %527 = vmatprep.subr.bf16.mxu0 0
    %528 = vmatpush1.bf16.msra.mxu0 0
    %529 = vmatprep.subr.bf16.mxu0 0
    %530 = vmatpush1.bf16.msra.mxu0 0
    %531 = vmatprep.subr.bf16.mxu0 0
    %532 = vmatpush1.bf16.msra.mxu0 0
    %533 = vmatprep.subr.bf16.mxu0 0
    %534 = vmatpush1.bf16.msra.mxu0 0
    %535 = vmatprep.subr.bf16.mxu0 0
    %536 = vmatpush1.bf16.msra.mxu0 0
    %537 = vmatprep.subr.bf16.mxu0 0
    %538 = vmatpush1.bf16.msra.mxu0 0
    %539 = vmatprep.subr.bf16.mxu0 0
    %540 = vmatpush1.bf16.msra.mxu0 0
    %541 = vmatprep.subr.bf16.mxu0 0
    %542 = vmatpush1.bf16.msra.mxu0 0
    %543 = vmatprep.subr.bf16.mxu0 0
    %544 = vmatpush1.bf16.msra.mxu0 0
    %545 = vmatprep.mubr.bf16.mxu0 0
    %546 = vmatmul.mubr.bf16.gmra.mrb[0].mxu0 %v511
    %v547 = vpop.f32.mrb[0].mxu0
    %v548 = vadd.f32 %v506, %v547
    %v549 = vpop.f32.mrb[0].mxu0
    %v550 = vadd.f32 %v507, %v549
    %v551 = vpop.f32.mrb[0].mxu0
    %v552 = vpop.f32.mrb[0].mxu0
    %553 = vdwg.mxu0
    %v554 = vld [vmem:[#allocation3 + $0x10] sm:$0x3]
    %v555 = vld [vmem:[#allocation3 + $0x18] sm:$0x3]
    %v556 = vadd.f32 %v548, %v554
    %v557 = vadd.f32 %v550, %v555
    %v558 = vsub.f32 0.0, %v556
    %v559 = vmul.f32 %v558, 1.442695
    %v560 = vpow.pop %v559
    %v561 = vadd.f32 %v560, 1.0
    %v562 = vrcp.pop %v561
    %v563 = vtanh.pop %v557
    %v564 = vsub.f32 0.0, %v557
    %v565 = vmul.f32 %v564, 1.442695
    %v566 = vpow.pop %v565
    %v567 = vadd.f32 %v566, 1.0
    %v568 = vrcp.pop %v567
    %v569 = vmul.f32 %v562, %v489
    %v570 = vmul.f32 %v562, %v563
    %572 = vrot.lane.b32.xlu0 %v570, 64
    %v573 = vpop.permute.xlu0 %572
    %v575 = vadd.f32 %v569, %v573
    %v576 = vtanh.pop %v575
    %v577 = vmul.f32 %v568, %v576
    %579 = vrot.lane.b32.xlu0 %v577, 64
    %v580 = vpop.permute.xlu0 %579
    %582 = vst.msk [vmem:[#allocation4 + $0x6] sm:$0x3] %vm310, %v580
    %583 = vst.msk [vmem:[#allocation4 + $0x8] sm:$0x3] %vm312, %v580
    %v584 = vpack.c.bf16 %v577, %v577
    %v585 = vld [vmem:[#allocation2 + $0x10] sm:$0x3]
    %v586 = vld [vmem:[#allocation2 + $0x18] sm:$0x3]
    %588 = vrot.lane.b32.xlu0 %v584, 64
    %v589 = vpop.permute.xlu0 %588
    %v591 = vsel %vm231, %v589, 0
    %593 = vmatprep.subr.bf16.mxu0 %v216
    %594 = vmatpush1.bf16.msra.mxu0 %v215
    %595 = vmatprep.subr.bf16.mxu0 %v218
    %596 = vmatpush1.bf16.msra.mxu0 %v217
    %597 = vmatprep.subr.bf16.mxu0 %v220
    %598 = vmatpush1.bf16.msra.mxu0 %v219
    %599 = vmatprep.subr.bf16.mxu0 %v222
    %600 = vmatpush1.bf16.msra.mxu0 %v221
    %601 = vmatprep.subr.bf16.mxu0 0
    %602 = vmatpush1.bf16.msra.mxu0 0
    %603 = vmatprep.subr.bf16.mxu0 0
    %604 = vmatpush1.bf16.msra.mxu0 0
    %605 = vmatprep.subr.bf16.mxu0 0
    %606 = vmatpush1.bf16.msra.mxu0 0
    %607 = vmatprep.subr.bf16.mxu0 0
    %608 = vmatpush1.bf16.msra.mxu0 0
    %609 = vmatprep.subr.bf16.mxu0 0
    %610 = vmatpush1.bf16.msra.mxu0 0
    %611 = vmatprep.subr.bf16.mxu0 0
    %612 = vmatpush1.bf16.msra.mxu0 0
    %613 = vmatprep.subr.bf16.mxu0 0
    %614 = vmatpush1.bf16.msra.mxu0 0
    %615 = vmatprep.subr.bf16.mxu0 0
    %616 = vmatpush1.bf16.msra.mxu0 0
    %617 = vmatprep.subr.bf16.mxu0 0
    %618 = vmatpush1.bf16.msra.mxu0 0
    %619 = vmatprep.subr.bf16.mxu0 0
    %620 = vmatpush1.bf16.msra.mxu0 0
    %621 = vmatprep.subr.bf16.mxu0 0
    %622 = vmatpush1.bf16.msra.mxu0 0
    %623 = vmatprep.subr.bf16.mxu0 0
    %624 = vmatpush1.bf16.msra.mxu0 0
    %625 = vmatprep.mubr.bf16.mxu0 0
    %626 = vmatmul.mubr.bf16.gmra.mrb[0].mxu0 %v591
    %v627 = vpop.f32.mrb[0].mxu0
    %v628 = vadd.f32 %v585, %v627
    %v629 = vpop.f32.mrb[0].mxu0
    %v630 = vadd.f32 %v586, %v629
    %v631 = vpop.f32.mrb[0].mxu0
    %v632 = vpop.f32.mrb[0].mxu0
    %633 = vdwg.mxu0
    %v634 = vld [vmem:[#allocation3] sm:$0xc0]
    %v635 = vld [vmem:[#allocation3 + $0x8] sm:$0xc0]
    %v638 = vrot.slane %v634, 6
    %v639 = vrot.slane %v635, 6
    %v642 = vadd.f32 %v628, %v638
    %v643 = vadd.f32 %v630, %v639
    %v644 = vsub.f32 0.0, %v642
    %v645 = vmul.f32 %v644, 1.442695
    %v646 = vpow.pop %v645
    %v647 = vadd.f32 %v646, 1.0
    %v648 = vrcp.pop %v647
    %v649 = vtanh.pop %v643
    %v650 = vsub.f32 0.0, %v643
    %v651 = vmul.f32 %v650, 1.442695
    %v652 = vpow.pop %v651
    %v653 = vadd.f32 %v652, 1.0
    %v654 = vrcp.pop %v653
    %v655 = vmul.f32 %v648, %v575
    %v656 = vmul.f32 %v648, %v649
    %658 = vrot.lane.b32.xlu0 %v656, 64
    %v659 = vpop.permute.xlu0 %658
    %v661 = vadd.f32 %v655, %v659
    %v662 = vtanh.pop %v661
    %v663 = vmul.f32 %v654, %v662
    %665 = vrot.lane.b32.xlu0 %v663, 64
    %v666 = vpop.permute.xlu0 %665
    %668 = vst.msk [vmem:[#allocation4 + $0x8] sm:$0x3] %vm310, %v666
    %669 = vst.msk [vmem:[#allocation4 + $0x6] sm:$0x3] %vm312, %v666
    %v670 = vpack.c.bf16 %v663, %v663
    %v671 = vld [vmem:[#allocation2 + $0x10] sm:$0xc]
    %v672 = vld [vmem:[#allocation2 + $0x18] sm:$0xc]
    %674 = vrot.lane.b32.xlu0 %v670, 64
    %v675 = vpop.permute.xlu0 %674
    %v678 = vrot.slane %v671, 2
    %v679 = vrot.slane %v672, 2
    %v683 = vsel %vm231, %v675, 0
    %685 = vmatprep.subr.bf16.mxu0 %v216
    %686 = vmatpush1.bf16.msra.mxu0 %v215
    %687 = vmatprep.subr.bf16.mxu0 %v218
    %688 = vmatpush1.bf16.msra.mxu0 %v217
    %689 = vmatprep.subr.bf16.mxu0 %v220
    %690 = vmatpush1.bf16.msra.mxu0 %v219
    %691 = vmatprep.subr.bf16.mxu0 %v222
    %692 = vmatpush1.bf16.msra.mxu0 %v221
    %693 = vmatprep.subr.bf16.mxu0 0
    %694 = vmatpush1.bf16.msra.mxu0 0
    %695 = vmatprep.subr.bf16.mxu0 0
    %696 = vmatpush1.bf16.msra.mxu0 0
    %697 = vmatprep.subr.bf16.mxu0 0
    %698 = vmatpush1.bf16.msra.mxu0 0
    %699 = vmatprep.subr.bf16.mxu0 0
    %700 = vmatpush1.bf16.msra.mxu0 0
    %701 = vmatprep.subr.bf16.mxu0 0
    %702 = vmatpush1.bf16.msra.mxu0 0
    %703 = vmatprep.subr.bf16.mxu0 0
    %704 = vmatpush1.bf16.msra.mxu0 0
    %705 = vmatprep.subr.bf16.mxu0 0
    %706 = vmatpush1.bf16.msra.mxu0 0
    %707 = vmatprep.subr.bf16.mxu0 0
    %708 = vmatpush1.bf16.msra.mxu0 0
    %709 = vmatprep.subr.bf16.mxu0 0
    %710 = vmatpush1.bf16.msra.mxu0 0
    %711 = vmatprep.subr.bf16.mxu0 0
    %712 = vmatpush1.bf16.msra.mxu0 0
    %713 = vmatprep.subr.bf16.mxu0 0
    %714 = vmatpush1.bf16.msra.mxu0 0
    %715 = vmatprep.subr.bf16.mxu0 0
    %716 = vmatpush1.bf16.msra.mxu0 0
    %717 = vmatprep.mubr.bf16.mxu0 0
    %718 = vmatmul.mubr.bf16.gmra.mrb[0].mxu0 %v683
    %v719 = vpop.f32.mrb[0].mxu0
    %v720 = vadd.f32 %v678, %v719
    %v721 = vpop.f32.mrb[0].mxu0
    %v722 = vadd.f32 %v679, %v721
    %v723 = vpop.f32.mrb[0].mxu0
    %v724 = vpop.f32.mrb[0].mxu0
    %725 = vdwg.mxu0
    %v726 = vld [vmem:[#allocation3] sm:$0x30]
    %v727 = vld [vmem:[#allocation3 + $0x8] sm:$0x30]
    %v730 = vrot.slane %v726, 4
    %v731 = vrot.slane %v727, 4
    %v734 = vadd.f32 %v720, %v730
    %v735 = vadd.f32 %v722, %v731
    %v736 = vsub.f32 0.0, %v734
    %v737 = vmul.f32 %v736, 1.442695
    %v738 = vpow.pop %v737
    %v739 = vadd.f32 %v738, 1.0
    %v740 = vrcp.pop %v739
    %v741 = vtanh.pop %v735
    %v742 = vsub.f32 0.0, %v735
    %v743 = vmul.f32 %v742, 1.442695
    %v744 = vpow.pop %v743
    %v745 = vadd.f32 %v744, 1.0
    %v746 = vrcp.pop %v745
    %v747 = vmul.f32 %v740, %v661
    %v748 = vmul.f32 %v740, %v741
    %750 = vrot.lane.b32.xlu0 %v748, 64
    %v751 = vpop.permute.xlu0 %750
    %v753 = vadd.f32 %v747, %v751
    %v754 = vtanh.pop %v753
    %v755 = vmul.f32 %v746, %v754
    %757 = vrot.lane.b32.xlu0 %v755, 64
    %v758 = vpop.permute.xlu0 %757
    %760 = vst.msk [vmem:[#allocation4 + $0xa] sm:$0x3] %vm310, %v758
    %761 = vst.msk [vmem:[#allocation4 + $0x4] sm:$0x3] %vm312, %v758
    %v762 = vpack.c.bf16 %v755, %v755
    %v763 = vld [vmem:[#allocation2 + $0x10] sm:$0x30]
    %v764 = vld [vmem:[#allocation2 + $0x18] sm:$0x30]
    %766 = vrot.lane.b32.xlu0 %v762, 64
    %v767 = vpop.permute.xlu0 %766
    %v770 = vrot.slane %v763, 4
    %v771 = vrot.slane %v764, 4
    %v775 = vsel %vm231, %v767, 0
    %777 = vmatprep.subr.bf16.mxu0 %v216
    %778 = vmatpush1.bf16.msra.mxu0 %v215
    %779 = vmatprep.subr.bf16.mxu0 %v218
    %780 = vmatpush1.bf16.msra.mxu0 %v217
    %781 = vmatprep.subr.bf16.mxu0 %v220
    %782 = vmatpush1.bf16.msra.mxu0 %v219
    %783 = vmatprep.subr.bf16.mxu0 %v222
    %784 = vmatpush1.bf16.msra.mxu0 %v221
    %785 = vmatprep.subr.bf16.mxu0 0
    %786 = vmatpush1.bf16.msra.mxu0 0
    %787 = vmatprep.subr.bf16.mxu0 0
    %788 = vmatpush1.bf16.msra.mxu0 0
    %789 = vmatprep.subr.bf16.mxu0 0
    %790 = vmatpush1.bf16.msra.mxu0 0
    %791 = vmatprep.subr.bf16.mxu0 0
    %792 = vmatpush1.bf16.msra.mxu0 0
    %793 = vmatprep.subr.bf16.mxu0 0
    %794 = vmatpush1.bf16.msra.mxu0 0
    %795 = vmatprep.subr.bf16.mxu0 0
    %796 = vmatpush1.bf16.msra.mxu0 0
    %797 = vmatprep.subr.bf16.mxu0 0
    %798 = vmatpush1.bf16.msra.mxu0 0
    %799 = vmatprep.subr.bf16.mxu0 0
    %800 = vmatpush1.bf16.msra.mxu0 0
    %801 = vmatprep.subr.bf16.mxu0 0
    %802 = vmatpush1.bf16.msra.mxu0 0
    %803 = vmatprep.subr.bf16.mxu0 0
    %804 = vmatpush1.bf16.msra.mxu0 0
    %805 = vmatprep.subr.bf16.mxu0 0
    %806 = vmatpush1.bf16.msra.mxu0 0
    %807 = vmatprep.subr.bf16.mxu0 0
    %808 = vmatpush1.bf16.msra.mxu0 0
    %809 = vmatprep.mubr.bf16.mxu0 0
    %810 = vmatmul.mubr.bf16.gmra.mrb[0].mxu0 %v775
    %v811 = vpop.f32.mrb[0].mxu0
    %v812 = vadd.f32 %v770, %v811
    %v813 = vpop.f32.mrb[0].mxu0
    %v814 = vadd.f32 %v771, %v813
    %v815 = vpop.f32.mrb[0].mxu0
    %v816 = vpop.f32.mrb[0].mxu0
    %817 = vdwg.mxu0
    %v818 = vld [vmem:[#allocation3] sm:$0xc]
    %v819 = vld [vmem:[#allocation3 + $0x8] sm:$0xc]
    %v822 = vrot.slane %v818, 2
    %v823 = vrot.slane %v819, 2
    %v826 = vadd.f32 %v812, %v822
    %v827 = vadd.f32 %v814, %v823
    %v828 = vsub.f32 0.0, %v826
    %v829 = vmul.f32 %v828, 1.442695
    %v830 = vpow.pop %v829
    %v831 = vadd.f32 %v830, 1.0
    %v832 = vrcp.pop %v831
    %v833 = vtanh.pop %v827
    %v834 = vsub.f32 0.0, %v827
    %v835 = vmul.f32 %v834, 1.442695
    %v836 = vpow.pop %v835
    %v837 = vadd.f32 %v836, 1.0
    %v838 = vrcp.pop %v837
    %v839 = vmul.f32 %v832, %v753
    %v840 = vmul.f32 %v832, %v833
    %842 = vrot.lane.b32.xlu0 %v840, 64
    %v843 = vpop.permute.xlu0 %842
    %v845 = vadd.f32 %v839, %v843
    %v846 = vtanh.pop %v845
    %v847 = vmul.f32 %v838, %v846
    %849 = vrot.lane.b32.xlu0 %v847, 64
    %v850 = vpop.permute.xlu0 %849
    %852 = vst.msk [vmem:[#allocation4 + $0xc] sm:$0x3] %vm310, %v850
    %853 = vst.msk [vmem:[#allocation4 + $0x2] sm:$0x3] %vm312, %v850
    %v854 = vpack.c.bf16 %v847, %v847
    %v855 = vld [vmem:[#allocation2 + $0x10] sm:$0xc0]
    %v856 = vld [vmem:[#allocation2 + $0x18] sm:$0xc0]
    %858 = vrot.lane.b32.xlu0 %v854, 64
    %v859 = vpop.permute.xlu0 %858
    %v862 = vrot.slane %v855, 6
    %v863 = vrot.slane %v856, 6
    %v867 = vsel %vm231, %v859, 0
    %869 = vmatprep.subr.bf16.mxu0 %v216
    %870 = vmatpush1.bf16.msra.mxu0 %v215
    %871 = vmatprep.subr.bf16.mxu0 %v218
    %872 = vmatpush1.bf16.msra.mxu0 %v217
    %873 = vmatprep.subr.bf16.mxu0 %v220
    %874 = vmatpush1.bf16.msra.mxu0 %v219
    %875 = vmatprep.subr.bf16.mxu0 %v222
    %876 = vmatpush1.bf16.msra.mxu0 %v221
    %877 = vmatprep.subr.bf16.mxu0 0
    %878 = vmatpush1.bf16.msra.mxu0 0
    %879 = vmatprep.subr.bf16.mxu0 0
    %880 = vmatpush1.bf16.msra.mxu0 0
    %881 = vmatprep.subr.bf16.mxu0 0
    %882 = vmatpush1.bf16.msra.mxu0 0
    %883 = vmatprep.subr.bf16.mxu0 0
    %884 = vmatpush1.bf16.msra.mxu0 0
    %885 = vmatprep.subr.bf16.mxu0 0
    %886 = vmatpush1.bf16.msra.mxu0 0
    %887 = vmatprep.subr.bf16.mxu0 0
    %888 = vmatpush1.bf16.msra.mxu0 0
    %889 = vmatprep.subr.bf16.mxu0 0
    %890 = vmatpush1.bf16.msra.mxu0 0
    %891 = vmatprep.subr.bf16.mxu0 0
    %892 = vmatpush1.bf16.msra.mxu0 0
    %893 = vmatprep.subr.bf16.mxu0 0
    %894 = vmatpush1.bf16.msra.mxu0 0
    %895 = vmatprep.subr.bf16.mxu0 0
    %896 = vmatpush1.bf16.msra.mxu0 0
    %897 = vmatprep.subr.bf16.mxu0 0
    %898 = vmatpush1.bf16.msra.mxu0 0
    %899 = vmatprep.subr.bf16.mxu0 0
    %900 = vmatpush1.bf16.msra.mxu0 0
    %901 = vmatprep.mubr.bf16.mxu0 0
    %902 = vmatmul.mubr.bf16.gmra.mrb[0].mxu0 %v867
    %v903 = vpop.f32.mrb[0].mxu0
    %v904 = vadd.f32 %v862, %v903
    %v905 = vpop.f32.mrb[0].mxu0
    %v906 = vadd.f32 %v863, %v905
    %v907 = vpop.f32.mrb[0].mxu0
    %v908 = vpop.f32.mrb[0].mxu0
    %909 = vdwg.mxu0
    %v910 = vld [vmem:[#allocation3] sm:$0x3]
    %v911 = vld [vmem:[#allocation3 + $0x8] sm:$0x3]
    %v912 = vadd.f32 %v904, %v910
    %v913 = vadd.f32 %v906, %v911
    %v914 = vsub.f32 0.0, %v912
    %v915 = vmul.f32 %v914, 1.442695
    %v916 = vpow.pop %v915
    %v917 = vadd.f32 %v916, 1.0
    %v918 = vrcp.pop %v917
    %v919 = vtanh.pop %v913
    %v920 = vsub.f32 0.0, %v913
    %v921 = vmul.f32 %v920, 1.442695
    %v922 = vpow.pop %v921
    %v923 = vadd.f32 %v922, 1.0
    %v924 = vrcp.pop %v923
    %v925 = vmul.f32 %v918, %v845
    %v926 = vmul.f32 %v918, %v919
    %928 = vrot.lane.b32.xlu0 %v926, 64
    %v929 = vpop.permute.xlu0 %928
    %v931 = vadd.f32 %v925, %v929
    %v932 = vtanh.pop %v931
    %v933 = vmul.f32 %v924, %v932
    %935 = vrot.lane.b32.xlu0 %v933, 64
    %v936 = vpop.permute.xlu0 %935
    %938 = vst.msk [vmem:[#allocation4 + $0xe] sm:$0x3] %vm310, %v936
    %939 = vst.msk [vmem:[#allocation4] sm:$0x3] %vm312, %v936
    %v940 = vld [vmem:[#allocation4] sm:$0xff]
    %v941 = vld [vmem:[#allocation4 + $0x8] sm:$0xff]
    %v942 = vpack.c.bf16 %v941, %v940
    %v943 = vld [vmem:[%s5] sm:$0xff]
    %v944 = vld [vmem:[%s5 + $0x8] sm:$0xff]
    %v945 = vld [vmem:[%s5 + $0x10] sm:$0xff]
    %v946 = vld [vmem:[%s5 + $0x18] sm:$0xff]
    %v947 = vld [vmem:[%s5 + $0x20] sm:$0xff]
    %v948 = vld [vmem:[%s5 + $0x28] sm:$0xff]
    %v949 = vld [vmem:[%s5 + $0x30] sm:$0xff]
    %v950 = vld [vmem:[%s5 + $0x38] sm:$0xff]
    %v951 = vld [vmem:[%s8] sm:$0x3]
    %v953 = vlaneseq
    %v954 = vshrl.u32 %v953, 7
    %v955 = vsub.s32 0, %v954
    %v956 = vrot.slane %v951, %v955
    %v957 = vlaneseq
    %v958 = vshrl.u32 %v957, 7
    %v959 = vsub.s32 1, %v958
    %v960 = vrot.slane %v951, %v959
    %v971 = vunpack.c.l.b16 %v943
    %v972 = vunpack.c.h.b16 %v943
    %v973 = vunpack.c.l.b16 %v944
    %v974 = vunpack.c.h.b16 %v944
    %v975 = vunpack.c.l.b16 %v945
    %v976 = vunpack.c.h.b16 %v945
    %v977 = vunpack.c.l.b16 %v946
    %v978 = vunpack.c.h.b16 %v946
    %v979 = vunpack.c.l.b16 %v947
    %v980 = vunpack.c.h.b16 %v947
    %v981 = vunpack.c.l.b16 %v948
    %v982 = vunpack.c.h.b16 %v948
    %v983 = vunpack.c.l.b16 %v949
    %v984 = vunpack.c.h.b16 %v949
    %v985 = vunpack.c.l.b16 %v950
    %v986 = vunpack.c.h.b16 %v950
    %v987 = vpack.c.b16 %v973, %v971
    %v988 = vpack.c.b16 %v974, %v972
    %v989 = vpack.c.b16 %v977, %v975
    %v990 = vpack.c.b16 %v978, %v976
    %v991 = vpack.c.b16 %v981, %v979
    %v992 = vpack.c.b16 %v982, %v980
    %v993 = vpack.c.b16 %v985, %v983
    %v994 = vpack.c.b16 %v986, %v984
    %v1004 = vsel %vm231, %v942, 0
    %1006 = vmatprep.subr.bf16.mxu0 %v988
    %1007 = vmatpush1.bf16.msra.mxu0 %v987
    %1008 = vmatprep.subr.bf16.mxu0 %v990
    %1009 = vmatpush1.bf16.msra.mxu0 %v989
    %1010 = vmatprep.subr.bf16.mxu0 %v992
    %1011 = vmatpush1.bf16.msra.mxu0 %v991
    %1012 = vmatprep.subr.bf16.mxu0 %v994
    %1013 = vmatpush1.bf16.msra.mxu0 %v993
    %1014 = vmatprep.subr.bf16.mxu0 0
    %1015 = vmatpush1.bf16.msra.mxu0 0
    %1016 = vmatprep.subr.bf16.mxu0 0
    %1017 = vmatpush1.bf16.msra.mxu0 0
    %1018 = vmatprep.subr.bf16.mxu0 0
    %1019 = vmatpush1.bf16.msra.mxu0 0
    %1020 = vmatprep.subr.bf16.mxu0 0
    %1021 = vmatpush1.bf16.msra.mxu0 0
    %1022 = vmatprep.subr.bf16.mxu0 0
    %1023 = vmatpush1.bf16.msra.mxu0 0
    %1024 = vmatprep.subr.bf16.mxu0 0
    %1025 = vmatpush1.bf16.msra.mxu0 0
    %1026 = vmatprep.subr.bf16.mxu0 0
    %1027 = vmatpush1.bf16.msra.mxu0 0
    %1028 = vmatprep.subr.bf16.mxu0 0
    %1029 = vmatpush1.bf16.msra.mxu0 0
    %1030 = vmatprep.subr.bf16.mxu0 0
    %1031 = vmatpush1.bf16.msra.mxu0 0
    %1032 = vmatprep.subr.bf16.mxu0 0
    %1033 = vmatpush1.bf16.msra.mxu0 0
    %1034 = vmatprep.subr.bf16.mxu0 0
    %1035 = vmatpush1.bf16.msra.mxu0 0
    %1036 = vmatprep.subr.bf16.mxu0 0
    %1037 = vmatpush1.bf16.msra.mxu0 0
    %1038 = vmatprep.mubr.bf16.mxu0 0
    %1039 = vmatmul.mubr.bf16.gmra.mrb[0].mxu0 %v1004
    %v1040 = vpop.f32.mrb[0].mxu0
    %v1041 = vadd.f32 %v956, %v1040
    %v1042 = vpop.f32.mrb[0].mxu0
    %v1043 = vadd.f32 %v960, %v1042
    %v1044 = vpop.f32.mrb[0].mxu0
    %v1045 = vadd.f32 %v956, %v1044
    %v1046 = vpop.f32.mrb[0].mxu0
    %v1047 = vadd.f32 %v960, %v1046
    %1048 = vdwg.mxu0
    %1049 = vst [vmem:[#allocation2] sm:$0xff] %v1041
    %1050 = vst [vmem:[#allocation2 + $0x8] sm:$0xff] %v1043
    %1051 = vst [vmem:[#allocation2 + $0x10] sm:$0xff] %v1045
    %1052 = vst [vmem:[#allocation2 + $0x18] sm:$0xff] %v1047
    %v1053 = vld [vmem:[%s6] sm:$0xff]
    %v1054 = vld [vmem:[%s6 + $0x8] sm:$0xff]
    %v1055 = vld [vmem:[%s6 + $0x10] sm:$0xff]
    %v1056 = vld [vmem:[%s6 + $0x18] sm:$0xff]
    %v1057 = vld [vmem:[%s6 + $0x20] sm:$0xff]
    %v1058 = vld [vmem:[%s6 + $0x28] sm:$0xff]
    %v1059 = vld [vmem:[%s6 + $0x30] sm:$0xff]
    %v1060 = vld [vmem:[%s6 + $0x38] sm:$0xff]
    %v1069 = vunpack.c.l.b16 %v1053
    %v1070 = vunpack.c.h.b16 %v1053
    %v1071 = vunpack.c.l.b16 %v1054
    %v1072 = vunpack.c.h.b16 %v1054
    %v1073 = vunpack.c.l.b16 %v1055
    %v1074 = vunpack.c.h.b16 %v1055
    %v1075 = vunpack.c.l.b16 %v1056
    %v1076 = vunpack.c.h.b16 %v1056
    %v1077 = vunpack.c.l.b16 %v1057
    %v1078 = vunpack.c.h.b16 %v1057
    %v1079 = vunpack.c.l.b16 %v1058
    %v1080 = vunpack.c.h.b16 %v1058
    %v1081 = vunpack.c.l.b16 %v1059
    %v1082 = vunpack.c.h.b16 %v1059
    %v1083 = vunpack.c.l.b16 %v1060
    %v1084 = vunpack.c.h.b16 %v1060
    %v1085 = vpack.c.b16 %v1071, %v1069
    %v1086 = vpack.c.b16 %v1072, %v1070
    %v1087 = vpack.c.b16 %v1075, %v1073
    %v1088 = vpack.c.b16 %v1076, %v1074
    %v1089 = vpack.c.b16 %v1079, %v1077
    %v1090 = vpack.c.b16 %v1080, %v1078
    %v1091 = vpack.c.b16 %v1083, %v1081
    %v1092 = vpack.c.b16 %v1084, %v1082
    %1101 = vmatprep.subr.bf16.mxu0 %v1086
    %1102 = vmatpush1.bf16.msra.mxu0 %v1085
    %1103 = vmatprep.subr.bf16.mxu0 %v1088
    %1104 = vmatpush1.bf16.msra.mxu0 %v1087
    %1105 = vmatprep.subr.bf16.mxu0 %v1090
    %1106 = vmatpush1.bf16.msra.mxu0 %v1089
    %1107 = vmatprep.subr.bf16.mxu0 %v1092
    %1108 = vmatpush1.bf16.msra.mxu0 %v1091
    %1109 = vmatprep.subr.bf16.mxu0 0
    %1110 = vmatpush1.bf16.msra.mxu0 0
    %1111 = vmatprep.subr.bf16.mxu0 0
    %1112 = vmatpush1.bf16.msra.mxu0 0
    %1113 = vmatprep.subr.bf16.mxu0 0
    %1114 = vmatpush1.bf16.msra.mxu0 0
    %1115 = vmatprep.subr.bf16.mxu0 0
    %1116 = vmatpush1.bf16.msra.mxu0 0
    %1117 = vmatprep.subr.bf16.mxu0 0
    %1118 = vmatpush1.bf16.msra.mxu0 0
    %1119 = vmatprep.subr.bf16.mxu0 0
    %1120 = vmatpush1.bf16.msra.mxu0 0
    %1121 = vmatprep.subr.bf16.mxu0 0
    %1122 = vmatpush1.bf16.msra.mxu0 0
    %1123 = vmatprep.subr.bf16.mxu0 0
    %1124 = vmatpush1.bf16.msra.mxu0 0
    %1125 = vmatprep.subr.bf16.mxu0 0
    %1126 = vmatpush1.bf16.msra.mxu0 0
    %1127 = vmatprep.subr.bf16.mxu0 0
    %1128 = vmatpush1.bf16.msra.mxu0 0
    %1129 = vmatprep.subr.bf16.mxu0 0
    %1130 = vmatpush1.bf16.msra.mxu0 0
    %1131 = vmatprep.subr.bf16.mxu0 0
    %1132 = vmatpush1.bf16.msra.mxu0 0
    %1133 = vmatprep.mubr.bf16.mxu0 0
    %1134 = vmatmul.mubr.bf16.gmra.mrb[0].mxu0 %v1004
    %v1135 = vpop.f32.mrb[0].mxu0
    %v1136 = vadd.f32 0.0, %v1135
    %v1137 = vpop.f32.mrb[0].mxu0
    %v1138 = vadd.f32 0.0, %v1137
    %v1139 = vpop.f32.mrb[0].mxu0
    %v1140 = vadd.f32 0.0, %v1139
    %v1141 = vpop.f32.mrb[0].mxu0
    %v1142 = vadd.f32 0.0, %v1141
    %1143 = vdwg.mxu0
    %1144 = vst [vmem:[#allocation3] sm:$0xff] %v1136
    %1145 = vst [vmem:[#allocation3 + $0x8] sm:$0xff] %v1138
    %1146 = vst [vmem:[#allocation3 + $0x10] sm:$0xff] %v1140
    %1147 = vst [vmem:[#allocation3 + $0x18] sm:$0xff] %v1142
    %v1148 = vld [vmem:[%s7] sm:$0xff]
    %v1149 = vld [vmem:[%s7 + $0x8] sm:$0xff]
    %v1150 = vld [vmem:[%s7 + $0x10] sm:$0xff]
    %v1151 = vld [vmem:[%s7 + $0x18] sm:$0xff]
    %v1152 = vld [vmem:[%s7 + $0x20] sm:$0xff]
    %v1153 = vld [vmem:[%s7 + $0x28] sm:$0xff]
    %v1154 = vld [vmem:[%s7 + $0x30] sm:$0xff]
    %v1155 = vld [vmem:[%s7 + $0x38] sm:$0xff]
    %v1156 = vld [vmem:[#allocation2] sm:$0x3]
    %v1157 = vld [vmem:[#allocation2 + $0x8] sm:$0x3]
    %v1166 = vunpack.c.l.b16 %v1148
    %v1167 = vunpack.c.h.b16 %v1148
    %v1168 = vunpack.c.l.b16 %v1149
    %v1169 = vunpack.c.h.b16 %v1149
    %v1170 = vunpack.c.l.b16 %v1150
    %v1171 = vunpack.c.h.b16 %v1150
    %v1172 = vunpack.c.l.b16 %v1151
    %v1173 = vunpack.c.h.b16 %v1151
    %v1174 = vunpack.c.l.b16 %v1152
    %v1175 = vunpack.c.h.b16 %v1152
    %v1176 = vunpack.c.l.b16 %v1153
    %v1177 = vunpack.c.h.b16 %v1153
    %v1178 = vunpack.c.l.b16 %v1154
    %v1179 = vunpack.c.h.b16 %v1154
    %v1180 = vunpack.c.l.b16 %v1155
    %v1181 = vunpack.c.h.b16 %v1155
    %v1182 = vpack.c.b16 %v1168, %v1166
    %v1183 = vpack.c.b16 %v1169, %v1167
    %v1184 = vpack.c.b16 %v1172, %v1170
    %v1185 = vpack.c.b16 %v1173, %v1171
    %v1186 = vpack.c.b16 %v1176, %v1174
    %v1187 = vpack.c.b16 %v1177, %v1175
    %v1188 = vpack.c.b16 %v1180, %v1178
    %v1189 = vpack.c.b16 %v1181, %v1179
    %1198 = vmatprep.subr.bf16.mxu0 %v1183
    %1199 = vmatpush1.bf16.msra.mxu0 %v1182
    %1200 = vmatprep.subr.bf16.mxu0 %v1185
    %1201 = vmatpush1.bf16.msra.mxu0 %v1184
    %1202 = vmatprep.subr.bf16.mxu0 %v1187
    %1203 = vmatpush1.bf16.msra.mxu0 %v1186
    %1204 = vmatprep.subr.bf16.mxu0 %v1189
    %1205 = vmatpush1.bf16.msra.mxu0 %v1188
    %1206 = vmatprep.subr.bf16.mxu0 0
    %1207 = vmatpush1.bf16.msra.mxu0 0
    %1208 = vmatprep.subr.bf16.mxu0 0
    %1209 = vmatpush1.bf16.msra.mxu0 0
    %1210 = vmatprep.subr.bf16.mxu0 0
    %1211 = vmatpush1.bf16.msra.mxu0 0
    %1212 = vmatprep.subr.bf16.mxu0 0
    %1213 = vmatpush1.bf16.msra.mxu0 0
    %1214 = vmatprep.subr.bf16.mxu0 0
    %1215 = vmatpush1.bf16.msra.mxu0 0
    %1216 = vmatprep.subr.bf16.mxu0 0
    %1217 = vmatpush1.bf16.msra.mxu0 0
    %1218 = vmatprep.subr.bf16.mxu0 0
    %1219 = vmatpush1.bf16.msra.mxu0 0
    %1220 = vmatprep.subr.bf16.mxu0 0
    %1221 = vmatpush1.bf16.msra.mxu0 0
    %1222 = vmatprep.subr.bf16.mxu0 0
    %1223 = vmatpush1.bf16.msra.mxu0 0
    %1224 = vmatprep.subr.bf16.mxu0 0
    %1225 = vmatpush1.bf16.msra.mxu0 0
    %1226 = vmatprep.subr.bf16.mxu0 0
    %1227 = vmatpush1.bf16.msra.mxu0 0
    %1228 = vmatprep.subr.bf16.mxu0 0
    %1229 = vmatpush1.bf16.msra.mxu0 0
    %1230 = vmatprep.mubr.bf16.mxu0 0
    %1231 = vmatmul.mubr.bf16.gmra.mrb[0].mxu0 %v233
    %v1232 = vpop.f32.mrb[0].mxu0
    %v1233 = vadd.f32 %v1156, %v1232
    %v1234 = vpop.f32.mrb[0].mxu0
    %v1235 = vadd.f32 %v1157, %v1234
    %v1236 = vpop.f32.mrb[0].mxu0
    %v1237 = vpop.f32.mrb[0].mxu0
    %1238 = vdwg.mxu0
    %v1239 = vld [vmem:[#allocation3 + $0x10] sm:$0xc0]
    %v1240 = vld [vmem:[#allocation3 + $0x18] sm:$0xc0]
    %v1243 = vrot.slane %v1239, 6
    %v1244 = vrot.slane %v1240, 6
    %v1247 = vadd.f32 %v1233, %v1243
    %v1248 = vadd.f32 %v1235, %v1244
    %v1249 = vsub.f32 0.0, %v1247
    %v1250 = vmul.f32 %v1249, 1.442695
    %v1251 = vpow.pop %v1250
    %v1252 = vadd.f32 %v1251, 1.0
    %v1253 = vrcp.pop %v1252
    %v1254 = vtanh.pop %v1248
    %v1255 = vsub.f32 0.0, %v1248
    %v1256 = vmul.f32 %v1255, 1.442695
    %v1257 = vpow.pop %v1256
    %v1258 = vadd.f32 %v1257, 1.0
    %v1259 = vrcp.pop %v1258
    %v1260 = vmul.f32 %v1253, 0.0
    %v1261 = vmul.f32 %v1253, %v1254
    %1263 = vrot.lane.b32.xlu0 %v1261, 64
    %v1264 = vpop.permute.xlu0 %1263
    %v1266 = vadd.f32 %v1260, %v1264
    %v1267 = vtanh.pop %v1266
    %v1268 = vmul.f32 %v1259, %v1267
    %1270 = vrot.lane.b32.xlu0 %v1268, 64
    %v1271 = vpop.permute.xlu0 %1270
    %1273 = vst.msk [vmem:[#allocation5] sm:$0x3] %vm310, %v1271
    %1274 = vst.msk [vmem:[#allocation5 + $0xe] sm:$0x3] %vm312, %v1271
    %v1275 = vpack.c.bf16 %v1268, %v1268
    %v1276 = vld [vmem:[#allocation2] sm:$0xc]
    %v1277 = vld [vmem:[#allocation2 + $0x8] sm:$0xc]
    %1279 = vrot.lane.b32.xlu0 %v1275, 64
    %v1280 = vpop.permute.xlu0 %1279
    %v1283 = vrot.slane %v1276, 2
    %v1284 = vrot.slane %v1277, 2
    %v1288 = vsel %vm231, %v1280, 0
    %1290 = vmatprep.subr.bf16.mxu0 %v1183
    %1291 = vmatpush1.bf16.msra.mxu0 %v1182
    %1292 = vmatprep.subr.bf16.mxu0 %v1185
    %1293 = vmatpush1.bf16.msra.mxu0 %v1184
    %1294 = vmatprep.subr.bf16.mxu0 %v1187
    %1295 = vmatpush1.bf16.msra.mxu0 %v1186
    %1296 = vmatprep.subr.bf16.mxu0 %v1189
    %1297 = vmatpush1.bf16.msra.mxu0 %v1188
    %1298 = vmatprep.subr.bf16.mxu0 0
    %1299 = vmatpush1.bf16.msra.mxu0 0
    %1300 = vmatprep.subr.bf16.mxu0 0
    %1301 = vmatpush1.bf16.msra.mxu0 0
    %1302 = vmatprep.subr.bf16.mxu0 0
    %1303 = vmatpush1.bf16.msra.mxu0 0
    %1304 = vmatprep.subr.bf16.mxu0 0
    %1305 = vmatpush1.bf16.msra.mxu0 0
    %1306 = vmatprep.subr.bf16.mxu0 0
    %1307 = vmatpush1.bf16.msra.mxu0 0
    %1308 = vmatprep.subr.bf16.mxu0 0
    %1309 = vmatpush1.bf16.msra.mxu0 0
    %1310 = vmatprep.subr.bf16.mxu0 0
    %1311 = vmatpush1.bf16.msra.mxu0 0
    %1312 = vmatprep.subr.bf16.mxu0 0
    %1313 = vmatpush1.bf16.msra.mxu0 0
    %1314 = vmatprep.subr.bf16.mxu0 0
    %1315 = vmatpush1.bf16.msra.mxu0 0
    %1316 = vmatprep.subr.bf16.mxu0 0
    %1317 = vmatpush1.bf16.msra.mxu0 0
    %1318 = vmatprep.subr.bf16.mxu0 0
    %1319 = vmatpush1.bf16.msra.mxu0 0
    %1320 = vmatprep.subr.bf16.mxu0 0
    %1321 = vmatpush1.bf16.msra.mxu0 0
    %1322 = vmatprep.mubr.bf16.mxu0 0
    %1323 = vmatmul.mubr.bf16.gmra.mrb[0].mxu0 %v1288
    %v1324 = vpop.f32.mrb[0].mxu0
    %v1325 = vadd.f32 %v1283, %v1324
    %v1326 = vpop.f32.mrb[0].mxu0
    %v1327 = vadd.f32 %v1284, %v1326
    %v1328 = vpop.f32.mrb[0].mxu0
    %v1329 = vpop.f32.mrb[0].mxu0
    %1330 = vdwg.mxu0
    %v1331 = vld [vmem:[#allocation3 + $0x10] sm:$0x30]
    %v1332 = vld [vmem:[#allocation3 + $0x18] sm:$0x30]
    %v1335 = vrot.slane %v1331, 4
    %v1336 = vrot.slane %v1332, 4
    %v1339 = vadd.f32 %v1325, %v1335
    %v1340 = vadd.f32 %v1327, %v1336
    %v1341 = vsub.f32 0.0, %v1339
    %v1342 = vmul.f32 %v1341, 1.442695
    %v1343 = vpow.pop %v1342
    %v1344 = vadd.f32 %v1343, 1.0
    %v1345 = vrcp.pop %v1344
    %v1346 = vtanh.pop %v1340
    %v1347 = vsub.f32 0.0, %v1340
    %v1348 = vmul.f32 %v1347, 1.442695
    %v1349 = vpow.pop %v1348
    %v1350 = vadd.f32 %v1349, 1.0
    %v1351 = vrcp.pop %v1350
    %v1352 = vmul.f32 %v1345, %v1266
    %v1353 = vmul.f32 %v1345, %v1346
    %1355 = vrot.lane.b32.xlu0 %v1353, 64
    %v1356 = vpop.permute.xlu0 %1355
    %v1358 = vadd.f32 %v1352, %v1356
    %v1359 = vtanh.pop %v1358
    %v1360 = vmul.f32 %v1351, %v1359
    %1362 = vrot.lane.b32.xlu0 %v1360, 64
    %v1363 = vpop.permute.xlu0 %1362
    %1365 = vst.msk [vmem:[#allocation5 + $0x2] sm:$0x3] %vm310, %v1363
    %1366 = vst.msk [vmem:[#allocation5 + $0xc] sm:$0x3] %vm312, %v1363
    %v1367 = vpack.c.bf16 %v1360, %v1360
    %v1368 = vld [vmem:[#allocation2] sm:$0x30]
    %v1369 = vld [vmem:[#allocation2 + $0x8] sm:$0x30]
    %1371 = vrot.lane.b32.xlu0 %v1367, 64
    %v1372 = vpop.permute.xlu0 %1371
    %v1375 = vrot.slane %v1368, 4
    %v1376 = vrot.slane %v1369, 4
    %v1380 = vsel %vm231, %v1372, 0
    %1382 = vmatprep.subr.bf16.mxu0 %v1183
    %1383 = vmatpush1.bf16.msra.mxu0 %v1182
    %1384 = vmatprep.subr.bf16.mxu0 %v1185
    %1385 = vmatpush1.bf16.msra.mxu0 %v1184
    %1386 = vmatprep.subr.bf16.mxu0 %v1187
    %1387 = vmatpush1.bf16.msra.mxu0 %v1186
    %1388 = vmatprep.subr.bf16.mxu0 %v1189
    %1389 = vmatpush1.bf16.msra.mxu0 %v1188
    %1390 = vmatprep.subr.bf16.mxu0 0
    %1391 = vmatpush1.bf16.msra.mxu0 0
    %1392 = vmatprep.subr.bf16.mxu0 0
    %1393 = vmatpush1.bf16.msra.mxu0 0
    %1394 = vmatprep.subr.bf16.mxu0 0
    %1395 = vmatpush1.bf16.msra.mxu0 0
    %1396 = vmatprep.subr.bf16.mxu0 0
    %1397 = vmatpush1.bf16.msra.mxu0 0
    %1398 = vmatprep.subr.bf16.mxu0 0
    %1399 = vmatpush1.bf16.msra.mxu0 0
    %1400 = vmatprep.subr.bf16.mxu0 0
    %1401 = vmatpush1.bf16.msra.mxu0 0
    %1402 = vmatprep.subr.bf16.mxu0 0
    %1403 = vmatpush1.bf16.msra.mxu0 0
    %1404 = vmatprep.subr.bf16.mxu0 0
    %1405 = vmatpush1.bf16.msra.mxu0 0
    %1406 = vmatprep.subr.bf16.mxu0 0
    %1407 = vmatpush1.bf16.msra.mxu0 0
    %1408 = vmatprep.subr.bf16.mxu0 0
    %1409 = vmatpush1.bf16.msra.mxu0 0
    %1410 = vmatprep.subr.bf16.mxu0 0
    %1411 = vmatpush1.bf16.msra.mxu0 0
    %1412 = vmatprep.subr.bf16.mxu0 0
    %1413 = vmatpush1.bf16.msra.mxu0 0
    %1414 = vmatprep.mubr.bf16.mxu0 0
    %1415 = vmatmul.mubr.bf16.gmra.mrb[0].mxu0 %v1380
    %v1416 = vpop.f32.mrb[0].mxu0
    %v1417 = vadd.f32 %v1375, %v1416
    %v1418 = vpop.f32.mrb[0].mxu0
    %v1419 = vadd.f32 %v1376, %v1418
    %v1420 = vpop.f32.mrb[0].mxu0
    %v1421 = vpop.f32.mrb[0].mxu0
    %1422 = vdwg.mxu0
    %v1423 = vld [vmem:[#allocation3 + $0x10] sm:$0xc]
    %v1424 = vld [vmem:[#allocation3 + $0x18] sm:$0xc]
    %v1427 = vrot.slane %v1423, 2
    %v1428 = vrot.slane %v1424, 2
    %v1431 = vadd.f32 %v1417, %v1427
    %v1432 = vadd.f32 %v1419, %v1428
    %v1433 = vsub.f32 0.0, %v1431
    %v1434 = vmul.f32 %v1433, 1.442695
    %v1435 = vpow.pop %v1434
    %v1436 = vadd.f32 %v1435, 1.0
    %v1437 = vrcp.pop %v1436
    %v1438 = vtanh.pop %v1432
    %v1439 = vsub.f32 0.0, %v1432
    %v1440 = vmul.f32 %v1439, 1.442695
    %v1441 = vpow.pop %v1440
    %v1442 = vadd.f32 %v1441, 1.0
    %v1443 = vrcp.pop %v1442
    %v1444 = vmul.f32 %v1437, %v1358
    %v1445 = vmul.f32 %v1437, %v1438
    %1447 = vrot.lane.b32.xlu0 %v1445, 64
    %v1448 = vpop.permute.xlu0 %1447
    %v1450 = vadd.f32 %v1444, %v1448
    %v1451 = vtanh.pop %v1450
    %v1452 = vmul.f32 %v1443, %v1451
    %1454 = vrot.lane.b32.xlu0 %v1452, 64
    %v1455 = vpop.permute.xlu0 %1454
    %1457 = vst.msk [vmem:[#allocation5 + $0x4] sm:$0x3] %vm310, %v1455
    %1458 = vst.msk [vmem:[#allocation5 + $0xa] sm:$0x3] %vm312, %v1455
    %v1459 = vpack.c.bf16 %v1452, %v1452
    %v1460 = vld [vmem:[#allocation2] sm:$0xc0]
    %v1461 = vld [vmem:[#allocation2 + $0x8] sm:$0xc0]
    %1463 = vrot.lane.b32.xlu0 %v1459, 64
    %v1464 = vpop.permute.xlu0 %1463
    %v1467 = vrot.slane %v1460, 6
    %v1468 = vrot.slane %v1461, 6
    %v1472 = vsel %vm231, %v1464, 0
    %1474 = vmatprep.subr.bf16.mxu0 %v1183
    %1475 = vmatpush1.bf16.msra.mxu0 %v1182
    %1476 = vmatprep.subr.bf16.mxu0 %v1185
    %1477 = vmatpush1.bf16.msra.mxu0 %v1184
    %1478 = vmatprep.subr.bf16.mxu0 %v1187
    %1479 = vmatpush1.bf16.msra.mxu0 %v1186
    %1480 = vmatprep.subr.bf16.mxu0 %v1189
    %1481 = vmatpush1.bf16.msra.mxu0 %v1188
    %1482 = vmatprep.subr.bf16.mxu0 0
    %1483 = vmatpush1.bf16.msra.mxu0 0
    %1484 = vmatprep.subr.bf16.mxu0 0
    %1485 = vmatpush1.bf16.msra.mxu0 0
    %1486 = vmatprep.subr.bf16.mxu0 0
    %1487 = vmatpush1.bf16.msra.mxu0 0
    %1488 = vmatprep.subr.bf16.mxu0 0
    %1489 = vmatpush1.bf16.msra.mxu0 0
    %1490 = vmatprep.subr.bf16.mxu0 0
    %1491 = vmatpush1.bf16.msra.mxu0 0
    %1492 = vmatprep.subr.bf16.mxu0 0
    %1493 = vmatpush1.bf16.msra.mxu0 0
    %1494 = vmatprep.subr.bf16.mxu0 0
    %1495 = vmatpush1.bf16.msra.mxu0 0
    %1496 = vmatprep.subr.bf16.mxu0 0
    %1497 = vmatpush1.bf16.msra.mxu0 0
    %1498 = vmatprep.subr.bf16.mxu0 0
    %1499 = vmatpush1.bf16.msra.mxu0 0
    %1500 = vmatprep.subr.bf16.mxu0 0
    %1501 = vmatpush1.bf16.msra.mxu0 0
    %1502 = vmatprep.subr.bf16.mxu0 0
    %1503 = vmatpush1.bf16.msra.mxu0 0
    %1504 = vmatprep.subr.bf16.mxu0 0
    %1505 = vmatpush1.bf16.msra.mxu0 0
    %1506 = vmatprep.mubr.bf16.mxu0 0
    %1507 = vmatmul.mubr.bf16.gmra.mrb[0].mxu0 %v1472
    %v1508 = vpop.f32.mrb[0].mxu0
    %v1509 = vadd.f32 %v1467, %v1508
    %v1510 = vpop.f32.mrb[0].mxu0
    %v1511 = vadd.f32 %v1468, %v1510
    %v1512 = vpop.f32.mrb[0].mxu0
    %v1513 = vpop.f32.mrb[0].mxu0
    %1514 = vdwg.mxu0
    %v1515 = vld [vmem:[#allocation3 + $0x10] sm:$0x3]
    %v1516 = vld [vmem:[#allocation3 + $0x18] sm:$0x3]
    %v1517 = vadd.f32 %v1509, %v1515
    %v1518 = vadd.f32 %v1511, %v1516
    %v1519 = vsub.f32 0.0, %v1517
    %v1520 = vmul.f32 %v1519, 1.442695
    %v1521 = vpow.pop %v1520
    %v1522 = vadd.f32 %v1521, 1.0
    %v1523 = vrcp.pop %v1522
    %v1524 = vtanh.pop %v1518
    %v1525 = vsub.f32 0.0, %v1518
    %v1526 = vmul.f32 %v1525, 1.442695
    %v1527 = vpow.pop %v1526
    %v1528 = vadd.f32 %v1527, 1.0
    %v1529 = vrcp.pop %v1528
    %v1530 = vmul.f32 %v1523, %v1450
    %v1531 = vmul.f32 %v1523, %v1524
    %1533 = vrot.lane.b32.xlu0 %v1531, 64
    %v1534 = vpop.permute.xlu0 %1533
    %v1536 = vadd.f32 %v1530, %v1534
    %v1537 = vtanh.pop %v1536
    %v1538 = vmul.f32 %v1529, %v1537
    %1540 = vrot.lane.b32.xlu0 %v1538, 64
    %v1541 = vpop.permute.xlu0 %1540
    %1543 = vst.msk [vmem:[#allocation5 + $0x6] sm:$0x3] %vm310, %v1541
    %1544 = vst.msk [vmem:[#allocation5 + $0x8] sm:$0x3] %vm312, %v1541
    %v1545 = vpack.c.bf16 %v1538, %v1538
    %v1546 = vld [vmem:[#allocation2 + $0x10] sm:$0x3]
    %v1547 = vld [vmem:[#allocation2 + $0x18] sm:$0x3]
    %1549 = vrot.lane.b32.xlu0 %v1545, 64
    %v1550 = vpop.permute.xlu0 %1549
    %v1552 = vsel %vm231, %v1550, 0
    %1554 = vmatprep.subr.bf16.mxu0 %v1183
    %1555 = vmatpush1.bf16.msra.mxu0 %v1182
    %1556 = vmatprep.subr.bf16.mxu0 %v1185
    %1557 = vmatpush1.bf16.msra.mxu0 %v1184
    %1558 = vmatprep.subr.bf16.mxu0 %v1187
    %1559 = vmatpush1.bf16.msra.mxu0 %v1186
    %1560 = vmatprep.subr.bf16.mxu0 %v1189
    %1561 = vmatpush1.bf16.msra.mxu0 %v1188
    %1562 = vmatprep.subr.bf16.mxu0 0
    %1563 = vmatpush1.bf16.msra.mxu0 0
    %1564 = vmatprep.subr.bf16.mxu0 0
    %1565 = vmatpush1.bf16.msra.mxu0 0
    %1566 = vmatprep.subr.bf16.mxu0 0
    %1567 = vmatpush1.bf16.msra.mxu0 0
    %1568 = vmatprep.subr.bf16.mxu0 0
    %1569 = vmatpush1.bf16.msra.mxu0 0
    %1570 = vmatprep.subr.bf16.mxu0 0
    %1571 = vmatpush1.bf16.msra.mxu0 0
    %1572 = vmatprep.subr.bf16.mxu0 0
    %1573 = vmatpush1.bf16.msra.mxu0 0
    %1574 = vmatprep.subr.bf16.mxu0 0
    %1575 = vmatpush1.bf16.msra.mxu0 0
    %1576 = vmatprep.subr.bf16.mxu0 0
    %1577 = vmatpush1.bf16.msra.mxu0 0
    %1578 = vmatprep.subr.bf16.mxu0 0
    %1579 = vmatpush1.bf16.msra.mxu0 0
    %1580 = vmatprep.subr.bf16.mxu0 0
    %1581 = vmatpush1.bf16.msra.mxu0 0
    %1582 = vmatprep.subr.bf16.mxu0 0
    %1583 = vmatpush1.bf16.msra.mxu0 0
    %1584 = vmatprep.subr.bf16.mxu0 0
    %1585 = vmatpush1.bf16.msra.mxu0 0
    %1586 = vmatprep.mubr.bf16.mxu0 0
    %1587 = vmatmul.mubr.bf16.gmra.mrb[0].mxu0 %v1552
    %v1588 = vpop.f32.mrb[0].mxu0
    %v1589 = vadd.f32 %v1546, %v1588
    %v1590 = vpop.f32.mrb[0].mxu0
    %v1591 = vadd.f32 %v1547, %v1590
    %v1592 = vpop.f32.mrb[0].mxu0
    %v1593 = vpop.f32.mrb[0].mxu0
    %1594 = vdwg.mxu0
    %v1595 = vld [vmem:[#allocation3] sm:$0xc0]
    %v1596 = vld [vmem:[#allocation3 + $0x8] sm:$0xc0]
    %v1599 = vrot.slane %v1595, 6
    %v1600 = vrot.slane %v1596, 6
    %v1603 = vadd.f32 %v1589, %v1599
    %v1604 = vadd.f32 %v1591, %v1600
    %v1605 = vsub.f32 0.0, %v1603
    %v1606 = vmul.f32 %v1605, 1.442695
    %v1607 = vpow.pop %v1606
    %v1608 = vadd.f32 %v1607, 1.0
    %v1609 = vrcp.pop %v1608
    %v1610 = vtanh.pop %v1604
    %v1611 = vsub.f32 0.0, %v1604
    %v1612 = vmul.f32 %v1611, 1.442695
    %v1613 = vpow.pop %v1612
    %v1614 = vadd.f32 %v1613, 1.0
    %v1615 = vrcp.pop %v1614
    %v1616 = vmul.f32 %v1609, %v1536
    %v1617 = vmul.f32 %v1609, %v1610
    %1619 = vrot.lane.b32.xlu0 %v1617, 64
    %v1620 = vpop.permute.xlu0 %1619
    %v1622 = vadd.f32 %v1616, %v1620
    %v1623 = vtanh.pop %v1622
    %v1624 = vmul.f32 %v1615, %v1623
    %1626 = vrot.lane.b32.xlu0 %v1624, 64
    %v1627 = vpop.permute.xlu0 %1626
    %1629 = vst.msk [vmem:[#allocation5 + $0x8] sm:$0x3] %vm310, %v1627
    %1630 = vst.msk [vmem:[#allocation5 + $0x6] sm:$0x3] %vm312, %v1627
    %v1631 = vpack.c.bf16 %v1624, %v1624
    %v1632 = vld [vmem:[#allocation2 + $0x10] sm:$0xc]
    %v1633 = vld [vmem:[#allocation2 + $0x18] sm:$0xc]
    %1635 = vrot.lane.b32.xlu0 %v1631, 64
    %v1636 = vpop.permute.xlu0 %1635
    %v1639 = vrot.slane %v1632, 2
    %v1640 = vrot.slane %v1633, 2
    %v1644 = vsel %vm231, %v1636, 0
    %1646 = vmatprep.subr.bf16.mxu0 %v1183
    %1647 = vmatpush1.bf16.msra.mxu0 %v1182
    %1648 = vmatprep.subr.bf16.mxu0 %v1185
    %1649 = vmatpush1.bf16.msra.mxu0 %v1184
    %1650 = vmatprep.subr.bf16.mxu0 %v1187
    %1651 = vmatpush1.bf16.msra.mxu0 %v1186
    %1652 = vmatprep.subr.bf16.mxu0 %v1189
    %1653 = vmatpush1.bf16.msra.mxu0 %v1188
    %1654 = vmatprep.subr.bf16.mxu0 0
    %1655 = vmatpush1.bf16.msra.mxu0 0
    %1656 = vmatprep.subr.bf16.mxu0 0
    %1657 = vmatpush1.bf16.msra.mxu0 0
    %1658 = vmatprep.subr.bf16.mxu0 0
    %1659 = vmatpush1.bf16.msra.mxu0 0
    %1660 = vmatprep.subr.bf16.mxu0 0
    %1661 = vmatpush1.bf16.msra.mxu0 0
    %1662 = vmatprep.subr.bf16.mxu0 0
    %1663 = vmatpush1.bf16.msra.mxu0 0
    %1664 = vmatprep.subr.bf16.mxu0 0
    %1665 = vmatpush1.bf16.msra.mxu0 0
    %1666 = vmatprep.subr.bf16.mxu0 0
    %1667 = vmatpush1.bf16.msra.mxu0 0
    %1668 = vmatprep.subr.bf16.mxu0 0
    %1669 = vmatpush1.bf16.msra.mxu0 0
    %1670 = vmatprep.subr.bf16.mxu0 0
    %1671 = vmatpush1.bf16.msra.mxu0 0
    %1672 = vmatprep.subr.bf16.mxu0 0
    %1673 = vmatpush1.bf16.msra.mxu0 0
    %1674 = vmatprep.subr.bf16.mxu0 0
    %1675 = vmatpush1.bf16.msra.mxu0 0
    %1676 = vmatprep.subr.bf16.mxu0 0
    %1677 = vmatpush1.bf16.msra.mxu0 0
    %1678 = vmatprep.mubr.bf16.mxu0 0
    %1679 = vmatmul.mubr.bf16.gmra.mrb[0].mxu0 %v1644
    %v1680 = vpop.f32.mrb[0].mxu0
    %v1681 = vadd.f32 %v1639, %v1680
    %v1682 = vpop.f32.mrb[0].mxu0
    %v1683 = vadd.f32 %v1640, %v1682
    %v1684 = vpop.f32.mrb[0].mxu0
    %v1685 = vpop.f32.mrb[0].mxu0
    %1686 = vdwg.mxu0
    %v1687 = vld [vmem:[#allocation3] sm:$0x30]
    %v1688 = vld [vmem:[#allocation3 + $0x8] sm:$0x30]
    %v1691 = vrot.slane %v1687, 4
    %v1692 = vrot.slane %v1688, 4
    %v1695 = vadd.f32 %v1681, %v1691
    %v1696 = vadd.f32 %v1683, %v1692
    %v1697 = vsub.f32 0.0, %v1695
    %v1698 = vmul.f32 %v1697, 1.442695
    %v1699 = vpow.pop %v1698
    %v1700 = vadd.f32 %v1699, 1.0
    %v1701 = vrcp.pop %v1700
    %v1702 = vtanh.pop %v1696
    %v1703 = vsub.f32 0.0, %v1696
    %v1704 = vmul.f32 %v1703, 1.442695
    %v1705 = vpow.pop %v1704
    %v1706 = vadd.f32 %v1705, 1.0
    %v1707 = vrcp.pop %v1706
    %v1708 = vmul.f32 %v1701, %v1622
    %v1709 = vmul.f32 %v1701, %v1702
    %1711 = vrot.lane.b32.xlu0 %v1709, 64
    %v1712 = vpop.permute.xlu0 %1711
    %v1714 = vadd.f32 %v1708, %v1712
    %v1715 = vtanh.pop %v1714
    %v1716 = vmul.f32 %v1707, %v1715
    %1718 = vrot.lane.b32.xlu0 %v1716, 64
    %v1719 = vpop.permute.xlu0 %1718
    %1721 = vst.msk [vmem:[#allocation5 + $0xa] sm:$0x3] %vm310, %v1719
    %1722 = vst.msk [vmem:[#allocation5 + $0x4] sm:$0x3] %vm312, %v1719
    %v1723 = vpack.c.bf16 %v1716, %v1716
    %v1724 = vld [vmem:[#allocation2 + $0x10] sm:$0x30]
    %v1725 = vld [vmem:[#allocation2 + $0x18] sm:$0x30]
    %1727 = vrot.lane.b32.xlu0 %v1723, 64
    %v1728 = vpop.permute.xlu0 %1727
    %v1731 = vrot.slane %v1724, 4
    %v1732 = vrot.slane %v1725, 4
    %v1736 = vsel %vm231, %v1728, 0
    %1738 = vmatprep.subr.bf16.mxu0 %v1183
    %1739 = vmatpush1.bf16.msra.mxu0 %v1182
    %1740 = vmatprep.subr.bf16.mxu0 %v1185
    %1741 = vmatpush1.bf16.msra.mxu0 %v1184
    %1742 = vmatprep.subr.bf16.mxu0 %v1187
    %1743 = vmatpush1.bf16.msra.mxu0 %v1186
    %1744 = vmatprep.subr.bf16.mxu0 %v1189
    %1745 = vmatpush1.bf16.msra.mxu0 %v1188
    %1746 = vmatprep.subr.bf16.mxu0 0
    %1747 = vmatpush1.bf16.msra.mxu0 0
    %1748 = vmatprep.subr.bf16.mxu0 0
    %1749 = vmatpush1.bf16.msra.mxu0 0
    %1750 = vmatprep.subr.bf16.mxu0 0
    %1751 = vmatpush1.bf16.msra.mxu0 0
    %1752 = vmatprep.subr.bf16.mxu0 0
    %1753 = vmatpush1.bf16.msra.mxu0 0
    %1754 = vmatprep.subr.bf16.mxu0 0
    %1755 = vmatpush1.bf16.msra.mxu0 0
    %1756 = vmatprep.subr.bf16.mxu0 0
    %1757 = vmatpush1.bf16.msra.mxu0 0
    %1758 = vmatprep.subr.bf16.mxu0 0
    %1759 = vmatpush1.bf16.msra.mxu0 0
    %1760 = vmatprep.subr.bf16.mxu0 0
    %1761 = vmatpush1.bf16.msra.mxu0 0
    %1762 = vmatprep.subr.bf16.mxu0 0
    %1763 = vmatpush1.bf16.msra.mxu0 0
    %1764 = vmatprep.subr.bf16.mxu0 0
    %1765 = vmatpush1.bf16.msra.mxu0 0
    %1766 = vmatprep.subr.bf16.mxu0 0
    %1767 = vmatpush1.bf16.msra.mxu0 0
    %1768 = vmatprep.subr.bf16.mxu0 0
    %1769 = vmatpush1.bf16.msra.mxu0 0
    %1770 = vmatprep.mubr.bf16.mxu0 0
    %1771 = vmatmul.mubr.bf16.gmra.mrb[0].mxu0 %v1736
    %v1772 = vpop.f32.mrb[0].mxu0
    %v1773 = vadd.f32 %v1731, %v1772
    %v1774 = vpop.f32.mrb[0].mxu0
    %v1775 = vadd.f32 %v1732, %v1774
    %v1776 = vpop.f32.mrb[0].mxu0
    %v1777 = vpop.f32.mrb[0].mxu0
    %1778 = vdwg.mxu0
    %v1779 = vld [vmem:[#allocation3] sm:$0xc]
    %v1780 = vld [vmem:[#allocation3 + $0x8] sm:$0xc]
    %v1783 = vrot.slane %v1779, 2
    %v1784 = vrot.slane %v1780, 2
    %v1787 = vadd.f32 %v1773, %v1783
    %v1788 = vadd.f32 %v1775, %v1784
    %v1789 = vsub.f32 0.0, %v1787
    %v1790 = vmul.f32 %v1789, 1.442695
    %v1791 = vpow.pop %v1790
    %v1792 = vadd.f32 %v1791, 1.0
    %v1793 = vrcp.pop %v1792
    %v1794 = vtanh.pop %v1788
    %v1795 = vsub.f32 0.0, %v1788
    %v1796 = vmul.f32 %v1795, 1.442695
    %v1797 = vpow.pop %v1796
    %v1798 = vadd.f32 %v1797, 1.0
    %v1799 = vrcp.pop %v1798
    %v1800 = vmul.f32 %v1793, %v1714
    %v1801 = vmul.f32 %v1793, %v1794
    %1803 = vrot.lane.b32.xlu0 %v1801, 64
    %v1804 = vpop.permute.xlu0 %1803
    %v1806 = vadd.f32 %v1800, %v1804
    %v1807 = vtanh.pop %v1806
    %v1808 = vmul.f32 %v1799, %v1807
    %1810 = vrot.lane.b32.xlu0 %v1808, 64
    %v1811 = vpop.permute.xlu0 %1810
    %1813 = vst.msk [vmem:[#allocation5 + $0xc] sm:$0x3] %vm310, %v1811
    %1814 = vst.msk [vmem:[#allocation5 + $0x2] sm:$0x3] %vm312, %v1811
    %v1815 = vpack.c.bf16 %v1808, %v1808
    %v1816 = vld [vmem:[#allocation2 + $0x10] sm:$0xc0]
    %v1817 = vld [vmem:[#allocation2 + $0x18] sm:$0xc0]
    %1819 = vrot.lane.b32.xlu0 %v1815, 64
    %v1820 = vpop.permute.xlu0 %1819
    %v1823 = vrot.slane %v1816, 6
    %v1824 = vrot.slane %v1817, 6
    %v1828 = vsel %vm231, %v1820, 0
    %1830 = vmatprep.subr.bf16.mxu0 %v1183
    %1831 = vmatpush1.bf16.msra.mxu0 %v1182
    %1832 = vmatprep.subr.bf16.mxu0 %v1185
    %1833 = vmatpush1.bf16.msra.mxu0 %v1184
    %1834 = vmatprep.subr.bf16.mxu0 %v1187
    %1835 = vmatpush1.bf16.msra.mxu0 %v1186
    %1836 = vmatprep.subr.bf16.mxu0 %v1189
    %1837 = vmatpush1.bf16.msra.mxu0 %v1188
    %1838 = vmatprep.subr.bf16.mxu0 0
    %1839 = vmatpush1.bf16.msra.mxu0 0
    %1840 = vmatprep.subr.bf16.mxu0 0
    %1841 = vmatpush1.bf16.msra.mxu0 0
    %1842 = vmatprep.subr.bf16.mxu0 0
    %1843 = vmatpush1.bf16.msra.mxu0 0
    %1844 = vmatprep.subr.bf16.mxu0 0
    %1845 = vmatpush1.bf16.msra.mxu0 0
    %1846 = vmatprep.subr.bf16.mxu0 0
    %1847 = vmatpush1.bf16.msra.mxu0 0
    %1848 = vmatprep.subr.bf16.mxu0 0
    %1849 = vmatpush1.bf16.msra.mxu0 0
    %1850 = vmatprep.subr.bf16.mxu0 0
    %1851 = vmatpush1.bf16.msra.mxu0 0
    %1852 = vmatprep.subr.bf16.mxu0 0
    %1853 = vmatpush1.bf16.msra.mxu0 0
    %1854 = vmatprep.subr.bf16.mxu0 0
    %1855 = vmatpush1.bf16.msra.mxu0 0
    %1856 = vmatprep.subr.bf16.mxu0 0
    %1857 = vmatpush1.bf16.msra.mxu0 0
    %1858 = vmatprep.subr.bf16.mxu0 0
    %1859 = vmatpush1.bf16.msra.mxu0 0
    %1860 = vmatprep.subr.bf16.mxu0 0
    %1861 = vmatpush1.bf16.msra.mxu0 0
    %1862 = vmatprep.mubr.bf16.mxu0 0
    %1863 = vmatmul.mubr.bf16.gmra.mrb[0].mxu0 %v1828
    %v1864 = vpop.f32.mrb[0].mxu0
    %v1865 = vadd.f32 %v1823, %v1864
    %v1866 = vpop.f32.mrb[0].mxu0
    %v1867 = vadd.f32 %v1824, %v1866
    %v1868 = vpop.f32.mrb[0].mxu0
    %v1869 = vpop.f32.mrb[0].mxu0
    %1870 = vdwg.mxu0
    %v1871 = vld [vmem:[#allocation3] sm:$0x3]
    %v1872 = vld [vmem:[#allocation3 + $0x8] sm:$0x3]
    %v1873 = vadd.f32 %v1865, %v1871
    %v1874 = vadd.f32 %v1867, %v1872
    %v1875 = vsub.f32 0.0, %v1873
    %v1876 = vmul.f32 %v1875, 1.442695
    %v1877 = vpow.pop %v1876
    %v1878 = vadd.f32 %v1877, 1.0
    %v1879 = vrcp.pop %v1878
    %v1880 = vtanh.pop %v1874
    %v1881 = vsub.f32 0.0, %v1874
    %v1882 = vmul.f32 %v1881, 1.442695
    %v1883 = vpow.pop %v1882
    %v1884 = vadd.f32 %v1883, 1.0
    %v1885 = vrcp.pop %v1884
    %v1886 = vmul.f32 %v1879, %v1806
    %v1887 = vmul.f32 %v1879, %v1880
    %1889 = vrot.lane.b32.xlu0 %v1887, 64
    %v1890 = vpop.permute.xlu0 %1889
    %v1892 = vadd.f32 %v1886, %v1890
    %v1893 = vtanh.pop %v1892
    %v1894 = vmul.f32 %v1885, %v1893
    %1896 = vrot.lane.b32.xlu0 %v1894, 64
    %v1897 = vpop.permute.xlu0 %1896
    %1899 = vst.msk [vmem:[#allocation5 + $0xe] sm:$0x3] %vm310, %v1897
    %1900 = vst.msk [vmem:[#allocation5] sm:$0x3] %vm312, %v1897
    %v1901 = vld [vmem:[#allocation5] sm:$0x3]
    %v1902 = vpack.c.bf16 %v1901, %v1901
    %v1903 = vld [vmem:[%s9] sm:$0xf]
    %v1904 = vld [vmem:[%s9 + $0x4] sm:$0xf]
    %v1905 = vld [vmem:[%s9 + $0x8] sm:$0xf]
    %v1906 = vld [vmem:[%s9 + $0xc] sm:$0xf]
    %v1907 = vld [vmem:[%s9 + $0x10] sm:$0xf]
    %v1908 = vld [vmem:[%s9 + $0x14] sm:$0xf]
    %v1909 = vld [vmem:[%s9 + $0x18] sm:$0xf]
    %v1910 = vld [vmem:[%s9 + $0x1c] sm:$0xf]
    %v1911 = vld [vmem:[#allocation5 + $0x2] sm:$0x3]
    %v1912 = vpack.c.bf16 %v1911, %v1911
    %v1913 = vld [vmem:[%s9 + $0x20] sm:$0xf]
    %v1914 = vld [vmem:[%s9 + $0x24] sm:$0xf]
    %v1915 = vld [vmem:[%s9 + $0x28] sm:$0xf]
    %v1916 = vld [vmem:[%s9 + $0x2c] sm:$0xf]
    %v1917 = vld [vmem:[%s9 + $0x30] sm:$0xf]
    %v1918 = vld [vmem:[%s9 + $0x34] sm:$0xf]
    %v1919 = vld [vmem:[%s9 + $0x38] sm:$0xf]
    %v1920 = vld [vmem:[%s9 + $0x3c] sm:$0xf]
    %v1929 = vunpack.c.l.b16 %v1913
    %v1930 = vunpack.c.l.b16 %v1914
    %v1931 = vunpack.c.l.b16 %v1915
    %v1932 = vunpack.c.l.b16 %v1916
    %v1933 = vunpack.c.l.b16 %v1917
    %v1934 = vunpack.c.l.b16 %v1918
    %v1935 = vunpack.c.l.b16 %v1919
    %v1936 = vunpack.c.l.b16 %v1920
    %v1937 = vpack.c.b16 %v1930, %v1929
    %v1938 = vpack.c.b16 %v1932, %v1931
    %v1939 = vpack.c.b16 %v1934, %v1933
    %v1940 = vpack.c.b16 %v1936, %v1935
    %v1946 = vsel %vm231, %v1912, 0
    %1948 = vmatprep.subr.bf16.mxu0 0
    %1949 = vmatpush1.bf16.msra.mxu0 %v1937
    %1950 = vmatprep.subr.bf16.mxu0 0
    %1951 = vmatpush1.bf16.msra.mxu0 %v1938
    %1952 = vmatprep.subr.bf16.mxu0 0
    %1953 = vmatpush1.bf16.msra.mxu0 %v1939
    %1954 = vmatprep.subr.bf16.mxu0 0
    %1955 = vmatpush1.bf16.msra.mxu0 %v1940
    %1956 = vmatprep.subr.bf16.mxu0 0
    %1957 = vmatpush1.bf16.msra.mxu0 0
    %1958 = vmatprep.subr.bf16.mxu0 0
    %1959 = vmatpush1.bf16.msra.mxu0 0
    %1960 = vmatprep.subr.bf16.mxu0 0
    %1961 = vmatpush1.bf16.msra.mxu0 0
    %1962 = vmatprep.subr.bf16.mxu0 0
    %1963 = vmatpush1.bf16.msra.mxu0 0
    %1964 = vmatprep.subr.bf16.mxu0 0
    %1965 = vmatpush1.bf16.msra.mxu0 0
    %1966 = vmatprep.subr.bf16.mxu0 0
    %1967 = vmatpush1.bf16.msra.mxu0 0
    %1968 = vmatprep.subr.bf16.mxu0 0
    %1969 = vmatpush1.bf16.msra.mxu0 0
    %1970 = vmatprep.subr.bf16.mxu0 0
    %1971 = vmatpush1.bf16.msra.mxu0 0
    %1972 = vmatprep.subr.bf16.mxu0 0
    %1973 = vmatpush1.bf16.msra.mxu0 0
    %1974 = vmatprep.subr.bf16.mxu0 0
    %1975 = vmatpush1.bf16.msra.mxu0 0
    %1976 = vmatprep.subr.bf16.mxu0 0
    %1977 = vmatpush1.bf16.msra.mxu0 0
    %1978 = vmatprep.subr.bf16.mxu0 0
    %1979 = vmatpush1.bf16.msra.mxu0 0
    %1980 = vmatprep.mubr.bf16.mxu0 0
    %1981 = vmatmul.mubr.bf16.gmra.mrb[0].mxu0 %v1946
    %v1982 = vpop.f32.mrb[0].mxu0
    %v1983 = vadd.f32 0.0, %v1982
    %v1984 = vpop.f32.mrb[0].mxu0
    %v1985 = vpop.f32.mrb[0].mxu0
    %v1986 = vpop.f32.mrb[0].mxu0
    %1987 = vdwg.mxu0
    %v1996 = vunpack.c.l.b16 %v1903
    %v1997 = vunpack.c.l.b16 %v1904
    %v1998 = vunpack.c.l.b16 %v1905
    %v1999 = vunpack.c.l.b16 %v1906
    %v2000 = vunpack.c.l.b16 %v1907
    %v2001 = vunpack.c.l.b16 %v1908
    %v2002 = vunpack.c.l.b16 %v1909
    %v2003 = vunpack.c.l.b16 %v1910
    %v2004 = vpack.c.b16 %v1997, %v1996
    %v2005 = vpack.c.b16 %v1999, %v1998
    %v2006 = vpack.c.b16 %v2001, %v2000
    %v2007 = vpack.c.b16 %v2003, %v2002
    %v2013 = vsel %vm231, %v1902, 0
    %2015 = vmatprep.subr.bf16.mxu0 0
    %2016 = vmatpush1.bf16.msra.mxu0 %v2004
    %2017 = vmatprep.subr.bf16.mxu0 0
    %2018 = vmatpush1.bf16.msra.mxu0 %v2005
    %2019 = vmatprep.subr.bf16.mxu0 0
    %2020 = vmatpush1.bf16.msra.mxu0 %v2006
    %2021 = vmatprep.subr.bf16.mxu0 0
    %2022 = vmatpush1.bf16.msra.mxu0 %v2007
    %2023 = vmatprep.subr.bf16.mxu0 0
    %2024 = vmatpush1.bf16.msra.mxu0 0
    %2025 = vmatprep.subr.bf16.mxu0 0
    %2026 = vmatpush1.bf16.msra.mxu0 0
    %2027 = vmatprep.subr.bf16.mxu0 0
    %2028 = vmatpush1.bf16.msra.mxu0 0
    %2029 = vmatprep.subr.bf16.mxu0 0
    %2030 = vmatpush1.bf16.msra.mxu0 0
    %2031 = vmatprep.subr.bf16.mxu0 0
    %2032 = vmatpush1.bf16.msra.mxu0 0
    %2033 = vmatprep.subr.bf16.mxu0 0
    %2034 = vmatpush1.bf16.msra.mxu0 0
    %2035 = vmatprep.subr.bf16.mxu0 0
    %2036 = vmatpush1.bf16.msra.mxu0 0
    %2037 = vmatprep.subr.bf16.mxu0 0
    %2038 = vmatpush1.bf16.msra.mxu0 0
    %2039 = vmatprep.subr.bf16.mxu0 0
    %2040 = vmatpush1.bf16.msra.mxu0 0
    %2041 = vmatprep.subr.bf16.mxu0 0
    %2042 = vmatpush1.bf16.msra.mxu0 0
    %2043 = vmatprep.subr.bf16.mxu0 0
    %2044 = vmatpush1.bf16.msra.mxu0 0
    %2045 = vmatprep.subr.bf16.mxu0 0
    %2046 = vmatpush1.bf16.msra.mxu0 0
    %2047 = vmatprep.mubr.bf16.mxu0 0
    %2048 = vmatmul.mubr.bf16.gmra.mrb[0].mxu0 %v2013
    %v2049 = vpop.f32.mrb[0].mxu0
    %v2050 = vadd.f32 %v1983, %v2049
    %v2051 = vpop.f32.mrb[0].mxu0
    %v2052 = vpop.f32.mrb[0].mxu0
    %v2053 = vpop.f32.mrb[0].mxu0
    %2054 = vdwg.mxu0
    %v2055 = vld [vmem:[#allocation5 + $0x4] sm:$0x3]
    %v2056 = vpack.c.bf16 %v2055, %v2055
    %v2057 = vld [vmem:[%s9 + $0x40] sm:$0xf]
    %v2058 = vld [vmem:[%s9 + $0x44] sm:$0xf]
    %v2059 = vld [vmem:[%s9 + $0x48] sm:$0xf]
    %v2060 = vld [vmem:[%s9 + $0x4c] sm:$0xf]
    %v2061 = vld [vmem:[%s9 + $0x50] sm:$0xf]
    %v2062 = vld [vmem:[%s9 + $0x54] sm:$0xf]
    %v2063 = vld [vmem:[%s9 + $0x58] sm:$0xf]
    %v2064 = vld [vmem:[%s9 + $0x5c] sm:$0xf]
    %v2073 = vunpack.c.l.b16 %v2057
    %v2074 = vunpack.c.l.b16 %v2058
    %v2075 = vunpack.c.l.b16 %v2059
    %v2076 = vunpack.c.l.b16 %v2060
    %v2077 = vunpack.c.l.b16 %v2061
    %v2078 = vunpack.c.l.b16 %v2062
    %v2079 = vunpack.c.l.b16 %v2063
    %v2080 = vunpack.c.l.b16 %v2064
    %v2081 = vpack.c.b16 %v2074, %v2073
    %v2082 = vpack.c.b16 %v2076, %v2075
    %v2083 = vpack.c.b16 %v2078, %v2077
    %v2084 = vpack.c.b16 %v2080, %v2079
    %v2090 = vsel %vm231, %v2056, 0
    %2092 = vmatprep.subr.bf16.mxu0 0
    %2093 = vmatpush1.bf16.msra.mxu0 %v2081
    %2094 = vmatprep.subr.bf16.mxu0 0
    %2095 = vmatpush1.bf16.msra.mxu0 %v2082
    %2096 = vmatprep.subr.bf16.mxu0 0
    %2097 = vmatpush1.bf16.msra.mxu0 %v2083
    %2098 = vmatprep.subr.bf16.mxu0 0
    %2099 = vmatpush1.bf16.msra.mxu0 %v2084
    %2100 = vmatprep.subr.bf16.mxu0 0
    %2101 = vmatpush1.bf16.msra.mxu0 0
    %2102 = vmatprep.subr.bf16.mxu0 0
    %2103 = vmatpush1.bf16.msra.mxu0 0
    %2104 = vmatprep.subr.bf16.mxu0 0
    %2105 = vmatpush1.bf16.msra.mxu0 0
    %2106 = vmatprep.subr.bf16.mxu0 0
    %2107 = vmatpush1.bf16.msra.mxu0 0
    %2108 = vmatprep.subr.bf16.mxu0 0
    %2109 = vmatpush1.bf16.msra.mxu0 0
    %2110 = vmatprep.subr.bf16.mxu0 0
    %2111 = vmatpush1.bf16.msra.mxu0 0
    %2112 = vmatprep.subr.bf16.mxu0 0
    %2113 = vmatpush1.bf16.msra.mxu0 0
    %2114 = vmatprep.subr.bf16.mxu0 0
    %2115 = vmatpush1.bf16.msra.mxu0 0
    %2116 = vmatprep.subr.bf16.mxu0 0
    %2117 = vmatpush1.bf16.msra.mxu0 0
    %2118 = vmatprep.subr.bf16.mxu0 0
    %2119 = vmatpush1.bf16.msra.mxu0 0
    %2120 = vmatprep.subr.bf16.mxu0 0
    %2121 = vmatpush1.bf16.msra.mxu0 0
    %2122 = vmatprep.subr.bf16.mxu0 0
    %2123 = vmatpush1.bf16.msra.mxu0 0
    %2124 = vmatprep.mubr.bf16.mxu0 0
    %2125 = vmatmul.mubr.bf16.gmra.mrb[0].mxu0 %v2090
    %v2126 = vpop.f32.mrb[0].mxu0
    %v2127 = vadd.f32 0.0, %v2126
    %v2128 = vpop.f32.mrb[0].mxu0
    %v2129 = vpop.f32.mrb[0].mxu0
    %v2130 = vpop.f32.mrb[0].mxu0
    %2131 = vdwg.mxu0
    %v2132 = vadd.f32 %v2050, %v2127
    %v2133 = vld [vmem:[#allocation5 + $0x6] sm:$0x3]
    %v2134 = vpack.c.bf16 %v2133, %v2133
    %v2135 = vld [vmem:[%s9 + $0x60] sm:$0xf]
    %v2136 = vld [vmem:[%s9 + $0x64] sm:$0xf]
    %v2137 = vld [vmem:[%s9 + $0x68] sm:$0xf]
    %v2138 = vld [vmem:[%s9 + $0x6c] sm:$0xf]
    %v2139 = vld [vmem:[%s9 + $0x70] sm:$0xf]
    %v2140 = vld [vmem:[%s9 + $0x74] sm:$0xf]
    %v2141 = vld [vmem:[%s9 + $0x78] sm:$0xf]
    %v2142 = vld [vmem:[%s9 + $0x7c] sm:$0xf]
    %v2151 = vunpack.c.l.b16 %v2135
    %v2152 = vunpack.c.l.b16 %v2136
    %v2153 = vunpack.c.l.b16 %v2137
    %v2154 = vunpack.c.l.b16 %v2138
    %v2155 = vunpack.c.l.b16 %v2139
    %v2156 = vunpack.c.l.b16 %v2140
    %v2157 = vunpack.c.l.b16 %v2141
    %v2158 = vunpack.c.l.b16 %v2142
    %v2159 = vpack.c.b16 %v2152, %v2151
    %v2160 = vpack.c.b16 %v2154, %v2153
    %v2161 = vpack.c.b16 %v2156, %v2155
    %v2162 = vpack.c.b16 %v2158, %v2157
    %v2168 = vsel %vm231, %v2134, 0
    %2170 = vmatprep.subr.bf16.mxu0 0
    %2171 = vmatpush1.bf16.msra.mxu0 %v2159
    %2172 = vmatprep.subr.bf16.mxu0 0
    %2173 = vmatpush1.bf16.msra.mxu0 %v2160
    %2174 = vmatprep.subr.bf16.mxu0 0
    %2175 = vmatpush1.bf16.msra.mxu0 %v2161
    %2176 = vmatprep.subr.bf16.mxu0 0
    %2177 = vmatpush1.bf16.msra.mxu0 %v2162
    %2178 = vmatprep.subr.bf16.mxu0 0
    %2179 = vmatpush1.bf16.msra.mxu0 0
    %2180 = vmatprep.subr.bf16.mxu0 0
    %2181 = vmatpush1.bf16.msra.mxu0 0
    %2182 = vmatprep.subr.bf16.mxu0 0
    %2183 = vmatpush1.bf16.msra.mxu0 0
    %2184 = vmatprep.subr.bf16.mxu0 0
    %2185 = vmatpush1.bf16.msra.mxu0 0
    %2186 = vmatprep.subr.bf16.mxu0 0
    %2187 = vmatpush1.bf16.msra.mxu0 0
    %2188 = vmatprep.subr.bf16.mxu0 0
    %2189 = vmatpush1.bf16.msra.mxu0 0
    %2190 = vmatprep.subr.bf16.mxu0 0
    %2191 = vmatpush1.bf16.msra.mxu0 0
    %2192 = vmatprep.subr.bf16.mxu0 0
    %2193 = vmatpush1.bf16.msra.mxu0 0
    %2194 = vmatprep.subr.bf16.mxu0 0
    %2195 = vmatpush1.bf16.msra.mxu0 0
    %2196 = vmatprep.subr.bf16.mxu0 0
    %2197 = vmatpush1.bf16.msra.mxu0 0
    %2198 = vmatprep.subr.bf16.mxu0 0
    %2199 = vmatpush1.bf16.msra.mxu0 0
    %2200 = vmatprep.subr.bf16.mxu0 0
    %2201 = vmatpush1.bf16.msra.mxu0 0
    %2202 = vmatprep.mubr.bf16.mxu0 0
    %2203 = vmatmul.mubr.bf16.gmra.mrb[0].mxu0 %v2168
    %v2204 = vpop.f32.mrb[0].mxu0
    %v2205 = vadd.f32 0.0, %v2204
    %v2206 = vpop.f32.mrb[0].mxu0
    %v2207 = vpop.f32.mrb[0].mxu0
    %v2208 = vpop.f32.mrb[0].mxu0
    %2209 = vdwg.mxu0
    %v2210 = vadd.f32 %v2132, %v2205
    %v2211 = vld [vmem:[#allocation5 + $0x8] sm:$0x3]
    %v2212 = vpack.c.bf16 %v2211, %v2211
    %v2213 = vld [vmem:[%s9 + $0x80] sm:$0xf]
    %v2214 = vld [vmem:[%s9 + $0x84] sm:$0xf]
    %v2215 = vld [vmem:[%s9 + $0x88] sm:$0xf]
    %v2216 = vld [vmem:[%s9 + $0x8c] sm:$0xf]
    %v2217 = vld [vmem:[%s9 + $0x90] sm:$0xf]
    %v2218 = vld [vmem:[%s9 + $0x94] sm:$0xf]
    %v2219 = vld [vmem:[%s9 + $0x98] sm:$0xf]
    %v2220 = vld [vmem:[%s9 + $0x9c] sm:$0xf]
    %v2229 = vunpack.c.l.b16 %v2213
    %v2230 = vunpack.c.l.b16 %v2214
    %v2231 = vunpack.c.l.b16 %v2215
    %v2232 = vunpack.c.l.b16 %v2216
    %v2233 = vunpack.c.l.b16 %v2217
    %v2234 = vunpack.c.l.b16 %v2218
    %v2235 = vunpack.c.l.b16 %v2219
    %v2236 = vunpack.c.l.b16 %v2220
    %v2237 = vpack.c.b16 %v2230, %v2229
    %v2238 = vpack.c.b16 %v2232, %v2231
    %v2239 = vpack.c.b16 %v2234, %v2233
    %v2240 = vpack.c.b16 %v2236, %v2235
    %v2246 = vsel %vm231, %v2212, 0
    %2248 = vmatprep.subr.bf16.mxu0 0
    %2249 = vmatpush1.bf16.msra.mxu0 %v2237
    %2250 = vmatprep.subr.bf16.mxu0 0
    %2251 = vmatpush1.bf16.msra.mxu0 %v2238
    %2252 = vmatprep.subr.bf16.mxu0 0
    %2253 = vmatpush1.bf16.msra.mxu0 %v2239
    %2254 = vmatprep.subr.bf16.mxu0 0
    %2255 = vmatpush1.bf16.msra.mxu0 %v2240
    %2256 = vmatprep.subr.bf16.mxu0 0
    %2257 = vmatpush1.bf16.msra.mxu0 0
    %2258 = vmatprep.subr.bf16.mxu0 0
    %2259 = vmatpush1.bf16.msra.mxu0 0
    %2260 = vmatprep.subr.bf16.mxu0 0
    %2261 = vmatpush1.bf16.msra.mxu0 0
    %2262 = vmatprep.subr.bf16.mxu0 0
    %2263 = vmatpush1.bf16.msra.mxu0 0
    %2264 = vmatprep.subr.bf16.mxu0 0
    %2265 = vmatpush1.bf16.msra.mxu0 0
    %2266 = vmatprep.subr.bf16.mxu0 0
    %2267 = vmatpush1.bf16.msra.mxu0 0
    %2268 = vmatprep.subr.bf16.mxu0 0
    %2269 = vmatpush1.bf16.msra.mxu0 0
    %2270 = vmatprep.subr.bf16.mxu0 0
    %2271 = vmatpush1.bf16.msra.mxu0 0
    %2272 = vmatprep.subr.bf16.mxu0 0
    %2273 = vmatpush1.bf16.msra.mxu0 0
    %2274 = vmatprep.subr.bf16.mxu0 0
    %2275 = vmatpush1.bf16.msra.mxu0 0
    %2276 = vmatprep.subr.bf16.mxu0 0
    %2277 = vmatpush1.bf16.msra.mxu0 0
    %2278 = vmatprep.subr.bf16.mxu0 0
    %2279 = vmatpush1.bf16.msra.mxu0 0
    %2280 = vmatprep.mubr.bf16.mxu0 0
    %2281 = vmatmul.mubr.bf16.gmra.mrb[0].mxu0 %v2246
    %v2282 = vpop.f32.mrb[0].mxu0
    %v2283 = vadd.f32 0.0, %v2282
    %v2284 = vpop.f32.mrb[0].mxu0
    %v2285 = vpop.f32.mrb[0].mxu0
    %v2286 = vpop.f32.mrb[0].mxu0
    %2287 = vdwg.mxu0
    %v2288 = vadd.f32 %v2210, %v2283
    %v2289 = vld [vmem:[#allocation5 + $0xa] sm:$0x3]
    %v2290 = vpack.c.bf16 %v2289, %v2289
    %v2291 = vld [vmem:[%s9 + $0xa0] sm:$0xf]
    %v2292 = vld [vmem:[%s9 + $0xa4] sm:$0xf]
    %v2293 = vld [vmem:[%s9 + $0xa8] sm:$0xf]
    %v2294 = vld [vmem:[%s9 + $0xac] sm:$0xf]
    %v2295 = vld [vmem:[%s9 + $0xb0] sm:$0xf]
    %v2296 = vld [vmem:[%s9 + $0xb4] sm:$0xf]
    %v2297 = vld [vmem:[%s9 + $0xb8] sm:$0xf]
    %v2298 = vld [vmem:[%s9 + $0xbc] sm:$0xf]
    %v2307 = vunpack.c.l.b16 %v2291
    %v2308 = vunpack.c.l.b16 %v2292
    %v2309 = vunpack.c.l.b16 %v2293
    %v2310 = vunpack.c.l.b16 %v2294
    %v2311 = vunpack.c.l.b16 %v2295
    %v2312 = vunpack.c.l.b16 %v2296
    %v2313 = vunpack.c.l.b16 %v2297
    %v2314 = vunpack.c.l.b16 %v2298
    %v2315 = vpack.c.b16 %v2308, %v2307
    %v2316 = vpack.c.b16 %v2310, %v2309
    %v2317 = vpack.c.b16 %v2312, %v2311
    %v2318 = vpack.c.b16 %v2314, %v2313
    %v2324 = vsel %vm231, %v2290, 0
    %2326 = vmatprep.subr.bf16.mxu0 0
    %2327 = vmatpush1.bf16.msra.mxu0 %v2315
    %2328 = vmatprep.subr.bf16.mxu0 0
    %2329 = vmatpush1.bf16.msra.mxu0 %v2316
    %2330 = vmatprep.subr.bf16.mxu0 0
    %2331 = vmatpush1.bf16.msra.mxu0 %v2317
    %2332 = vmatprep.subr.bf16.mxu0 0
    %2333 = vmatpush1.bf16.msra.mxu0 %v2318
    %2334 = vmatprep.subr.bf16.mxu0 0
    %2335 = vmatpush1.bf16.msra.mxu0 0
    %2336 = vmatprep.subr.bf16.mxu0 0
    %2337 = vmatpush1.bf16.msra.mxu0 0
    %2338 = vmatprep.subr.bf16.mxu0 0
    %2339 = vmatpush1.bf16.msra.mxu0 0
    %2340 = vmatprep.subr.bf16.mxu0 0
    %2341 = vmatpush1.bf16.msra.mxu0 0
    %2342 = vmatprep.subr.bf16.mxu0 0
    %2343 = vmatpush1.bf16.msra.mxu0 0
    %2344 = vmatprep.subr.bf16.mxu0 0
    %2345 = vmatpush1.bf16.msra.mxu0 0
    %2346 = vmatprep.subr.bf16.mxu0 0
    %2347 = vmatpush1.bf16.msra.mxu0 0
    %2348 = vmatprep.subr.bf16.mxu0 0
    %2349 = vmatpush1.bf16.msra.mxu0 0
    %2350 = vmatprep.subr.bf16.mxu0 0
    %2351 = vmatpush1.bf16.msra.mxu0 0
    %2352 = vmatprep.subr.bf16.mxu0 0
    %2353 = vmatpush1.bf16.msra.mxu0 0
    %2354 = vmatprep.subr.bf16.mxu0 0
    %2355 = vmatpush1.bf16.msra.mxu0 0
    %2356 = vmatprep.subr.bf16.mxu0 0
    %2357 = vmatpush1.bf16.msra.mxu0 0
    %2358 = vmatprep.mubr.bf16.mxu0 0
    %2359 = vmatmul.mubr.bf16.gmra.mrb[0].mxu0 %v2324
    %v2360 = vpop.f32.mrb[0].mxu0
    %v2361 = vadd.f32 0.0, %v2360
    %v2362 = vpop.f32.mrb[0].mxu0
    %v2363 = vpop.f32.mrb[0].mxu0
    %v2364 = vpop.f32.mrb[0].mxu0
    %2365 = vdwg.mxu0
    %v2366 = vadd.f32 %v2288, %v2361
    %v2367 = vld [vmem:[#allocation5 + $0xc] sm:$0x3]
    %v2368 = vpack.c.bf16 %v2367, %v2367
    %v2369 = vld [vmem:[%s9 + $0xc0] sm:$0xf]
    %v2370 = vld [vmem:[%s9 + $0xc4] sm:$0xf]
    %v2371 = vld [vmem:[%s9 + $0xc8] sm:$0xf]
    %v2372 = vld [vmem:[%s9 + $0xcc] sm:$0xf]
    %v2373 = vld [vmem:[%s9 + $0xd0] sm:$0xf]
    %v2374 = vld [vmem:[%s9 + $0xd4] sm:$0xf]
    %v2375 = vld [vmem:[%s9 + $0xd8] sm:$0xf]
    %v2376 = vld [vmem:[%s9 + $0xdc] sm:$0xf]
    %v2385 = vunpack.c.l.b16 %v2369
    %v2386 = vunpack.c.l.b16 %v2370
    %v2387 = vunpack.c.l.b16 %v2371
    %v2388 = vunpack.c.l.b16 %v2372
    %v2389 = vunpack.c.l.b16 %v2373
    %v2390 = vunpack.c.l.b16 %v2374
    %v2391 = vunpack.c.l.b16 %v2375
    %v2392 = vunpack.c.l.b16 %v2376
    %v2393 = vpack.c.b16 %v2386, %v2385
    %v2394 = vpack.c.b16 %v2388, %v2387
    %v2395 = vpack.c.b16 %v2390, %v2389
    %v2396 = vpack.c.b16 %v2392, %v2391
    %v2402 = vsel %vm231, %v2368, 0
    %2404 = vmatprep.subr.bf16.mxu0 0
    %2405 = vmatpush1.bf16.msra.mxu0 %v2393
    %2406 = vmatprep.subr.bf16.mxu0 0
    %2407 = vmatpush1.bf16.msra.mxu0 %v2394
    %2408 = vmatprep.subr.bf16.mxu0 0
    %2409 = vmatpush1.bf16.msra.mxu0 %v2395
    %2410 = vmatprep.subr.bf16.mxu0 0
    %2411 = vmatpush1.bf16.msra.mxu0 %v2396
    %2412 = vmatprep.subr.bf16.mxu0 0
    %2413 = vmatpush1.bf16.msra.mxu0 0
    %2414 = vmatprep.subr.bf16.mxu0 0
    %2415 = vmatpush1.bf16.msra.mxu0 0
    %2416 = vmatprep.subr.bf16.mxu0 0
    %2417 = vmatpush1.bf16.msra.mxu0 0
    %2418 = vmatprep.subr.bf16.mxu0 0
    %2419 = vmatpush1.bf16.msra.mxu0 0
    %2420 = vmatprep.subr.bf16.mxu0 0
    %2421 = vmatpush1.bf16.msra.mxu0 0
    %2422 = vmatprep.subr.bf16.mxu0 0
    %2423 = vmatpush1.bf16.msra.mxu0 0
    %2424 = vmatprep.subr.bf16.mxu0 0
    %2425 = vmatpush1.bf16.msra.mxu0 0
    %2426 = vmatprep.subr.bf16.mxu0 0
    %2427 = vmatpush1.bf16.msra.mxu0 0
    %2428 = vmatprep.subr.bf16.mxu0 0
    %2429 = vmatpush1.bf16.msra.mxu0 0
    %2430 = vmatprep.subr.bf16.mxu0 0
    %2431 = vmatpush1.bf16.msra.mxu0 0
    %2432 = vmatprep.subr.bf16.mxu0 0
    %2433 = vmatpush1.bf16.msra.mxu0 0
    %2434 = vmatprep.subr.bf16.mxu0 0
    %2435 = vmatpush1.bf16.msra.mxu0 0
    %2436 = vmatprep.mubr.bf16.mxu0 0
    %2437 = vmatmul.mubr.bf16.gmra.mrb[0].mxu0 %v2402
    %v2438 = vpop.f32.mrb[0].mxu0
    %v2439 = vadd.f32 0.0, %v2438
    %v2440 = vpop.f32.mrb[0].mxu0
    %v2441 = vpop.f32.mrb[0].mxu0
    %v2442 = vpop.f32.mrb[0].mxu0
    %2443 = vdwg.mxu0
    %v2444 = vadd.f32 %v2366, %v2439
    %v2445 = vld [vmem:[#allocation5 + $0xe] sm:$0x3]
    %v2446 = vpack.c.bf16 %v2445, %v2445
    %v2447 = vld [vmem:[%s9 + $0xe0] sm:$0xf]
    %v2448 = vld [vmem:[%s9 + $0xe4] sm:$0xf]
    %v2449 = vld [vmem:[%s9 + $0xe8] sm:$0xf]
    %v2450 = vld [vmem:[%s9 + $0xec] sm:$0xf]
    %v2451 = vld [vmem:[%s9 + $0xf0] sm:$0xf]
    %v2452 = vld [vmem:[%s9 + $0xf4] sm:$0xf]
    %v2453 = vld [vmem:[%s9 + $0xf8] sm:$0xf]
    %v2454 = vld [vmem:[%s9 + $0xfc] sm:$0xf]
    %v2463 = vunpack.c.l.b16 %v2447
    %v2464 = vunpack.c.l.b16 %v2448
    %v2465 = vunpack.c.l.b16 %v2449
    %v2466 = vunpack.c.l.b16 %v2450
    %v2467 = vunpack.c.l.b16 %v2451
    %v2468 = vunpack.c.l.b16 %v2452
    %v2469 = vunpack.c.l.b16 %v2453
    %v2470 = vunpack.c.l.b16 %v2454
    %v2471 = vpack.c.b16 %v2464, %v2463
    %v2472 = vpack.c.b16 %v2466, %v2465
    %v2473 = vpack.c.b16 %v2468, %v2467
    %v2474 = vpack.c.b16 %v2470, %v2469
    %v2480 = vsel %vm231, %v2446, 0
    %2482 = vmatprep.subr.bf16.mxu0 0
    %2483 = vmatpush1.bf16.msra.mxu0 %v2471
    %2484 = vmatprep.subr.bf16.mxu0 0
    %2485 = vmatpush1.bf16.msra.mxu0 %v2472
    %2486 = vmatprep.subr.bf16.mxu0 0
    %2487 = vmatpush1.bf16.msra.mxu0 %v2473
    %2488 = vmatprep.subr.bf16.mxu0 0
    %2489 = vmatpush1.bf16.msra.mxu0 %v2474
    %2490 = vmatprep.subr.bf16.mxu0 0
    %2491 = vmatpush1.bf16.msra.mxu0 0
    %2492 = vmatprep.subr.bf16.mxu0 0
    %2493 = vmatpush1.bf16.msra.mxu0 0
    %2494 = vmatprep.subr.bf16.mxu0 0
    %2495 = vmatpush1.bf16.msra.mxu0 0
    %2496 = vmatprep.subr.bf16.mxu0 0
    %2497 = vmatpush1.bf16.msra.mxu0 0
    %2498 = vmatprep.subr.bf16.mxu0 0
    %2499 = vmatpush1.bf16.msra.mxu0 0
    %2500 = vmatprep.subr.bf16.mxu0 0
    %2501 = vmatpush1.bf16.msra.mxu0 0
    %2502 = vmatprep.subr.bf16.mxu0 0
    %2503 = vmatpush1.bf16.msra.mxu0 0
    %2504 = vmatprep.subr.bf16.mxu0 0
    %2505 = vmatpush1.bf16.msra.mxu0 0
    %2506 = vmatprep.subr.bf16.mxu0 0
    %2507 = vmatpush1.bf16.msra.mxu0 0
    %2508 = vmatprep.subr.bf16.mxu0 0
    %2509 = vmatpush1.bf16.msra.mxu0 0
    %2510 = vmatprep.subr.bf16.mxu0 0
    %2511 = vmatpush1.bf16.msra.mxu0 0
    %2512 = vmatprep.subr.bf16.mxu0 0
    %2513 = vmatpush1.bf16.msra.mxu0 0
    %2514 = vmatprep.mubr.bf16.mxu0 0
    %2515 = vmatmul.mubr.bf16.gmra.mrb[0].mxu0 %v2480
    %v2516 = vpop.f32.mrb[0].mxu0
    %v2517 = vadd.f32 0.0, %v2516
    %v2518 = vpop.f32.mrb[0].mxu0
    %v2519 = vpop.f32.mrb[0].mxu0
    %v2520 = vpop.f32.mrb[0].mxu0
    %2521 = vdwg.mxu0
    %v2522 = vadd.f32 %v2444, %v2517
    %v2523 = vld [vmem:[%s10] sm:$0x1]
    %v2525 = vlaneseq
    %v2526 = vshrl.u32 %v2525, 7
    %v2527 = vsub.s32 0, %v2526
    %v2528 = vrot.slane %v2523, %v2527
    %v2530 = vadd.f32 %v2522, %v2528
    %vm2531 = vcmask 74752
    %2532 = vst.msk [vmem:[#allocation6] sm:$0x3] %vm2531, %v2530
    // Predicated region
    $region46: #{bilstm_fc_forward.1} parent=1 // pred_check
      _
    $region47: #{bilstm_fc_forward.1} parent=1 // pred_check_branch
      %2534 = sbr.rel (0) target = $region49
    $region48: #{bilstm_fc_forward.1} parent=1 // pred_region
      %s2536 = ssub.s32 32, 32
      %2537 = vsyncadd [#allocation7], %s2536
      %s2539 = sshll.u32 [#allocation6], 4
      %s2540 = int_to_ptr.vmem [resolvable:$true] %s2539
      %2542 = dma.vmem_to_hbm [thread:$0]  %s2540, 32, %s11, [#allocation7]
    $region49: #{bilstm_fc_forward.1} parent=1 // pred_fallthru
      _
    // Predicated region
    $region50: #{bilstm_fc_forward.1} parent=1 // pred_check
      _
    $region51: #{bilstm_fc_forward.1} parent=1 // pred_check_branch
      %2544 = sbr.rel (0) target = $region53
    $region52: #{bilstm_fc_forward.1} parent=1 // pred_region
      %2545 = dma.done [#allocation7], 32
    $region53: #{bilstm_fc_forward.1} parent=1 // pred_fallthru
      _
    %2546 = vsyncpa [#allocation7], 1

</llo_original>
